<compile_context>
chip_gen: v6e
topology: v6e:2x2x1
jax: 0.10.0
libtpu: 0.0.40
codegen_flags: <defaults>
</compile_context>

<pallas_src>
import functools
import math

import jax
import jax.numpy as jnp
from jax import lax
from jax.experimental import pallas as pl
from jax.experimental.pallas import tpu as pltpu

P = 128  # lane-dense padded feature width for every activation / projection


def _fused_trans_img_kernel(x_ref, img_ref, adjb_ref, w_ref, b_ref, o_ref, *,
                            bf16_exp):
    """Whole TransImg forward in one kernel.

    x_ref    : [N, P]         f32  padded spatial features
    img_ref  : [N, P]         f32  padded image features
    adjb_ref : [N, N]         bf16 additive mask: 0 where edge src->dst, else -1e30
    w_ref    : [13, P, 4P]    bf16 packed (Wq|Wk|Wv|Wskip) per layer, zero padded,
                                   1/sqrt(d_out) already folded into the Wq block
    b_ref    : [13, 1, 4P]    f32  packed biases, zero padded (bq pre-scaled)
    o_ref    : [6, N, P]      f32  stacked outputs h2, img2, c2, h4, img4, c4
    """
    adj_bias = adjb_ref[...]  # loaded ONCE (bf16), reused by all 12 layers
    # Per-destination "has at least one incoming edge" indicator (shared by all
    # layers).  Rows without edges get a zero aggregated message (exact PyG
    # scatter-softmax semantics), independent of exp underflow behaviour.
    row_valid = (jnp.max(adj_bias, axis=-1, keepdims=True) >
                 jnp.bfloat16(-1.0)).astype(jnp.float32)          # [N, 1]

    def tconv(x, idx, elu, extra=None):
        # --- packed Q|K|V|skip projection: one lane-dense MXU matmul ---------
        proj = jnp.dot(x.astype(jnp.bfloat16), w_ref[idx],
                       preferred_element_type=jnp.float32)
        if extra is not None:
            # "neck" layer: torch.cat([h2, img2], dim=1) @ W computed as a
            # split-weight sum (h2 @ W_top + img2 @ W_bot) to stay lane-dense.
            x2, idx2 = extra
            proj = proj + jnp.dot(x2.astype(jnp.bfloat16), w_ref[idx2],
                                  preferred_element_type=jnp.float32)
        proj = proj + b_ref[idx]

        # One fused f32->bf16 cast for the q|k|v region; skip stays f32.
        qkv = proj[:, 0:3 * P].astype(jnp.bfloat16)
        q = qkv[:, 0 * P:1 * P]
        k = qkv[:, 1 * P:2 * P]
        v = qkv[:, 2 * P:3 * P]
        skip = proj[:, 3 * P:4 * P]

        # scores[i, j] = q_i . k_j  (scale already folded into Wq).  Contract
        # the lane dim of both operands directly -> transposed-RHS MXU matmul,
        # no materialized k.T.
        scores = lax.dot_general(q, k, (((1,), (1,)), ((), ())),
                                 preferred_element_type=jnp.float32)
        scores = scores + adj_bias  # bf16 mask promotes to f32

        # Masked softmax over incoming edges (true row max; edge-less rows are
        # handled by row_valid below, so no clamping tricks are needed).
        m = jnp.max(scores, axis=-1, keepdims=True)
        z = scores - m
        if bf16_exp:
            e = jnp.exp(z.astype(jnp.bfloat16))        # bf16 EUP path (v6e/v7x)
        else:
            e = jnp.exp(z)                             # f32 exp (v5e and older)
        denom = jnp.sum(e.astype(jnp.float32), axis=-1, keepdims=True)
        inv = pl.reciprocal(denom, approx=True)
        attn = (e * inv.astype(e.dtype)).astype(jnp.bfloat16)

        agg = jnp.dot(attn, v, preferred_element_type=jnp.float32)
        out = agg * row_valid + skip
        if elu:
            # ELU(alpha=1): x if x > 0 else exp(x) - 1
            out = jnp.where(out > 0.0,
                            out, jnp.exp(jnp.minimum(out, 0.0)) - 1.0)
        return out

    x = x_ref[...]
    img = img_ref[...]

    # spatial chain
    h1 = tconv(x, 0, True)
    h2 = tconv(h1, 1, False)
    h3 = tconv(h2, 2, True)
    h4 = tconv(h3, 3, False)
    # image chain
    g1 = tconv(img, 4, True)
    g2 = tconv(g1, 5, False)
    g3 = tconv(g2, 6, True)
    g4 = tconv(g3, 7, False)
    # neck chain (concat handled by split weights 8 and 9)
    comb = tconv(h2, 8, True, extra=(g2, 9))
    c2 = tconv(comb, 10, False)
    c3 = tconv(c2, 11, True)
    c4 = tconv(c3, 12, False)

    # Lane-dense stores ([N, 128] f32 each).
    # TODO(synk): emit bf16 here if downstream consumers tolerate it (halves
    #             writeback at large N; irrelevant at the shipped shapes).
    o_ref[0] = h2
    o_ref[1] = g2
    o_ref[2] = c2
    o_ref[3] = h4
    o_ref[4] = g4
    o_ref[5] = c4


# ----------------------------------------------------------------------------
# Host-side packing / wrappers
# ----------------------------------------------------------------------------
def _pack_tconv(p, d_in, d_out, *, rows_offset=0, include_bias=True):
    """Pack wq/wk/wv/ws (and biases) into zero-padded [P, 4P] / [1, 4P].

    The attention scale 1/sqrt(d_out) is folded into the Wq / bq block so the
    kernel never multiplies the [N, N] score matrix.
    """
    q_scale = jnp.float32(1.0 / math.sqrt(d_out))
    w = jnp.zeros((P, 4 * P), jnp.float32)
    b = jnp.zeros((1, 4 * P), jnp.float32)
    names = (("wq", "bq"), ("wk", "bk"), ("wv", "bv"), ("ws", "bs"))
    for i, (wn, bn) in enumerate(names):
        blk = p[wn][rows_offset:rows_offset + d_in]
        bias = p[bn]
        if i == 0:  # fold the softmax scale into the query projection
            blk = blk * q_scale
            bias = bias * q_scale
        w = w.at[:d_in, i * P:i * P + d_out].set(blk)
        if include_bias:
            b = b.at[:, i * P:i * P + d_out].set(bias)
    return w, b


def prepare_trans_img(params, hidden_dims):
    """Build the stacked, padded, bf16 weight slab consumed by the kernel."""
    in_dim, img_dim, num_hidden, out_dim = hidden_dims
    layer_dims = [
        ("conv1", in_dim, num_hidden), ("conv2", num_hidden, out_dim),
        ("conv3", out_dim, num_hidden), ("conv4", num_hidden, in_dim),
        ("imgconv1", img_dim, num_hidden), ("imgconv2", num_hidden, out_dim),
        ("imgconv3", out_dim, num_hidden), ("imgconv4", num_hidden, in_dim),
    ]
    packs = [_pack_tconv(params[n], di, do) for n, di, do in layer_dims]
    # neck (input = cat(h2, img2)): split its weight rows into two blocks.
    packs.append(_pack_tconv(params["neck"], out_dim, out_dim, rows_offset=0))
    packs.append(_pack_tconv(params["neck"], out_dim, out_dim,
                             rows_offset=out_dim, include_bias=False))
    packs.append(_pack_tconv(params["neck2"], out_dim, out_dim))
    packs.append(_pack_tconv(params["c3"], out_dim, num_hidden))
    packs.append(_pack_tconv(params["c4"], num_hidden, in_dim))

    packed_w = jnp.stack([w for w, _ in packs]).astype(jnp.bfloat16)  # [13,P,4P]
    packed_b = jnp.stack([b for _, b in packs])                       # [13,1,4P]
    return packed_w, packed_b


def _use_bf16_exp():
    """bf16 EUP path exists on v6e/v7x; keep f32 exp on v5e and older."""
    try:
        kind = jax.devices()[0].device_kind.lower()
    except Exception:
        return False
    return not any(t in kind for t in ("v2", "v3", "v4", "v5"))


def _vmem_limit_bytes():
    """Generation-aware scoped-VMEM budget (leave ~15% headroom)."""
    try:
        cap = int(pltpu.get_tpu_info().vmem_capacity_bytes)
    except Exception:
        cap = 64 * 1024 * 1024
    return max(32 * 1024 * 1024, min(int(cap * 0.85), 112 * 1024 * 1024))


def trans_img_forward(packed_w, packed_b, features, img_feat, adj_bias,
                      hidden_dims):
    in_dim, img_dim, num_hidden, out_dim = hidden_dims
    n = features.shape[0]

    # Pad inputs to the 128-lane feature width (padded lanes stay zero through
    # every layer because the padded weight rows/cols are zero).
    x = jnp.zeros((n, P), jnp.float32).at[:, :in_dim].set(features)
    img = jnp.zeros((n, P), jnp.float32).at[:, :img_dim].set(img_feat)

    kernel = functools.partial(_fused_trans_img_kernel,
                               bf16_exp=_use_bf16_exp())
    vmem = pl.BlockSpec(memory_space=pltpu.MemorySpace.VMEM)
    out = pl.pallas_call(
        kernel,
        out_shape=jax.ShapeDtypeStruct((6, n, P), jnp.float32),
        in_specs=[vmem] * 5,
        out_specs=vmem,
        compiler_params=pltpu.CompilerParams(
            vmem_limit_bytes=_vmem_limit_bytes()),
    )(x, img, adj_bias, packed_w, packed_b)

    h2 = out[0, :, :out_dim]
    img2 = out[1, :, :out_dim]
    c2 = out[2, :, :out_dim]
    h4 = out[3, :, :in_dim]
    img4 = out[4, :, :in_dim]
    c4 = out[5, :, :in_dim]
    return h2, img2, c2, h4, img4, c4


# ----------------------------------------------------------------------------
# Parameter init (matches the layer graph of the PyTorch module)
# ----------------------------------------------------------------------------
def init_tconv_params(key, d_in, d_out):
    ks = jax.random.split(key, 8)
    scale = 1.0 / math.sqrt(d_in)

    def w(k):
        return jax.random.normal(k, (d_in, d_out), jnp.float32) * scale

    def b(k):
        return jax.random.normal(k, (1, d_out), jnp.float32) * 0.01

    return dict(wq=w(ks[0]), bq=b(ks[1]),
                wk=w(ks[2]), bk=b(ks[3]),
                wv=w(ks[4]), bv=b(ks[5]),
                ws=w(ks[6]), bs=b(ks[7]))


def init_trans_img_params(key, hidden_dims):
    in_dim, img_dim, num_hidden, out_dim = hidden_dims
    layer_dims = {
        "conv1": (in_dim, num_hidden), "conv2": (num_hidden, out_dim),
        "conv3": (out_dim, num_hidden), "conv4": (num_hidden, in_dim),
        "imgconv1": (img_dim, num_hidden), "imgconv2": (num_hidden, out_dim),
        "imgconv3": (out_dim, num_hidden), "imgconv4": (num_hidden, in_dim),
        "neck": (out_dim * 2, out_dim), "neck2": (out_dim, out_dim),
        "c3": (out_dim, num_hidden), "c4": (num_hidden, in_dim),
    }
    keys = jax.random.split(key, len(layer_dims))
    return {name: init_tconv_params(k, di, do)
            for k, (name, (di, do)) in zip(keys, layer_dims.items())}
    # TODO(synk): norm1/norm2 (LayerNorm) are defined in __init__ but never
    #             used in TransImg.forward, so they are not instantiated here.


def edge_index_to_adj_bias(edge_index, num_nodes):
    """Additive attention mask: 0 where an edge src->dst exists, -1e30 else.

    Stored in bf16 (0 and -1e30 are exactly representable); it promotes back to
    f32 when added to the f32 score matrix inside the kernel.
    """
    src, dst = edge_index[0], edge_index[1]
    adj = jnp.zeros((num_nodes, num_nodes), jnp.float32).at[dst, src].set(1.0)
    return ((adj - 1.0) * jnp.float32(1e30)).astype(jnp.bfloat16)


if __name__ == "__main__":
    # Small, forward-consistent shapes.
    N = 8            # number of graph nodes
    in_dim = 16      # spatial feature dim
    img_dim = 8      # image feature dim
    num_hidden = 32
    out_dim = 32
    hidden_dims = (in_dim, img_dim, num_hidden, out_dim)

    key = jax.random.PRNGKey(0)
    k_feat, k_img, k_par = jax.random.split(key, 3)

    features = jax.random.normal(k_feat, (N, in_dim), jnp.float32)
    img_feat = jax.random.normal(k_img, (N, img_dim), jnp.float32)

    # Deterministic ring graph with self-loops: every node has 3 incoming edges.
    src, dst = [], []
    for i in range(N):
        for j in (i, (i + 1) % N, (i - 1) % N):
            src.append(j)
            dst.append(i)
    edge_index = jnp.array([src, dst], dtype=jnp.int32)
    adj_bias = edge_index_to_adj_bias(edge_index, N)

    params = init_trans_img_params(k_par, hidden_dims)
    packed_w, packed_b = prepare_trans_img(params, hidden_dims)

    fwd = jax.jit(functools.partial(trans_img_forward, hidden_dims=hidden_dims))
    outs = fwd(packed_w, packed_b, features, img_feat, adj_bias)
    jax.block_until_ready(outs)
    h2, img2, c2, h4, img4, c4 = outs

    assert h2.shape == (N, out_dim)
    assert img2.shape == (N, out_dim)
    assert c2.shape == (N, out_dim)
    assert h4.shape == (N, in_dim)
    assert img4.shape == (N, in_dim)
    assert c4.shape == (N, in_dim)
    for arr in outs:
        assert bool(jnp.isfinite(arr).all())

    print("KERNEL_OK")
</pallas_src>

<mosaic_0001>
module attributes {stable_mosaic.version = 11 : i64} {
  func.func @_fused_trans_img_kernel(%arg0: memref<8x128xf32, #tpu.memory_space<vmem>>, %arg1: memref<8x128xf32, #tpu.memory_space<vmem>>, %arg2: memref<8x8xbf16, #tpu.memory_space<vmem>>, %arg3: memref<13x128x512xbf16, #tpu.memory_space<vmem>>, %arg4: memref<13x1x512xf32, #tpu.memory_space<vmem>>, %arg5: memref<6x8x128xf32, #tpu.memory_space<vmem>>) attributes {dimension_semantics = [], scalar_prefetch = 0 : i64, scratch_operands = 0 : i64, tpu.core_type = #tpu.core_type<tc>} {
    %c0 = arith.constant 0 : index
    %c0_0 = arith.constant 0 : index
    %0 = vector.load %arg2[%c0, %c0_0] : memref<8x8xbf16, #tpu.memory_space<vmem>>, vector<8x8xbf16>
    %cst = arith.constant dense<0xFF80> : vector<8xbf16>
    %1 = vector.multi_reduction <maximumf>, %0, %cst [1] : vector<8x8xbf16> to vector<8xbf16>
    %2 = vector.shape_cast %1 : vector<8xbf16> to vector<8x1xbf16>
    %cst_1 = arith.constant -1.000000e+00 : bf16
    %3 = vector.broadcast %cst_1 : bf16 to vector<8x1xbf16>
    %4 = arith.cmpf ogt, %2, %3 : vector<8x1xbf16>
    %5 = arith.extui %4 : vector<8x1xi1> to vector<8x1xi32>
    %6 = arith.sitofp %5 : vector<8x1xi32> to vector<8x1xf32>
    %c0_2 = arith.constant 0 : index
    %c0_3 = arith.constant 0 : index
    %7 = vector.load %arg0[%c0_2, %c0_3] : memref<8x128xf32, #tpu.memory_space<vmem>>, vector<8x128xf32>
    %c0_4 = arith.constant 0 : index
    %c0_5 = arith.constant 0 : index
    %8 = vector.load %arg1[%c0_4, %c0_5] : memref<8x128xf32, #tpu.memory_space<vmem>>, vector<8x128xf32>
    %9 = arith.truncf %7 : vector<8x128xf32> to vector<8x128xbf16>
    %c0_6 = arith.constant 0 : index
    %c0_7 = arith.constant 0 : index
    %c0_8 = arith.constant 0 : index
    %10 = vector.load %arg3[%c0_6, %c0_7, %c0_8] : memref<13x128x512xbf16, #tpu.memory_space<vmem>>, vector<1x128x512xbf16>
    %11 = vector.shape_cast %10 : vector<1x128x512xbf16> to vector<128x512xbf16>
    %cst_9 = arith.constant dense<0.000000e+00> : vector<8x512xf32>
    %12 = tpu.matmul %9, %11, %cst_9 {dimension_numbers = #tpu.dot_dimension_numbers<[1], [0], [0], [1], [0, 0, 1, 1], [], []>} : vector<8x128xbf16>, vector<128x512xbf16>, vector<8x512xf32> -> vector<8x512xf32>
    %c0_10 = arith.constant 0 : index
    %c0_11 = arith.constant 0 : index
    %c0_12 = arith.constant 0 : index
    %13 = vector.load %arg4[%c0_10, %c0_11, %c0_12] : memref<13x1x512xf32, #tpu.memory_space<vmem>>, vector<1x1x512xf32>
    %14 = vector.shape_cast %13 : vector<1x1x512xf32> to vector<1x512xf32>
    %15 = vector.broadcast %14 : vector<1x512xf32> to vector<8x512xf32>
    %16 = arith.addf %12, %15 : vector<8x512xf32>
    %17 = vector.extract_strided_slice %16 {offsets = [0, 0], sizes = [8, 384], strides = [1, 1]} : vector<8x512xf32> to vector<8x384xf32>
    %18 = arith.truncf %17 : vector<8x384xf32> to vector<8x384xbf16>
    %19 = vector.extract_strided_slice %18 {offsets = [0, 0], sizes = [8, 128], strides = [1, 1]} : vector<8x384xbf16> to vector<8x128xbf16>
    %20 = vector.extract_strided_slice %18 {offsets = [0, 128], sizes = [8, 128], strides = [1, 1]} : vector<8x384xbf16> to vector<8x128xbf16>
    %21 = vector.extract_strided_slice %18 {offsets = [0, 256], sizes = [8, 128], strides = [1, 1]} : vector<8x384xbf16> to vector<8x128xbf16>
    %22 = vector.extract_strided_slice %16 {offsets = [0, 384], sizes = [8, 128], strides = [1, 1]} : vector<8x512xf32> to vector<8x128xf32>
    %cst_13 = arith.constant dense<0.000000e+00> : vector<8x8xf32>
    %23 = tpu.matmul %19, %20, %cst_13 {dimension_numbers = #tpu.dot_dimension_numbers<[1], [1], [0], [0], [0, 0, 1, 0], [], []>} : vector<8x128xbf16>, vector<8x128xbf16>, vector<8x8xf32> -> vector<8x8xf32>
    %24 = arith.extf %0 : vector<8x8xbf16> to vector<8x8xf32>
    %25 = arith.addf %23, %24 : vector<8x8xf32>
    %cst_14 = arith.constant dense<0xFF800000> : vector<8xf32>
    %26 = vector.multi_reduction <maximumf>, %25, %cst_14 [1] : vector<8x8xf32> to vector<8xf32>
    %27 = vector.shape_cast %26 : vector<8xf32> to vector<8x1xf32>
    %28 = vector.broadcast %27 : vector<8x1xf32> to vector<8x8xf32>
    %29 = arith.subf %25, %28 : vector<8x8xf32>
    %30 = arith.truncf %29 : vector<8x8xf32> to vector<8x8xbf16>
    %31 = math.exp %30 : vector<8x8xbf16>
    %32 = arith.extf %31 : vector<8x8xbf16> to vector<8x8xf32>
    %cst_15 = arith.constant dense<0.000000e+00> : vector<8xf32>
    %33 = vector.multi_reduction <add>, %32, %cst_15 [1] : vector<8x8xf32> to vector<8xf32>
    %34 = vector.shape_cast %33 : vector<8xf32> to vector<8x1xf32>
    %35 = tpu.reciprocal %34 {approx = true} : vector<8x1xf32> -> vector<8x1xf32>
    %36 = arith.truncf %35 : vector<8x1xf32> to vector<8x1xbf16>
    %37 = vector.broadcast %36 : vector<8x1xbf16> to vector<8x8xbf16>
    %38 = arith.mulf %31, %37 : vector<8x8xbf16>
    %cst_16 = arith.constant dense<0.000000e+00> : vector<8x128xf32>
    %39 = tpu.matmul %38, %21, %cst_16 {dimension_numbers = #tpu.dot_dimension_numbers<[1], [0], [0], [1], [0, 0, 1, 1], [], []>} : vector<8x8xbf16>, vector<8x128xbf16>, vector<8x128xf32> -> vector<8x128xf32>
    %40 = vector.broadcast %6 : vector<8x1xf32> to vector<8x128xf32>
    %41 = arith.mulf %39, %40 : vector<8x128xf32>
    %42 = arith.addf %41, %22 : vector<8x128xf32>
    %cst_17 = arith.constant 0.000000e+00 : f32
    %43 = vector.broadcast %cst_17 : f32 to vector<8x128xf32>
    %44 = arith.cmpf ogt, %42, %43 : vector<8x128xf32>
    %cst_18 = arith.constant 0.000000e+00 : f32
    %45 = vector.broadcast %cst_18 : f32 to vector<8x128xf32>
    %46 = arith.minimumf %42, %45 : vector<8x128xf32>
    %47 = math.exp %46 : vector<8x128xf32>
    %cst_19 = arith.constant 1.000000e+00 : f32
    %48 = vector.broadcast %cst_19 : f32 to vector<8x128xf32>
    %49 = arith.subf %47, %48 : vector<8x128xf32>
    %50 = arith.select %44, %42, %49 : vector<8x128xi1>, vector<8x128xf32>
    %51 = arith.truncf %50 : vector<8x128xf32> to vector<8x128xbf16>
    %c1 = arith.constant 1 : index
    %c0_20 = arith.constant 0 : index
    %c0_21 = arith.constant 0 : index
    %52 = vector.load %arg3[%c1, %c0_20, %c0_21] : memref<13x128x512xbf16, #tpu.memory_space<vmem>>, vector<1x128x512xbf16>
    %53 = vector.shape_cast %52 : vector<1x128x512xbf16> to vector<128x512xbf16>
    %cst_22 = arith.constant dense<0.000000e+00> : vector<8x512xf32>
    %54 = tpu.matmul %51, %53, %cst_22 {dimension_numbers = #tpu.dot_dimension_numbers<[1], [0], [0], [1], [0, 0, 1, 1], [], []>} : vector<8x128xbf16>, vector<128x512xbf16>, vector<8x512xf32> -> vector<8x512xf32>
    %c1_23 = arith.constant 1 : index
    %c0_24 = arith.constant 0 : index
    %c0_25 = arith.constant 0 : index
    %55 = vector.load %arg4[%c1_23, %c0_24, %c0_25] : memref<13x1x512xf32, #tpu.memory_space<vmem>>, vector<1x1x512xf32>
    %56 = vector.shape_cast %55 : vector<1x1x512xf32> to vector<1x512xf32>
    %57 = vector.broadcast %56 : vector<1x512xf32> to vector<8x512xf32>
    %58 = arith.addf %54, %57 : vector<8x512xf32>
    %59 = vector.extract_strided_slice %58 {offsets = [0, 0], sizes = [8, 384], strides = [1, 1]} : vector<8x512xf32> to vector<8x384xf32>
    %60 = arith.truncf %59 : vector<8x384xf32> to vector<8x384xbf16>
    %61 = vector.extract_strided_slice %60 {offsets = [0, 0], sizes = [8, 128], strides = [1, 1]} : vector<8x384xbf16> to vector<8x128xbf16>
    %62 = vector.extract_strided_slice %60 {offsets = [0, 128], sizes = [8, 128], strides = [1, 1]} : vector<8x384xbf16> to vector<8x128xbf16>
    %63 = vector.extract_strided_slice %60 {offsets = [0, 256], sizes = [8, 128], strides = [1, 1]} : vector<8x384xbf16> to vector<8x128xbf16>
    %64 = vector.extract_strided_slice %58 {offsets = [0, 384], sizes = [8, 128], strides = [1, 1]} : vector<8x512xf32> to vector<8x128xf32>
    %cst_26 = arith.constant dense<0.000000e+00> : vector<8x8xf32>
    %65 = tpu.matmul %61, %62, %cst_26 {dimension_numbers = #tpu.dot_dimension_numbers<[1], [1], [0], [0], [0, 0, 1, 0], [], []>} : vector<8x128xbf16>, vector<8x128xbf16>, vector<8x8xf32> -> vector<8x8xf32>
    %66 = arith.extf %0 : vector<8x8xbf16> to vector<8x8xf32>
    %67 = arith.addf %65, %66 : vector<8x8xf32>
    %cst_27 = arith.constant dense<0xFF800000> : vector<8xf32>
    %68 = vector.multi_reduction <maximumf>, %67, %cst_27 [1] : vector<8x8xf32> to vector<8xf32>
    %69 = vector.shape_cast %68 : vector<8xf32> to vector<8x1xf32>
    %70 = vector.broadcast %69 : vector<8x1xf32> to vector<8x8xf32>
    %71 = arith.subf %67, %70 : vector<8x8xf32>
    %72 = arith.truncf %71 : vector<8x8xf32> to vector<8x8xbf16>
    %73 = math.exp %72 : vector<8x8xbf16>
    %74 = arith.extf %73 : vector<8x8xbf16> to vector<8x8xf32>
    %cst_28 = arith.constant dense<0.000000e+00> : vector<8xf32>
    %75 = vector.multi_reduction <add>, %74, %cst_28 [1] : vector<8x8xf32> to vector<8xf32>
    %76 = vector.shape_cast %75 : vector<8xf32> to vector<8x1xf32>
    %77 = tpu.reciprocal %76 {approx = true} : vector<8x1xf32> -> vector<8x1xf32>
    %78 = arith.truncf %77 : vector<8x1xf32> to vector<8x1xbf16>
    %79 = vector.broadcast %78 : vector<8x1xbf16> to vector<8x8xbf16>
    %80 = arith.mulf %73, %79 : vector<8x8xbf16>
    %cst_29 = arith.constant dense<0.000000e+00> : vector<8x128xf32>
    %81 = tpu.matmul %80, %63, %cst_29 {dimension_numbers = #tpu.dot_dimension_numbers<[1], [0], [0], [1], [0, 0, 1, 1], [], []>} : vector<8x8xbf16>, vector<8x128xbf16>, vector<8x128xf32> -> vector<8x128xf32>
    %82 = vector.broadcast %6 : vector<8x1xf32> to vector<8x128xf32>
    %83 = arith.mulf %81, %82 : vector<8x128xf32>
    %84 = arith.addf %83, %64 : vector<8x128xf32>
    %85 = arith.truncf %84 : vector<8x128xf32> to vector<8x128xbf16>
    %c2 = arith.constant 2 : index
    %c0_30 = arith.constant 0 : index
    %c0_31 = arith.constant 0 : index
    %86 = vector.load %arg3[%c2, %c0_30, %c0_31] : memref<13x128x512xbf16, #tpu.memory_space<vmem>>, vector<1x128x512xbf16>
    %87 = vector.shape_cast %86 : vector<1x128x512xbf16> to vector<128x512xbf16>
    %cst_32 = arith.constant dense<0.000000e+00> : vector<8x512xf32>
    %88 = tpu.matmul %85, %87, %cst_32 {dimension_numbers = #tpu.dot_dimension_numbers<[1], [0], [0], [1], [0, 0, 1, 1], [], []>} : vector<8x128xbf16>, vector<128x512xbf16>, vector<8x512xf32> -> vector<8x512xf32>
    %c2_33 = arith.constant 2 : index
    %c0_34 = arith.constant 0 : index
    %c0_35 = arith.constant 0 : index
    %89 = vector.load %arg4[%c2_33, %c0_34, %c0_35] : memref<13x1x512xf32, #tpu.memory_space<vmem>>, vector<1x1x512xf32>
    %90 = vector.shape_cast %89 : vector<1x1x512xf32> to vector<1x512xf32>
    %91 = vector.broadcast %90 : vector<1x512xf32> to vector<8x512xf32>
    %92 = arith.addf %88, %91 : vector<8x512xf32>
    %93 = vector.extract_strided_slice %92 {offsets = [0, 0], sizes = [8, 384], strides = [1, 1]} : vector<8x512xf32> to vector<8x384xf32>
    %94 = arith.truncf %93 : vector<8x384xf32> to vector<8x384xbf16>
    %95 = vector.extract_strided_slice %94 {offsets = [0, 0], sizes = [8, 128], strides = [1, 1]} : vector<8x384xbf16> to vector<8x128xbf16>
    %96 = vector.extract_strided_slice %94 {offsets = [0, 128], sizes = [8, 128], strides = [1, 1]} : vector<8x384xbf16> to vector<8x128xbf16>
    %97 = vector.extract_strided_slice %94 {offsets = [0, 256], sizes = [8, 128], strides = [1, 1]} : vector<8x384xbf16> to vector<8x128xbf16>
    %98 = vector.extract_strided_slice %92 {offsets = [0, 384], sizes = [8, 128], strides = [1, 1]} : vector<8x512xf32> to vector<8x128xf32>
    %cst_36 = arith.constant dense<0.000000e+00> : vector<8x8xf32>
    %99 = tpu.matmul %95, %96, %cst_36 {dimension_numbers = #tpu.dot_dimension_numbers<[1], [1], [0], [0], [0, 0, 1, 0], [], []>} : vector<8x128xbf16>, vector<8x128xbf16>, vector<8x8xf32> -> vector<8x8xf32>
    %100 = arith.extf %0 : vector<8x8xbf16> to vector<8x8xf32>
    %101 = arith.addf %99, %100 : vector<8x8xf32>
    %cst_37 = arith.constant dense<0xFF800000> : vector<8xf32>
    %102 = vector.multi_reduction <maximumf>, %101, %cst_37 [1] : vector<8x8xf32> to vector<8xf32>
    %103 = vector.shape_cast %102 : vector<8xf32> to vector<8x1xf32>
    %104 = vector.broadcast %103 : vector<8x1xf32> to vector<8x8xf32>
    %105 = arith.subf %101, %104 : vector<8x8xf32>
    %106 = arith.truncf %105 : vector<8x8xf32> to vector<8x8xbf16>
    %107 = math.exp %106 : vector<8x8xbf16>
    %108 = arith.extf %107 : vector<8x8xbf16> to vector<8x8xf32>
    %cst_38 = arith.constant dense<0.000000e+00> : vector<8xf32>
    %109 = vector.multi_reduction <add>, %108, %cst_38 [1] : vector<8x8xf32> to vector<8xf32>
    %110 = vector.shape_cast %109 : vector<8xf32> to vector<8x1xf32>
    %111 = tpu.reciprocal %110 {approx = true} : vector<8x1xf32> -> vector<8x1xf32>
    %112 = arith.truncf %111 : vector<8x1xf32> to vector<8x1xbf16>
    %113 = vector.broadcast %112 : vector<8x1xbf16> to vector<8x8xbf16>
    %114 = arith.mulf %107, %113 : vector<8x8xbf16>
    %cst_39 = arith.constant dense<0.000000e+00> : vector<8x128xf32>
    %115 = tpu.matmul %114, %97, %cst_39 {dimension_numbers = #tpu.dot_dimension_numbers<[1], [0], [0], [1], [0, 0, 1, 1], [], []>} : vector<8x8xbf16>, vector<8x128xbf16>, vector<8x128xf32> -> vector<8x128xf32>
    %116 = vector.broadcast %6 : vector<8x1xf32> to vector<8x128xf32>
    %117 = arith.mulf %115, %116 : vector<8x128xf32>
    %118 = arith.addf %117, %98 : vector<8x128xf32>
    %cst_40 = arith.constant 0.000000e+00 : f32
    %119 = vector.broadcast %cst_40 : f32 to vector<8x128xf32>
    %120 = arith.cmpf ogt, %118, %119 : vector<8x128xf32>
    %cst_41 = arith.constant 0.000000e+00 : f32
    %121 = vector.broadcast %cst_41 : f32 to vector<8x128xf32>
    %122 = arith.minimumf %118, %121 : vector<8x128xf32>
    %123 = math.exp %122 : vector<8x128xf32>
    %cst_42 = arith.constant 1.000000e+00 : f32
    %124 = vector.broadcast %cst_42 : f32 to vector<8x128xf32>
    %125 = arith.subf %123, %124 : vector<8x128xf32>
    %126 = arith.select %120, %118, %125 : vector<8x128xi1>, vector<8x128xf32>
    %127 = arith.truncf %126 : vector<8x128xf32> to vector<8x128xbf16>
    %c3 = arith.constant 3 : index
    %c0_43 = arith.constant 0 : index
    %c0_44 = arith.constant 0 : index
    %128 = vector.load %arg3[%c3, %c0_43, %c0_44] : memref<13x128x512xbf16, #tpu.memory_space<vmem>>, vector<1x128x512xbf16>
    %129 = vector.shape_cast %128 : vector<1x128x512xbf16> to vector<128x512xbf16>
    %cst_45 = arith.constant dense<0.000000e+00> : vector<8x512xf32>
    %130 = tpu.matmul %127, %129, %cst_45 {dimension_numbers = #tpu.dot_dimension_numbers<[1], [0], [0], [1], [0, 0, 1, 1], [], []>} : vector<8x128xbf16>, vector<128x512xbf16>, vector<8x512xf32> -> vector<8x512xf32>
    %c3_46 = arith.constant 3 : index
    %c0_47 = arith.constant 0 : index
    %c0_48 = arith.constant 0 : index
    %131 = vector.load %arg4[%c3_46, %c0_47, %c0_48] : memref<13x1x512xf32, #tpu.memory_space<vmem>>, vector<1x1x512xf32>
    %132 = vector.shape_cast %131 : vector<1x1x512xf32> to vector<1x512xf32>
    %133 = vector.broadcast %132 : vector<1x512xf32> to vector<8x512xf32>
    %134 = arith.addf %130, %133 : vector<8x512xf32>
    %135 = vector.extract_strided_slice %134 {offsets = [0, 0], sizes = [8, 384], strides = [1, 1]} : vector<8x512xf32> to vector<8x384xf32>
    %136 = arith.truncf %135 : vector<8x384xf32> to vector<8x384xbf16>
    %137 = vector.extract_strided_slice %136 {offsets = [0, 0], sizes = [8, 128], strides = [1, 1]} : vector<8x384xbf16> to vector<8x128xbf16>
    %138 = vector.extract_strided_slice %136 {offsets = [0, 128], sizes = [8, 128], strides = [1, 1]} : vector<8x384xbf16> to vector<8x128xbf16>
    %139 = vector.extract_strided_slice %136 {offsets = [0, 256], sizes = [8, 128], strides = [1, 1]} : vector<8x384xbf16> to vector<8x128xbf16>
    %140 = vector.extract_strided_slice %134 {offsets = [0, 384], sizes = [8, 128], strides = [1, 1]} : vector<8x512xf32> to vector<8x128xf32>
    %cst_49 = arith.constant dense<0.000000e+00> : vector<8x8xf32>
    %141 = tpu.matmul %137, %138, %cst_49 {dimension_numbers = #tpu.dot_dimension_numbers<[1], [1], [0], [0], [0, 0, 1, 0], [], []>} : vector<8x128xbf16>, vector<8x128xbf16>, vector<8x8xf32> -> vector<8x8xf32>
    %142 = arith.extf %0 : vector<8x8xbf16> to vector<8x8xf32>
    %143 = arith.addf %141, %142 : vector<8x8xf32>
    %cst_50 = arith.constant dense<0xFF800000> : vector<8xf32>
    %144 = vector.multi_reduction <maximumf>, %143, %cst_50 [1] : vector<8x8xf32> to vector<8xf32>
    %145 = vector.shape_cast %144 : vector<8xf32> to vector<8x1xf32>
    %146 = vector.broadcast %145 : vector<8x1xf32> to vector<8x8xf32>
    %147 = arith.subf %143, %146 : vector<8x8xf32>
    %148 = arith.truncf %147 : vector<8x8xf32> to vector<8x8xbf16>
    %149 = math.exp %148 : vector<8x8xbf16>
    %150 = arith.extf %149 : vector<8x8xbf16> to vector<8x8xf32>
    %cst_51 = arith.constant dense<0.000000e+00> : vector<8xf32>
    %151 = vector.multi_reduction <add>, %150, %cst_51 [1] : vector<8x8xf32> to vector<8xf32>
    %152 = vector.shape_cast %151 : vector<8xf32> to vector<8x1xf32>
    %153 = tpu.reciprocal %152 {approx = true} : vector<8x1xf32> -> vector<8x1xf32>
    %154 = arith.truncf %153 : vector<8x1xf32> to vector<8x1xbf16>
    %155 = vector.broadcast %154 : vector<8x1xbf16> to vector<8x8xbf16>
    %156 = arith.mulf %149, %155 : vector<8x8xbf16>
    %cst_52 = arith.constant dense<0.000000e+00> : vector<8x128xf32>
    %157 = tpu.matmul %156, %139, %cst_52 {dimension_numbers = #tpu.dot_dimension_numbers<[1], [0], [0], [1], [0, 0, 1, 1], [], []>} : vector<8x8xbf16>, vector<8x128xbf16>, vector<8x128xf32> -> vector<8x128xf32>
    %158 = vector.broadcast %6 : vector<8x1xf32> to vector<8x128xf32>
    %159 = arith.mulf %157, %158 : vector<8x128xf32>
    %160 = arith.addf %159, %140 : vector<8x128xf32>
    %161 = arith.truncf %8 : vector<8x128xf32> to vector<8x128xbf16>
    %c4 = arith.constant 4 : index
    %c0_53 = arith.constant 0 : index
    %c0_54 = arith.constant 0 : index
    %162 = vector.load %arg3[%c4, %c0_53, %c0_54] : memref<13x128x512xbf16, #tpu.memory_space<vmem>>, vector<1x128x512xbf16>
    %163 = vector.shape_cast %162 : vector<1x128x512xbf16> to vector<128x512xbf16>
    %cst_55 = arith.constant dense<0.000000e+00> : vector<8x512xf32>
    %164 = tpu.matmul %161, %163, %cst_55 {dimension_numbers = #tpu.dot_dimension_numbers<[1], [0], [0], [1], [0, 0, 1, 1], [], []>} : vector<8x128xbf16>, vector<128x512xbf16>, vector<8x512xf32> -> vector<8x512xf32>
    %c4_56 = arith.constant 4 : index
    %c0_57 = arith.constant 0 : index
    %c0_58 = arith.constant 0 : index
    %165 = vector.load %arg4[%c4_56, %c0_57, %c0_58] : memref<13x1x512xf32, #tpu.memory_space<vmem>>, vector<1x1x512xf32>
    %166 = vector.shape_cast %165 : vector<1x1x512xf32> to vector<1x512xf32>
    %167 = vector.broadcast %166 : vector<1x512xf32> to vector<8x512xf32>
    %168 = arith.addf %164, %167 : vector<8x512xf32>
    %169 = vector.extract_strided_slice %168 {offsets = [0, 0], sizes = [8, 384], strides = [1, 1]} : vector<8x512xf32> to vector<8x384xf32>
    %170 = arith.truncf %169 : vector<8x384xf32> to vector<8x384xbf16>
    %171 = vector.extract_strided_slice %170 {offsets = [0, 0], sizes = [8, 128], strides = [1, 1]} : vector<8x384xbf16> to vector<8x128xbf16>
    %172 = vector.extract_strided_slice %170 {offsets = [0, 128], sizes = [8, 128], strides = [1, 1]} : vector<8x384xbf16> to vector<8x128xbf16>
    %173 = vector.extract_strided_slice %170 {offsets = [0, 256], sizes = [8, 128], strides = [1, 1]} : vector<8x384xbf16> to vector<8x128xbf16>
    %174 = vector.extract_strided_slice %168 {offsets = [0, 384], sizes = [8, 128], strides = [1, 1]} : vector<8x512xf32> to vector<8x128xf32>
    %cst_59 = arith.constant dense<0.000000e+00> : vector<8x8xf32>
    %175 = tpu.matmul %171, %172, %cst_59 {dimension_numbers = #tpu.dot_dimension_numbers<[1], [1], [0], [0], [0, 0, 1, 0], [], []>} : vector<8x128xbf16>, vector<8x128xbf16>, vector<8x8xf32> -> vector<8x8xf32>
    %176 = arith.extf %0 : vector<8x8xbf16> to vector<8x8xf32>
    %177 = arith.addf %175, %176 : vector<8x8xf32>
    %cst_60 = arith.constant dense<0xFF800000> : vector<8xf32>
    %178 = vector.multi_reduction <maximumf>, %177, %cst_60 [1] : vector<8x8xf32> to vector<8xf32>
    %179 = vector.shape_cast %178 : vector<8xf32> to vector<8x1xf32>
    %180 = vector.broadcast %179 : vector<8x1xf32> to vector<8x8xf32>
    %181 = arith.subf %177, %180 : vector<8x8xf32>
    %182 = arith.truncf %181 : vector<8x8xf32> to vector<8x8xbf16>
    %183 = math.exp %182 : vector<8x8xbf16>
    %184 = arith.extf %183 : vector<8x8xbf16> to vector<8x8xf32>
    %cst_61 = arith.constant dense<0.000000e+00> : vector<8xf32>
    %185 = vector.multi_reduction <add>, %184, %cst_61 [1] : vector<8x8xf32> to vector<8xf32>
    %186 = vector.shape_cast %185 : vector<8xf32> to vector<8x1xf32>
    %187 = tpu.reciprocal %186 {approx = true} : vector<8x1xf32> -> vector<8x1xf32>
    %188 = arith.truncf %187 : vector<8x1xf32> to vector<8x1xbf16>
    %189 = vector.broadcast %188 : vector<8x1xbf16> to vector<8x8xbf16>
    %190 = arith.mulf %183, %189 : vector<8x8xbf16>
    %cst_62 = arith.constant dense<0.000000e+00> : vector<8x128xf32>
    %191 = tpu.matmul %190, %173, %cst_62 {dimension_numbers = #tpu.dot_dimension_numbers<[1], [0], [0], [1], [0, 0, 1, 1], [], []>} : vector<8x8xbf16>, vector<8x128xbf16>, vector<8x128xf32> -> vector<8x128xf32>
    %192 = vector.broadcast %6 : vector<8x1xf32> to vector<8x128xf32>
    %193 = arith.mulf %191, %192 : vector<8x128xf32>
    %194 = arith.addf %193, %174 : vector<8x128xf32>
    %cst_63 = arith.constant 0.000000e+00 : f32
    %195 = vector.broadcast %cst_63 : f32 to vector<8x128xf32>
    %196 = arith.cmpf ogt, %194, %195 : vector<8x128xf32>
    %cst_64 = arith.constant 0.000000e+00 : f32
    %197 = vector.broadcast %cst_64 : f32 to vector<8x128xf32>
    %198 = arith.minimumf %194, %197 : vector<8x128xf32>
    %199 = math.exp %198 : vector<8x128xf32>
    %cst_65 = arith.constant 1.000000e+00 : f32
    %200 = vector.broadcast %cst_65 : f32 to vector<8x128xf32>
    %201 = arith.subf %199, %200 : vector<8x128xf32>
    %202 = arith.select %196, %194, %201 : vector<8x128xi1>, vector<8x128xf32>
    %203 = arith.truncf %202 : vector<8x128xf32> to vector<8x128xbf16>
    %c5 = arith.constant 5 : index
    %c0_66 = arith.constant 0 : index
    %c0_67 = arith.constant 0 : index
    %204 = vector.load %arg3[%c5, %c0_66, %c0_67] : memref<13x128x512xbf16, #tpu.memory_space<vmem>>, vector<1x128x512xbf16>
    %205 = vector.shape_cast %204 : vector<1x128x512xbf16> to vector<128x512xbf16>
    %cst_68 = arith.constant dense<0.000000e+00> : vector<8x512xf32>
    %206 = tpu.matmul %203, %205, %cst_68 {dimension_numbers = #tpu.dot_dimension_numbers<[1], [0], [0], [1], [0, 0, 1, 1], [], []>} : vector<8x128xbf16>, vector<128x512xbf16>, vector<8x512xf32> -> vector<8x512xf32>
    %c5_69 = arith.constant 5 : index
    %c0_70 = arith.constant 0 : index
    %c0_71 = arith.constant 0 : index
    %207 = vector.load %arg4[%c5_69, %c0_70, %c0_71] : memref<13x1x512xf32, #tpu.memory_space<vmem>>, vector<1x1x512xf32>
    %208 = vector.shape_cast %207 : vector<1x1x512xf32> to vector<1x512xf32>
    %209 = vector.broadcast %208 : vector<1x512xf32> to vector<8x512xf32>
    %210 = arith.addf %206, %209 : vector<8x512xf32>
    %211 = vector.extract_strided_slice %210 {offsets = [0, 0], sizes = [8, 384], strides = [1, 1]} : vector<8x512xf32> to vector<8x384xf32>
    %212 = arith.truncf %211 : vector<8x384xf32> to vector<8x384xbf16>
    %213 = vector.extract_strided_slice %212 {offsets = [0, 0], sizes = [8, 128], strides = [1, 1]} : vector<8x384xbf16> to vector<8x128xbf16>
    %214 = vector.extract_strided_slice %212 {offsets = [0, 128], sizes = [8, 128], strides = [1, 1]} : vector<8x384xbf16> to vector<8x128xbf16>
    %215 = vector.extract_strided_slice %212 {offsets = [0, 256], sizes = [8, 128], strides = [1, 1]} : vector<8x384xbf16> to vector<8x128xbf16>
    %216 = vector.extract_strided_slice %210 {offsets = [0, 384], sizes = [8, 128], strides = [1, 1]} : vector<8x512xf32> to vector<8x128xf32>
    %cst_72 = arith.constant dense<0.000000e+00> : vector<8x8xf32>
    %217 = tpu.matmul %213, %214, %cst_72 {dimension_numbers = #tpu.dot_dimension_numbers<[1], [1], [0], [0], [0, 0, 1, 0], [], []>} : vector<8x128xbf16>, vector<8x128xbf16>, vector<8x8xf32> -> vector<8x8xf32>
    %218 = arith.extf %0 : vector<8x8xbf16> to vector<8x8xf32>
    %219 = arith.addf %217, %218 : vector<8x8xf32>
    %cst_73 = arith.constant dense<0xFF800000> : vector<8xf32>
    %220 = vector.multi_reduction <maximumf>, %219, %cst_73 [1] : vector<8x8xf32> to vector<8xf32>
    %221 = vector.shape_cast %220 : vector<8xf32> to vector<8x1xf32>
    %222 = vector.broadcast %221 : vector<8x1xf32> to vector<8x8xf32>
    %223 = arith.subf %219, %222 : vector<8x8xf32>
    %224 = arith.truncf %223 : vector<8x8xf32> to vector<8x8xbf16>
    %225 = math.exp %224 : vector<8x8xbf16>
    %226 = arith.extf %225 : vector<8x8xbf16> to vector<8x8xf32>
    %cst_74 = arith.constant dense<0.000000e+00> : vector<8xf32>
    %227 = vector.multi_reduction <add>, %226, %cst_74 [1] : vector<8x8xf32> to vector<8xf32>
    %228 = vector.shape_cast %227 : vector<8xf32> to vector<8x1xf32>
    %229 = tpu.reciprocal %228 {approx = true} : vector<8x1xf32> -> vector<8x1xf32>
    %230 = arith.truncf %229 : vector<8x1xf32> to vector<8x1xbf16>
    %231 = vector.broadcast %230 : vector<8x1xbf16> to vector<8x8xbf16>
    %232 = arith.mulf %225, %231 : vector<8x8xbf16>
    %cst_75 = arith.constant dense<0.000000e+00> : vector<8x128xf32>
    %233 = tpu.matmul %232, %215, %cst_75 {dimension_numbers = #tpu.dot_dimension_numbers<[1], [0], [0], [1], [0, 0, 1, 1], [], []>} : vector<8x8xbf16>, vector<8x128xbf16>, vector<8x128xf32> -> vector<8x128xf32>
    %234 = vector.broadcast %6 : vector<8x1xf32> to vector<8x128xf32>
    %235 = arith.mulf %233, %234 : vector<8x128xf32>
    %236 = arith.addf %235, %216 : vector<8x128xf32>
    %237 = arith.truncf %236 : vector<8x128xf32> to vector<8x128xbf16>
    %c6 = arith.constant 6 : index
    %c0_76 = arith.constant 0 : index
    %c0_77 = arith.constant 0 : index
    %238 = vector.load %arg3[%c6, %c0_76, %c0_77] : memref<13x128x512xbf16, #tpu.memory_space<vmem>>, vector<1x128x512xbf16>
    %239 = vector.shape_cast %238 : vector<1x128x512xbf16> to vector<128x512xbf16>
    %cst_78 = arith.constant dense<0.000000e+00> : vector<8x512xf32>
    %240 = tpu.matmul %237, %239, %cst_78 {dimension_numbers = #tpu.dot_dimension_numbers<[1], [0], [0], [1], [0, 0, 1, 1], [], []>} : vector<8x128xbf16>, vector<128x512xbf16>, vector<8x512xf32> -> vector<8x512xf32>
    %c6_79 = arith.constant 6 : index
    %c0_80 = arith.constant 0 : index
    %c0_81 = arith.constant 0 : index
    %241 = vector.load %arg4[%c6_79, %c0_80, %c0_81] : memref<13x1x512xf32, #tpu.memory_space<vmem>>, vector<1x1x512xf32>
    %242 = vector.shape_cast %241 : vector<1x1x512xf32> to vector<1x512xf32>
    %243 = vector.broadcast %242 : vector<1x512xf32> to vector<8x512xf32>
    %244 = arith.addf %240, %243 : vector<8x512xf32>
    %245 = vector.extract_strided_slice %244 {offsets = [0, 0], sizes = [8, 384], strides = [1, 1]} : vector<8x512xf32> to vector<8x384xf32>
    %246 = arith.truncf %245 : vector<8x384xf32> to vector<8x384xbf16>
    %247 = vector.extract_strided_slice %246 {offsets = [0, 0], sizes = [8, 128], strides = [1, 1]} : vector<8x384xbf16> to vector<8x128xbf16>
    %248 = vector.extract_strided_slice %246 {offsets = [0, 128], sizes = [8, 128], strides = [1, 1]} : vector<8x384xbf16> to vector<8x128xbf16>
    %249 = vector.extract_strided_slice %246 {offsets = [0, 256], sizes = [8, 128], strides = [1, 1]} : vector<8x384xbf16> to vector<8x128xbf16>
    %250 = vector.extract_strided_slice %244 {offsets = [0, 384], sizes = [8, 128], strides = [1, 1]} : vector<8x512xf32> to vector<8x128xf32>
    %cst_82 = arith.constant dense<0.000000e+00> : vector<8x8xf32>
    %251 = tpu.matmul %247, %248, %cst_82 {dimension_numbers = #tpu.dot_dimension_numbers<[1], [1], [0], [0], [0, 0, 1, 0], [], []>} : vector<8x128xbf16>, vector<8x128xbf16>, vector<8x8xf32> -> vector<8x8xf32>
    %252 = arith.extf %0 : vector<8x8xbf16> to vector<8x8xf32>
    %253 = arith.addf %251, %252 : vector<8x8xf32>
    %cst_83 = arith.constant dense<0xFF800000> : vector<8xf32>
    %254 = vector.multi_reduction <maximumf>, %253, %cst_83 [1] : vector<8x8xf32> to vector<8xf32>
    %255 = vector.shape_cast %254 : vector<8xf32> to vector<8x1xf32>
    %256 = vector.broadcast %255 : vector<8x1xf32> to vector<8x8xf32>
    %257 = arith.subf %253, %256 : vector<8x8xf32>
    %258 = arith.truncf %257 : vector<8x8xf32> to vector<8x8xbf16>
    %259 = math.exp %258 : vector<8x8xbf16>
    %260 = arith.extf %259 : vector<8x8xbf16> to vector<8x8xf32>
    %cst_84 = arith.constant dense<0.000000e+00> : vector<8xf32>
    %261 = vector.multi_reduction <add>, %260, %cst_84 [1] : vector<8x8xf32> to vector<8xf32>
    %262 = vector.shape_cast %261 : vector<8xf32> to vector<8x1xf32>
    %263 = tpu.reciprocal %262 {approx = true} : vector<8x1xf32> -> vector<8x1xf32>
    %264 = arith.truncf %263 : vector<8x1xf32> to vector<8x1xbf16>
    %265 = vector.broadcast %264 : vector<8x1xbf16> to vector<8x8xbf16>
    %266 = arith.mulf %259, %265 : vector<8x8xbf16>
    %cst_85 = arith.constant dense<0.000000e+00> : vector<8x128xf32>
    %267 = tpu.matmul %266, %249, %cst_85 {dimension_numbers = #tpu.dot_dimension_numbers<[1], [0], [0], [1], [0, 0, 1, 1], [], []>} : vector<8x8xbf16>, vector<8x128xbf16>, vector<8x128xf32> -> vector<8x128xf32>
    %268 = vector.broadcast %6 : vector<8x1xf32> to vector<8x128xf32>
    %269 = arith.mulf %267, %268 : vector<8x128xf32>
    %270 = arith.addf %269, %250 : vector<8x128xf32>
    %cst_86 = arith.constant 0.000000e+00 : f32
    %271 = vector.broadcast %cst_86 : f32 to vector<8x128xf32>
    %272 = arith.cmpf ogt, %270, %271 : vector<8x128xf32>
    %cst_87 = arith.constant 0.000000e+00 : f32
    %273 = vector.broadcast %cst_87 : f32 to vector<8x128xf32>
    %274 = arith.minimumf %270, %273 : vector<8x128xf32>
    %275 = math.exp %274 : vector<8x128xf32>
    %cst_88 = arith.constant 1.000000e+00 : f32
    %276 = vector.broadcast %cst_88 : f32 to vector<8x128xf32>
    %277 = arith.subf %275, %276 : vector<8x128xf32>
    %278 = arith.select %272, %270, %277 : vector<8x128xi1>, vector<8x128xf32>
    %279 = arith.truncf %278 : vector<8x128xf32> to vector<8x128xbf16>
    %c7 = arith.constant 7 : index
    %c0_89 = arith.constant 0 : index
    %c0_90 = arith.constant 0 : index
    %280 = vector.load %arg3[%c7, %c0_89, %c0_90] : memref<13x128x512xbf16, #tpu.memory_space<vmem>>, vector<1x128x512xbf16>
    %281 = vector.shape_cast %280 : vector<1x128x512xbf16> to vector<128x512xbf16>
    %cst_91 = arith.constant dense<0.000000e+00> : vector<8x512xf32>
    %282 = tpu.matmul %279, %281, %cst_91 {dimension_numbers = #tpu.dot_dimension_numbers<[1], [0], [0], [1], [0, 0, 1, 1], [], []>} : vector<8x128xbf16>, vector<128x512xbf16>, vector<8x512xf32> -> vector<8x512xf32>
    %c7_92 = arith.constant 7 : index
    %c0_93 = arith.constant 0 : index
    %c0_94 = arith.constant 0 : index
    %283 = vector.load %arg4[%c7_92, %c0_93, %c0_94] : memref<13x1x512xf32, #tpu.memory_space<vmem>>, vector<1x1x512xf32>
    %284 = vector.shape_cast %283 : vector<1x1x512xf32> to vector<1x512xf32>
    %285 = vector.broadcast %284 : vector<1x512xf32> to vector<8x512xf32>
    %286 = arith.addf %282, %285 : vector<8x512xf32>
    %287 = vector.extract_strided_slice %286 {offsets = [0, 0], sizes = [8, 384], strides = [1, 1]} : vector<8x512xf32> to vector<8x384xf32>
    %288 = arith.truncf %287 : vector<8x384xf32> to vector<8x384xbf16>
    %289 = vector.extract_strided_slice %288 {offsets = [0, 0], sizes = [8, 128], strides = [1, 1]} : vector<8x384xbf16> to vector<8x128xbf16>
    %290 = vector.extract_strided_slice %288 {offsets = [0, 128], sizes = [8, 128], strides = [1, 1]} : vector<8x384xbf16> to vector<8x128xbf16>
    %291 = vector.extract_strided_slice %288 {offsets = [0, 256], sizes = [8, 128], strides = [1, 1]} : vector<8x384xbf16> to vector<8x128xbf16>
    %292 = vector.extract_strided_slice %286 {offsets = [0, 384], sizes = [8, 128], strides = [1, 1]} : vector<8x512xf32> to vector<8x128xf32>
    %cst_95 = arith.constant dense<0.000000e+00> : vector<8x8xf32>
    %293 = tpu.matmul %289, %290, %cst_95 {dimension_numbers = #tpu.dot_dimension_numbers<[1], [1], [0], [0], [0, 0, 1, 0], [], []>} : vector<8x128xbf16>, vector<8x128xbf16>, vector<8x8xf32> -> vector<8x8xf32>
    %294 = arith.extf %0 : vector<8x8xbf16> to vector<8x8xf32>
    %295 = arith.addf %293, %294 : vector<8x8xf32>
    %cst_96 = arith.constant dense<0xFF800000> : vector<8xf32>
    %296 = vector.multi_reduction <maximumf>, %295, %cst_96 [1] : vector<8x8xf32> to vector<8xf32>
    %297 = vector.shape_cast %296 : vector<8xf32> to vector<8x1xf32>
    %298 = vector.broadcast %297 : vector<8x1xf32> to vector<8x8xf32>
    %299 = arith.subf %295, %298 : vector<8x8xf32>
    %300 = arith.truncf %299 : vector<8x8xf32> to vector<8x8xbf16>
    %301 = math.exp %300 : vector<8x8xbf16>
    %302 = arith.extf %301 : vector<8x8xbf16> to vector<8x8xf32>
    %cst_97 = arith.constant dense<0.000000e+00> : vector<8xf32>
    %303 = vector.multi_reduction <add>, %302, %cst_97 [1] : vector<8x8xf32> to vector<8xf32>
    %304 = vector.shape_cast %303 : vector<8xf32> to vector<8x1xf32>
    %305 = tpu.reciprocal %304 {approx = true} : vector<8x1xf32> -> vector<8x1xf32>
    %306 = arith.truncf %305 : vector<8x1xf32> to vector<8x1xbf16>
    %307 = vector.broadcast %306 : vector<8x1xbf16> to vector<8x8xbf16>
    %308 = arith.mulf %301, %307 : vector<8x8xbf16>
    %cst_98 = arith.constant dense<0.000000e+00> : vector<8x128xf32>
    %309 = tpu.matmul %308, %291, %cst_98 {dimension_numbers = #tpu.dot_dimension_numbers<[1], [0], [0], [1], [0, 0, 1, 1], [], []>} : vector<8x8xbf16>, vector<8x128xbf16>, vector<8x128xf32> -> vector<8x128xf32>
    %310 = vector.broadcast %6 : vector<8x1xf32> to vector<8x128xf32>
    %311 = arith.mulf %309, %310 : vector<8x128xf32>
    %312 = arith.addf %311, %292 : vector<8x128xf32>
    %313 = arith.truncf %84 : vector<8x128xf32> to vector<8x128xbf16>
    %c8 = arith.constant 8 : index
    %c0_99 = arith.constant 0 : index
    %c0_100 = arith.constant 0 : index
    %314 = vector.load %arg3[%c8, %c0_99, %c0_100] : memref<13x128x512xbf16, #tpu.memory_space<vmem>>, vector<1x128x512xbf16>
    %315 = vector.shape_cast %314 : vector<1x128x512xbf16> to vector<128x512xbf16>
    %cst_101 = arith.constant dense<0.000000e+00> : vector<8x512xf32>
    %316 = tpu.matmul %313, %315, %cst_101 {dimension_numbers = #tpu.dot_dimension_numbers<[1], [0], [0], [1], [0, 0, 1, 1], [], []>} : vector<8x128xbf16>, vector<128x512xbf16>, vector<8x512xf32> -> vector<8x512xf32>
    %317 = arith.truncf %236 : vector<8x128xf32> to vector<8x128xbf16>
    %c9 = arith.constant 9 : index
    %c0_102 = arith.constant 0 : index
    %c0_103 = arith.constant 0 : index
    %318 = vector.load %arg3[%c9, %c0_102, %c0_103] : memref<13x128x512xbf16, #tpu.memory_space<vmem>>, vector<1x128x512xbf16>
    %319 = vector.shape_cast %318 : vector<1x128x512xbf16> to vector<128x512xbf16>
    %cst_104 = arith.constant dense<0.000000e+00> : vector<8x512xf32>
    %320 = tpu.matmul %317, %319, %cst_104 {dimension_numbers = #tpu.dot_dimension_numbers<[1], [0], [0], [1], [0, 0, 1, 1], [], []>} : vector<8x128xbf16>, vector<128x512xbf16>, vector<8x512xf32> -> vector<8x512xf32>
    %321 = arith.addf %316, %320 : vector<8x512xf32>
    %c8_105 = arith.constant 8 : index
    %c0_106 = arith.constant 0 : index
    %c0_107 = arith.constant 0 : index
    %322 = vector.load %arg4[%c8_105, %c0_106, %c0_107] : memref<13x1x512xf32, #tpu.memory_space<vmem>>, vector<1x1x512xf32>
    %323 = vector.shape_cast %322 : vector<1x1x512xf32> to vector<1x512xf32>
    %324 = vector.broadcast %323 : vector<1x512xf32> to vector<8x512xf32>
    %325 = arith.addf %321, %324 : vector<8x512xf32>
    %326 = vector.extract_strided_slice %325 {offsets = [0, 0], sizes = [8, 384], strides = [1, 1]} : vector<8x512xf32> to vector<8x384xf32>
    %327 = arith.truncf %326 : vector<8x384xf32> to vector<8x384xbf16>
    %328 = vector.extract_strided_slice %327 {offsets = [0, 0], sizes = [8, 128], strides = [1, 1]} : vector<8x384xbf16> to vector<8x128xbf16>
    %329 = vector.extract_strided_slice %327 {offsets = [0, 128], sizes = [8, 128], strides = [1, 1]} : vector<8x384xbf16> to vector<8x128xbf16>
    %330 = vector.extract_strided_slice %327 {offsets = [0, 256], sizes = [8, 128], strides = [1, 1]} : vector<8x384xbf16> to vector<8x128xbf16>
    %331 = vector.extract_strided_slice %325 {offsets = [0, 384], sizes = [8, 128], strides = [1, 1]} : vector<8x512xf32> to vector<8x128xf32>
    %cst_108 = arith.constant dense<0.000000e+00> : vector<8x8xf32>
    %332 = tpu.matmul %328, %329, %cst_108 {dimension_numbers = #tpu.dot_dimension_numbers<[1], [1], [0], [0], [0, 0, 1, 0], [], []>} : vector<8x128xbf16>, vector<8x128xbf16>, vector<8x8xf32> -> vector<8x8xf32>
    %333 = arith.extf %0 : vector<8x8xbf16> to vector<8x8xf32>
    %334 = arith.addf %332, %333 : vector<8x8xf32>
    %cst_109 = arith.constant dense<0xFF800000> : vector<8xf32>
    %335 = vector.multi_reduction <maximumf>, %334, %cst_109 [1] : vector<8x8xf32> to vector<8xf32>
    %336 = vector.shape_cast %335 : vector<8xf32> to vector<8x1xf32>
    %337 = vector.broadcast %336 : vector<8x1xf32> to vector<8x8xf32>
    %338 = arith.subf %334, %337 : vector<8x8xf32>
    %339 = arith.truncf %338 : vector<8x8xf32> to vector<8x8xbf16>
    %340 = math.exp %339 : vector<8x8xbf16>
    %341 = arith.extf %340 : vector<8x8xbf16> to vector<8x8xf32>
    %cst_110 = arith.constant dense<0.000000e+00> : vector<8xf32>
    %342 = vector.multi_reduction <add>, %341, %cst_110 [1] : vector<8x8xf32> to vector<8xf32>
    %343 = vector.shape_cast %342 : vector<8xf32> to vector<8x1xf32>
    %344 = tpu.reciprocal %343 {approx = true} : vector<8x1xf32> -> vector<8x1xf32>
    %345 = arith.truncf %344 : vector<8x1xf32> to vector<8x1xbf16>
    %346 = vector.broadcast %345 : vector<8x1xbf16> to vector<8x8xbf16>
    %347 = arith.mulf %340, %346 : vector<8x8xbf16>
    %cst_111 = arith.constant dense<0.000000e+00> : vector<8x128xf32>
    %348 = tpu.matmul %347, %330, %cst_111 {dimension_numbers = #tpu.dot_dimension_numbers<[1], [0], [0], [1], [0, 0, 1, 1], [], []>} : vector<8x8xbf16>, vector<8x128xbf16>, vector<8x128xf32> -> vector<8x128xf32>
    %349 = vector.broadcast %6 : vector<8x1xf32> to vector<8x128xf32>
    %350 = arith.mulf %348, %349 : vector<8x128xf32>
    %351 = arith.addf %350, %331 : vector<8x128xf32>
    %cst_112 = arith.constant 0.000000e+00 : f32
    %352 = vector.broadcast %cst_112 : f32 to vector<8x128xf32>
    %353 = arith.cmpf ogt, %351, %352 : vector<8x128xf32>
    %cst_113 = arith.constant 0.000000e+00 : f32
    %354 = vector.broadcast %cst_113 : f32 to vector<8x128xf32>
    %355 = arith.minimumf %351, %354 : vector<8x128xf32>
    %356 = math.exp %355 : vector<8x128xf32>
    %cst_114 = arith.constant 1.000000e+00 : f32
    %357 = vector.broadcast %cst_114 : f32 to vector<8x128xf32>
    %358 = arith.subf %356, %357 : vector<8x128xf32>
    %359 = arith.select %353, %351, %358 : vector<8x128xi1>, vector<8x128xf32>
    %360 = arith.truncf %359 : vector<8x128xf32> to vector<8x128xbf16>
    %c10 = arith.constant 10 : index
    %c0_115 = arith.constant 0 : index
    %c0_116 = arith.constant 0 : index
    %361 = vector.load %arg3[%c10, %c0_115, %c0_116] : memref<13x128x512xbf16, #tpu.memory_space<vmem>>, vector<1x128x512xbf16>
    %362 = vector.shape_cast %361 : vector<1x128x512xbf16> to vector<128x512xbf16>
    %cst_117 = arith.constant dense<0.000000e+00> : vector<8x512xf32>
    %363 = tpu.matmul %360, %362, %cst_117 {dimension_numbers = #tpu.dot_dimension_numbers<[1], [0], [0], [1], [0, 0, 1, 1], [], []>} : vector<8x128xbf16>, vector<128x512xbf16>, vector<8x512xf32> -> vector<8x512xf32>
    %c10_118 = arith.constant 10 : index
    %c0_119 = arith.constant 0 : index
    %c0_120 = arith.constant 0 : index
    %364 = vector.load %arg4[%c10_118, %c0_119, %c0_120] : memref<13x1x512xf32, #tpu.memory_space<vmem>>, vector<1x1x512xf32>
    %365 = vector.shape_cast %364 : vector<1x1x512xf32> to vector<1x512xf32>
    %366 = vector.broadcast %365 : vector<1x512xf32> to vector<8x512xf32>
    %367 = arith.addf %363, %366 : vector<8x512xf32>
    %368 = vector.extract_strided_slice %367 {offsets = [0, 0], sizes = [8, 384], strides = [1, 1]} : vector<8x512xf32> to vector<8x384xf32>
    %369 = arith.truncf %368 : vector<8x384xf32> to vector<8x384xbf16>
    %370 = vector.extract_strided_slice %369 {offsets = [0, 0], sizes = [8, 128], strides = [1, 1]} : vector<8x384xbf16> to vector<8x128xbf16>
    %371 = vector.extract_strided_slice %369 {offsets = [0, 128], sizes = [8, 128], strides = [1, 1]} : vector<8x384xbf16> to vector<8x128xbf16>
    %372 = vector.extract_strided_slice %369 {offsets = [0, 256], sizes = [8, 128], strides = [1, 1]} : vector<8x384xbf16> to vector<8x128xbf16>
    %373 = vector.extract_strided_slice %367 {offsets = [0, 384], sizes = [8, 128], strides = [1, 1]} : vector<8x512xf32> to vector<8x128xf32>
    %cst_121 = arith.constant dense<0.000000e+00> : vector<8x8xf32>
    %374 = tpu.matmul %370, %371, %cst_121 {dimension_numbers = #tpu.dot_dimension_numbers<[1], [1], [0], [0], [0, 0, 1, 0], [], []>} : vector<8x128xbf16>, vector<8x128xbf16>, vector<8x8xf32> -> vector<8x8xf32>
    %375 = arith.extf %0 : vector<8x8xbf16> to vector<8x8xf32>
    %376 = arith.addf %374, %375 : vector<8x8xf32>
    %cst_122 = arith.constant dense<0xFF800000> : vector<8xf32>
    %377 = vector.multi_reduction <maximumf>, %376, %cst_122 [1] : vector<8x8xf32> to vector<8xf32>
    %378 = vector.shape_cast %377 : vector<8xf32> to vector<8x1xf32>
    %379 = vector.broadcast %378 : vector<8x1xf32> to vector<8x8xf32>
    %380 = arith.subf %376, %379 : vector<8x8xf32>
    %381 = arith.truncf %380 : vector<8x8xf32> to vector<8x8xbf16>
    %382 = math.exp %381 : vector<8x8xbf16>
    %383 = arith.extf %382 : vector<8x8xbf16> to vector<8x8xf32>
    %cst_123 = arith.constant dense<0.000000e+00> : vector<8xf32>
    %384 = vector.multi_reduction <add>, %383, %cst_123 [1] : vector<8x8xf32> to vector<8xf32>
    %385 = vector.shape_cast %384 : vector<8xf32> to vector<8x1xf32>
    %386 = tpu.reciprocal %385 {approx = true} : vector<8x1xf32> -> vector<8x1xf32>
    %387 = arith.truncf %386 : vector<8x1xf32> to vector<8x1xbf16>
    %388 = vector.broadcast %387 : vector<8x1xbf16> to vector<8x8xbf16>
    %389 = arith.mulf %382, %388 : vector<8x8xbf16>
    %cst_124 = arith.constant dense<0.000000e+00> : vector<8x128xf32>
    %390 = tpu.matmul %389, %372, %cst_124 {dimension_numbers = #tpu.dot_dimension_numbers<[1], [0], [0], [1], [0, 0, 1, 1], [], []>} : vector<8x8xbf16>, vector<8x128xbf16>, vector<8x128xf32> -> vector<8x128xf32>
    %391 = vector.broadcast %6 : vector<8x1xf32> to vector<8x128xf32>
    %392 = arith.mulf %390, %391 : vector<8x128xf32>
    %393 = arith.addf %392, %373 : vector<8x128xf32>
    %394 = arith.truncf %393 : vector<8x128xf32> to vector<8x128xbf16>
    %c11 = arith.constant 11 : index
    %c0_125 = arith.constant 0 : index
    %c0_126 = arith.constant 0 : index
    %395 = vector.load %arg3[%c11, %c0_125, %c0_126] : memref<13x128x512xbf16, #tpu.memory_space<vmem>>, vector<1x128x512xbf16>
    %396 = vector.shape_cast %395 : vector<1x128x512xbf16> to vector<128x512xbf16>
    %cst_127 = arith.constant dense<0.000000e+00> : vector<8x512xf32>
    %397 = tpu.matmul %394, %396, %cst_127 {dimension_numbers = #tpu.dot_dimension_numbers<[1], [0], [0], [1], [0, 0, 1, 1], [], []>} : vector<8x128xbf16>, vector<128x512xbf16>, vector<8x512xf32> -> vector<8x512xf32>
    %c11_128 = arith.constant 11 : index
    %c0_129 = arith.constant 0 : index
    %c0_130 = arith.constant 0 : index
    %398 = vector.load %arg4[%c11_128, %c0_129, %c0_130] : memref<13x1x512xf32, #tpu.memory_space<vmem>>, vector<1x1x512xf32>
    %399 = vector.shape_cast %398 : vector<1x1x512xf32> to vector<1x512xf32>
    %400 = vector.broadcast %399 : vector<1x512xf32> to vector<8x512xf32>
    %401 = arith.addf %397, %400 : vector<8x512xf32>
    %402 = vector.extract_strided_slice %401 {offsets = [0, 0], sizes = [8, 384], strides = [1, 1]} : vector<8x512xf32> to vector<8x384xf32>
    %403 = arith.truncf %402 : vector<8x384xf32> to vector<8x384xbf16>
    %404 = vector.extract_strided_slice %403 {offsets = [0, 0], sizes = [8, 128], strides = [1, 1]} : vector<8x384xbf16> to vector<8x128xbf16>
    %405 = vector.extract_strided_slice %403 {offsets = [0, 128], sizes = [8, 128], strides = [1, 1]} : vector<8x384xbf16> to vector<8x128xbf16>
    %406 = vector.extract_strided_slice %403 {offsets = [0, 256], sizes = [8, 128], strides = [1, 1]} : vector<8x384xbf16> to vector<8x128xbf16>
    %407 = vector.extract_strided_slice %401 {offsets = [0, 384], sizes = [8, 128], strides = [1, 1]} : vector<8x512xf32> to vector<8x128xf32>
    %cst_131 = arith.constant dense<0.000000e+00> : vector<8x8xf32>
    %408 = tpu.matmul %404, %405, %cst_131 {dimension_numbers = #tpu.dot_dimension_numbers<[1], [1], [0], [0], [0, 0, 1, 0], [], []>} : vector<8x128xbf16>, vector<8x128xbf16>, vector<8x8xf32> -> vector<8x8xf32>
    %409 = arith.extf %0 : vector<8x8xbf16> to vector<8x8xf32>
    %410 = arith.addf %408, %409 : vector<8x8xf32>
    %cst_132 = arith.constant dense<0xFF800000> : vector<8xf32>
    %411 = vector.multi_reduction <maximumf>, %410, %cst_132 [1] : vector<8x8xf32> to vector<8xf32>
    %412 = vector.shape_cast %411 : vector<8xf32> to vector<8x1xf32>
    %413 = vector.broadcast %412 : vector<8x1xf32> to vector<8x8xf32>
    %414 = arith.subf %410, %413 : vector<8x8xf32>
    %415 = arith.truncf %414 : vector<8x8xf32> to vector<8x8xbf16>
    %416 = math.exp %415 : vector<8x8xbf16>
    %417 = arith.extf %416 : vector<8x8xbf16> to vector<8x8xf32>
    %cst_133 = arith.constant dense<0.000000e+00> : vector<8xf32>
    %418 = vector.multi_reduction <add>, %417, %cst_133 [1] : vector<8x8xf32> to vector<8xf32>
    %419 = vector.shape_cast %418 : vector<8xf32> to vector<8x1xf32>
    %420 = tpu.reciprocal %419 {approx = true} : vector<8x1xf32> -> vector<8x1xf32>
    %421 = arith.truncf %420 : vector<8x1xf32> to vector<8x1xbf16>
    %422 = vector.broadcast %421 : vector<8x1xbf16> to vector<8x8xbf16>
    %423 = arith.mulf %416, %422 : vector<8x8xbf16>
    %cst_134 = arith.constant dense<0.000000e+00> : vector<8x128xf32>
    %424 = tpu.matmul %423, %406, %cst_134 {dimension_numbers = #tpu.dot_dimension_numbers<[1], [0], [0], [1], [0, 0, 1, 1], [], []>} : vector<8x8xbf16>, vector<8x128xbf16>, vector<8x128xf32> -> vector<8x128xf32>
    %425 = vector.broadcast %6 : vector<8x1xf32> to vector<8x128xf32>
    %426 = arith.mulf %424, %425 : vector<8x128xf32>
    %427 = arith.addf %426, %407 : vector<8x128xf32>
    %cst_135 = arith.constant 0.000000e+00 : f32
    %428 = vector.broadcast %cst_135 : f32 to vector<8x128xf32>
    %429 = arith.cmpf ogt, %427, %428 : vector<8x128xf32>
    %cst_136 = arith.constant 0.000000e+00 : f32
    %430 = vector.broadcast %cst_136 : f32 to vector<8x128xf32>
    %431 = arith.minimumf %427, %430 : vector<8x128xf32>
    %432 = math.exp %431 : vector<8x128xf32>
    %cst_137 = arith.constant 1.000000e+00 : f32
    %433 = vector.broadcast %cst_137 : f32 to vector<8x128xf32>
    %434 = arith.subf %432, %433 : vector<8x128xf32>
    %435 = arith.select %429, %427, %434 : vector<8x128xi1>, vector<8x128xf32>
    %436 = arith.truncf %435 : vector<8x128xf32> to vector<8x128xbf16>
    %c12 = arith.constant 12 : index
    %c0_138 = arith.constant 0 : index
    %c0_139 = arith.constant 0 : index
    %437 = vector.load %arg3[%c12, %c0_138, %c0_139] : memref<13x128x512xbf16, #tpu.memory_space<vmem>>, vector<1x128x512xbf16>
    %438 = vector.shape_cast %437 : vector<1x128x512xbf16> to vector<128x512xbf16>
    %cst_140 = arith.constant dense<0.000000e+00> : vector<8x512xf32>
    %439 = tpu.matmul %436, %438, %cst_140 {dimension_numbers = #tpu.dot_dimension_numbers<[1], [0], [0], [1], [0, 0, 1, 1], [], []>} : vector<8x128xbf16>, vector<128x512xbf16>, vector<8x512xf32> -> vector<8x512xf32>
    %c12_141 = arith.constant 12 : index
    %c0_142 = arith.constant 0 : index
    %c0_143 = arith.constant 0 : index
    %440 = vector.load %arg4[%c12_141, %c0_142, %c0_143] : memref<13x1x512xf32, #tpu.memory_space<vmem>>, vector<1x1x512xf32>
    %441 = vector.shape_cast %440 : vector<1x1x512xf32> to vector<1x512xf32>
    %442 = vector.broadcast %441 : vector<1x512xf32> to vector<8x512xf32>
    %443 = arith.addf %439, %442 : vector<8x512xf32>
    %444 = vector.extract_strided_slice %443 {offsets = [0, 0], sizes = [8, 384], strides = [1, 1]} : vector<8x512xf32> to vector<8x384xf32>
    %445 = arith.truncf %444 : vector<8x384xf32> to vector<8x384xbf16>
    %446 = vector.extract_strided_slice %445 {offsets = [0, 0], sizes = [8, 128], strides = [1, 1]} : vector<8x384xbf16> to vector<8x128xbf16>
    %447 = vector.extract_strided_slice %445 {offsets = [0, 128], sizes = [8, 128], strides = [1, 1]} : vector<8x384xbf16> to vector<8x128xbf16>
    %448 = vector.extract_strided_slice %445 {offsets = [0, 256], sizes = [8, 128], strides = [1, 1]} : vector<8x384xbf16> to vector<8x128xbf16>
    %449 = vector.extract_strided_slice %443 {offsets = [0, 384], sizes = [8, 128], strides = [1, 1]} : vector<8x512xf32> to vector<8x128xf32>
    %cst_144 = arith.constant dense<0.000000e+00> : vector<8x8xf32>
    %450 = tpu.matmul %446, %447, %cst_144 {dimension_numbers = #tpu.dot_dimension_numbers<[1], [1], [0], [0], [0, 0, 1, 0], [], []>} : vector<8x128xbf16>, vector<8x128xbf16>, vector<8x8xf32> -> vector<8x8xf32>
    %451 = arith.extf %0 : vector<8x8xbf16> to vector<8x8xf32>
    %452 = arith.addf %450, %451 : vector<8x8xf32>
    %cst_145 = arith.constant dense<0xFF800000> : vector<8xf32>
    %453 = vector.multi_reduction <maximumf>, %452, %cst_145 [1] : vector<8x8xf32> to vector<8xf32>
    %454 = vector.shape_cast %453 : vector<8xf32> to vector<8x1xf32>
    %455 = vector.broadcast %454 : vector<8x1xf32> to vector<8x8xf32>
    %456 = arith.subf %452, %455 : vector<8x8xf32>
    %457 = arith.truncf %456 : vector<8x8xf32> to vector<8x8xbf16>
    %458 = math.exp %457 : vector<8x8xbf16>
    %459 = arith.extf %458 : vector<8x8xbf16> to vector<8x8xf32>
    %cst_146 = arith.constant dense<0.000000e+00> : vector<8xf32>
    %460 = vector.multi_reduction <add>, %459, %cst_146 [1] : vector<8x8xf32> to vector<8xf32>
    %461 = vector.shape_cast %460 : vector<8xf32> to vector<8x1xf32>
    %462 = tpu.reciprocal %461 {approx = true} : vector<8x1xf32> -> vector<8x1xf32>
    %463 = arith.truncf %462 : vector<8x1xf32> to vector<8x1xbf16>
    %464 = vector.broadcast %463 : vector<8x1xbf16> to vector<8x8xbf16>
    %465 = arith.mulf %458, %464 : vector<8x8xbf16>
    %cst_147 = arith.constant dense<0.000000e+00> : vector<8x128xf32>
    %466 = tpu.matmul %465, %448, %cst_147 {dimension_numbers = #tpu.dot_dimension_numbers<[1], [0], [0], [1], [0, 0, 1, 1], [], []>} : vector<8x8xbf16>, vector<8x128xbf16>, vector<8x128xf32> -> vector<8x128xf32>
    %467 = vector.broadcast %6 : vector<8x1xf32> to vector<8x128xf32>
    %468 = arith.mulf %466, %467 : vector<8x128xf32>
    %469 = arith.addf %468, %449 : vector<8x128xf32>
    %c0_148 = arith.constant 0 : index
    %c0_149 = arith.constant 0 : index
    %c0_150 = arith.constant 0 : index
    %470 = vector.load %arg5[%c0_148, %c0_149, %c0_150] : memref<6x8x128xf32, #tpu.memory_space<vmem>>, vector<1x8x128xf32>
    %471 = vector.shape_cast %470 : vector<1x8x128xf32> to vector<8x128xf32>
    %472 = vector.shape_cast %84 : vector<8x128xf32> to vector<1x8x128xf32>
    tpu.vector_store %arg5[%c0_148, %c0_149, %c0_150], %472 {strides = array<i32>} : memref<6x8x128xf32, #tpu.memory_space<vmem>>, vector<1x8x128xf32>,
    %c1_151 = arith.constant 1 : index
    %c0_152 = arith.constant 0 : index
    %c0_153 = arith.constant 0 : index
    %473 = vector.load %arg5[%c1_151, %c0_152, %c0_153] : memref<6x8x128xf32, #tpu.memory_space<vmem>>, vector<1x8x128xf32>
    %474 = vector.shape_cast %473 : vector<1x8x128xf32> to vector<8x128xf32>
    %475 = vector.shape_cast %236 : vector<8x128xf32> to vector<1x8x128xf32>
    tpu.vector_store %arg5[%c1_151, %c0_152, %c0_153], %475 {strides = array<i32>} : memref<6x8x128xf32, #tpu.memory_space<vmem>>, vector<1x8x128xf32>,
    %c2_154 = arith.constant 2 : index
    %c0_155 = arith.constant 0 : index
    %c0_156 = arith.constant 0 : index
    %476 = vector.load %arg5[%c2_154, %c0_155, %c0_156] : memref<6x8x128xf32, #tpu.memory_space<vmem>>, vector<1x8x128xf32>
    %477 = vector.shape_cast %476 : vector<1x8x128xf32> to vector<8x128xf32>
    %478 = vector.shape_cast %393 : vector<8x128xf32> to vector<1x8x128xf32>
    tpu.vector_store %arg5[%c2_154, %c0_155, %c0_156], %478 {strides = array<i32>} : memref<6x8x128xf32, #tpu.memory_space<vmem>>, vector<1x8x128xf32>,
    %c3_157 = arith.constant 3 : index
    %c0_158 = arith.constant 0 : index
    %c0_159 = arith.constant 0 : index
    %479 = vector.load %arg5[%c3_157, %c0_158, %c0_159] : memref<6x8x128xf32, #tpu.memory_space<vmem>>, vector<1x8x128xf32>
    %480 = vector.shape_cast %479 : vector<1x8x128xf32> to vector<8x128xf32>
    %481 = vector.shape_cast %160 : vector<8x128xf32> to vector<1x8x128xf32>
    tpu.vector_store %arg5[%c3_157, %c0_158, %c0_159], %481 {strides = array<i32>} : memref<6x8x128xf32, #tpu.memory_space<vmem>>, vector<1x8x128xf32>,
    %c4_160 = arith.constant 4 : index
    %c0_161 = arith.constant 0 : index
    %c0_162 = arith.constant 0 : index
    %482 = vector.load %arg5[%c4_160, %c0_161, %c0_162] : memref<6x8x128xf32, #tpu.memory_space<vmem>>, vector<1x8x128xf32>
    %483 = vector.shape_cast %482 : vector<1x8x128xf32> to vector<8x128xf32>
    %484 = vector.shape_cast %312 : vector<8x128xf32> to vector<1x8x128xf32>
    tpu.vector_store %arg5[%c4_160, %c0_161, %c0_162], %484 {strides = array<i32>} : memref<6x8x128xf32, #tpu.memory_space<vmem>>, vector<1x8x128xf32>,
    %c5_163 = arith.constant 5 : index
    %c0_164 = arith.constant 0 : index
    %c0_165 = arith.constant 0 : index
    %485 = vector.load %arg5[%c5_163, %c0_164, %c0_165] : memref<6x8x128xf32, #tpu.memory_space<vmem>>, vector<1x8x128xf32>
    %486 = vector.shape_cast %485 : vector<1x8x128xf32> to vector<8x128xf32>
    %487 = vector.shape_cast %469 : vector<8x128xf32> to vector<1x8x128xf32>
    tpu.vector_store %arg5[%c5_163, %c0_164, %c0_165], %487 {strides = array<i32>} : memref<6x8x128xf32, #tpu.memory_space<vmem>>, vector<1x8x128xf32>,
    return
  }
}

</mosaic_0001>

<llo_original>
// kernel: trans_img_forward.1
$region0: #{trans_img_forward.1}
  #allocation0 [shape = 'u32[]', space=smem, size = 0x4, offset = 0x4, fixed_abs, tag = 'smem constant byte address 0x4 - core index']
  #allocation1 [shape = 'u32[144,128]{1,0:T(1,128)}', space=vmem, size = 0x12000, scoped, tag = 'internal scratch']
  %s0 = inlined_call_operand.vmem [shape: f32[8,128], index: 0, kind: input, shape index: {}]
  %s1 = inlined_call_operand.vmem [shape: f32[8,128], index: 1, kind: input, shape index: {}]
  %s2 = inlined_call_operand.hbm [shape: bf16[8,8], index: 2, kind: input, shape index: {}]
  %s3 = inlined_call_operand.hbm [shape: bf16[13,128,512], index: 3, kind: input, shape index: {}]
  %s4 = inlined_call_operand.hbm [shape: f32[13,1,512], index: 4, kind: input, shape index: {}]
  %s5 = inlined_call_operand.vmem [shape: f32[6,8,128], index: 5, kind: output, shape index: {}]
  %s6 = sld [smem:[#allocation0]]
  $region42: #{trans_img_forward.1} parent=0
    _
  %s8 = ssub.s32 1, %s6
  %s9 = scalar_select 0, %s8, %s6
  $region1: #{trans_img_forward.1} parent=0
    #allocation2 [shape = 'u8[2048]{0}', space=vmem, size = 0x800, scoped, tag = 'input window, operand 2, single buffered']
    #allocation3 [shape = 's32[1]{0}', space=sflag, size = 0x4, scoped, tag = 'scoped memory for trans_img_forward.1']
    #allocation4 [shape = 'u8[1703936]{0}', space=vmem, size = 0x1a0000, scoped, tag = 'input window, operand 3, single buffered']
    #allocation5 [shape = 's32[1]{0}', space=sflag, size = 0x4, scoped, tag = 'scoped memory for trans_img_forward.1']
    #allocation6 [shape = 'u8[26624]{0}', space=vmem, size = 0x6800, scoped, tag = 'input window, operand 4, single buffered']
    %10 = vsyncpa [#allocation3], 0
    %11 = vsyncpa [#allocation5], 0
    // Predicated region
    $region2: #{trans_img_forward.1} parent=1 // pred_check
      _
    $region3: #{trans_img_forward.1} parent=1 // pred_check_branch
      %13 = sbr.rel (0) target = $region5
    $region4: #{trans_img_forward.1} parent=1 // pred_region
      _
    $region5: #{trans_img_forward.1} parent=1 // pred_fallthru
      _
    // Predicated region
    $region6: #{trans_img_forward.1} parent=1 // pred_check
      _
    $region7: #{trans_img_forward.1} parent=1 // pred_check_branch
      %15 = sbr.rel (0) target = $region9
    $region8: #{trans_img_forward.1} parent=1 // pred_region
      _
    $region9: #{trans_img_forward.1} parent=1 // pred_fallthru
      _
    // Predicated region
    $region10: #{trans_img_forward.1} parent=1 // pred_check
      _
    $region11: #{trans_img_forward.1} parent=1 // pred_check_branch
      %17 = sbr.rel (0) target = $region13
    $region12: #{trans_img_forward.1} parent=1 // pred_region
      %s19 = ssub.s32 64, 64
      %20 = vsyncadd [#allocation3], %s19
      %s22 = sshll.u32 [#allocation2], 4
      %s23 = int_to_ptr.vmem [resolvable:$true] %s22
      %25 = dma.hbm_to_vmem [thread:$0]  %s2, 64, %s23, [#allocation3]
    $region13: #{trans_img_forward.1} parent=1 // pred_fallthru
      _
    // Predicated region
    $region14: #{trans_img_forward.1} parent=1 // pred_check
      _
    $region15: #{trans_img_forward.1} parent=1 // pred_check_branch
      %27 = sbr.rel (0) target = $region17
    $region16: #{trans_img_forward.1} parent=1 // pred_region
      %s29 = ssub.s32 53248, 53248
      %30 = vsyncadd [#allocation5], %s29
      %s31 = sshll.u32 [#allocation4], 4
      %s32 = int_to_ptr.vmem [resolvable:$true] %s31
      %37 = dma.hbm_to_vmem [thread:$0]  %s3, 53248, %s32, [#allocation5], 256, 256, 16
    $region17: #{trans_img_forward.1} parent=1 // pred_fallthru
      _
    // Predicated region
    $region18: #{trans_img_forward.1} parent=1 // pred_check
      _
    $region19: #{trans_img_forward.1} parent=1 // pred_check_branch
      %39 = sbr.rel (0) target = $region21
    $region20: #{trans_img_forward.1} parent=1 // pred_region
      %s41 = ssub.s32 832, 832
      %42 = vsyncadd [#allocation5], %s41
      %s43 = sshll.u32 [#allocation6], 4
      %s44 = int_to_ptr.vmem [resolvable:$true] %s43
      %49 = dma.hbm_to_vmem [thread:$0]  %s4, 832, %s44, [#allocation5], 64, 64, 4
    $region21: #{trans_img_forward.1} parent=1 // pred_fallthru
      _
    // Predicated region
    $region22: #{trans_img_forward.1} parent=1 // pred_check
      _
    $region23: #{trans_img_forward.1} parent=1 // pred_check_branch
      %51 = sbr.rel (0) target = $region25
    $region24: #{trans_img_forward.1} parent=1 // pred_region
      %52 = dma.done [#allocation3], 64
    $region25: #{trans_img_forward.1} parent=1 // pred_fallthru
      _
    // Predicated region
    $region26: #{trans_img_forward.1} parent=1 // pred_check
      _
    $region27: #{trans_img_forward.1} parent=1 // pred_check_branch
      %54 = sbr.rel (0) target = $region29
    $region28: #{trans_img_forward.1} parent=1 // pred_region
      %55 = dma.done [#allocation5], 53248
    $region29: #{trans_img_forward.1} parent=1 // pred_fallthru
      _
    // Predicated region
    $region30: #{trans_img_forward.1} parent=1 // pred_check
      _
    $region31: #{trans_img_forward.1} parent=1 // pred_check_branch
      %57 = sbr.rel (0) target = $region33
    $region32: #{trans_img_forward.1} parent=1 // pred_region
      %58 = dma.done [#allocation5], 832
    $region33: #{trans_img_forward.1} parent=1 // pred_fallthru
      _
    %v64 = vld [vmem:[#allocation2] sm:$0xf]
    %vm65 = vcmask 60416
    %v68 = vsel %vm65, %v64, 4286644096
    %70 = vmax.xlane.bf16.xlu0 %v68
    %v71 = vpop.xlane.xlu0 %70
    %vm72 = vcmp.gt.bf16.partialorder %v71, 3212885888
    %v73 = vsel %vm72, 65537, 0
    %v74 = vunpack.c.l.b16 %v73
    %vm75 = vcmp.ne.s32.totalorder %v74, 0
    %v76 = vsel %vm75, 1, 0
    %v77 = vcvt.s32.f32 %v76
    %v78 = vld [vmem:[%s0] sm:$0xff]
    %v79 = vld [vmem:[%s1] sm:$0xff]
    %v80 = vpack.c.bf16 %v78, %v78
    %v81 = vld [vmem:[#allocation4] sm:$0xff]
    %v82 = vld [vmem:[#allocation4 + $0x8] sm:$0xff]
    %v83 = vld [vmem:[#allocation4 + $0x10] sm:$0xff]
    %v84 = vld [vmem:[#allocation4 + $0x18] sm:$0xff]
    %v85 = vld [vmem:[#allocation4 + $0x20] sm:$0xff]
    %v86 = vld [vmem:[#allocation4 + $0x28] sm:$0xff]
    %v87 = vld [vmem:[#allocation4 + $0x30] sm:$0xff]
    %v88 = vld [vmem:[#allocation4 + $0x38] sm:$0xff]
    %v89 = vld [vmem:[#allocation4 + $0x40] sm:$0xff]
    %v90 = vld [vmem:[#allocation4 + $0x48] sm:$0xff]
    %v91 = vld [vmem:[#allocation4 + $0x50] sm:$0xff]
    %v92 = vld [vmem:[#allocation4 + $0x58] sm:$0xff]
    %v93 = vld [vmem:[#allocation4 + $0x60] sm:$0xff]
    %v94 = vld [vmem:[#allocation4 + $0x68] sm:$0xff]
    %v95 = vld [vmem:[#allocation4 + $0x70] sm:$0xff]
    %v96 = vld [vmem:[#allocation4 + $0x78] sm:$0xff]
    %v97 = vld [vmem:[#allocation4 + $0x80] sm:$0xff]
    %v98 = vld [vmem:[#allocation4 + $0x88] sm:$0xff]
    %v99 = vld [vmem:[#allocation4 + $0x90] sm:$0xff]
    %v100 = vld [vmem:[#allocation4 + $0x98] sm:$0xff]
    %v101 = vld [vmem:[#allocation4 + $0xa0] sm:$0xff]
    %v102 = vld [vmem:[#allocation4 + $0xa8] sm:$0xff]
    %v103 = vld [vmem:[#allocation4 + $0xb0] sm:$0xff]
    %v104 = vld [vmem:[#allocation4 + $0xb8] sm:$0xff]
    %v105 = vld [vmem:[#allocation4 + $0xc0] sm:$0xff]
    %v106 = vld [vmem:[#allocation4 + $0xc8] sm:$0xff]
    %v107 = vld [vmem:[#allocation4 + $0xd0] sm:$0xff]
    %v108 = vld [vmem:[#allocation4 + $0xd8] sm:$0xff]
    %v109 = vld [vmem:[#allocation4 + $0xe0] sm:$0xff]
    %v110 = vld [vmem:[#allocation4 + $0xe8] sm:$0xff]
    %v111 = vld [vmem:[#allocation4 + $0xf0] sm:$0xff]
    %v112 = vld [vmem:[#allocation4 + $0xf8] sm:$0xff]
    %v113 = vld [vmem:[#allocation6] sm:$0xf]
    %v115 = vlaneseq
    %v116 = vshrl.u32 %v115, 7
    %v117 = vsub.s32 0, %v116
    %v118 = vrot.slane %v113, %v117
    %v119 = vlaneseq
    %v120 = vshrl.u32 %v119, 7
    %v121 = vsub.s32 1, %v120
    %v122 = vrot.slane %v113, %v121
    %v123 = vlaneseq
    %v124 = vshrl.u32 %v123, 7
    %v125 = vsub.s32 2, %v124
    %v126 = vrot.slane %v113, %v125
    %v127 = vlaneseq
    %v128 = vshrl.u32 %v127, 7
    %v129 = vsub.s32 3, %v128
    %v130 = vrot.slane %v113, %v129
    %v167 = vunpack.c.l.b16 %v81
    %v168 = vunpack.c.h.b16 %v81
    %v169 = vunpack.c.l.b16 %v82
    %v170 = vunpack.c.h.b16 %v82
    %v171 = vunpack.c.l.b16 %v83
    %v172 = vunpack.c.h.b16 %v83
    %v173 = vunpack.c.l.b16 %v84
    %v174 = vunpack.c.h.b16 %v84
    %v175 = vunpack.c.l.b16 %v85
    %v176 = vunpack.c.h.b16 %v85
    %v177 = vunpack.c.l.b16 %v86
    %v178 = vunpack.c.h.b16 %v86
    %v179 = vunpack.c.l.b16 %v87
    %v180 = vunpack.c.h.b16 %v87
    %v181 = vunpack.c.l.b16 %v88
    %v182 = vunpack.c.h.b16 %v88
    %v183 = vunpack.c.l.b16 %v89
    %v184 = vunpack.c.h.b16 %v89
    %v185 = vunpack.c.l.b16 %v90
    %v186 = vunpack.c.h.b16 %v90
    %v187 = vunpack.c.l.b16 %v91
    %v188 = vunpack.c.h.b16 %v91
    %v189 = vunpack.c.l.b16 %v92
    %v190 = vunpack.c.h.b16 %v92
    %v191 = vunpack.c.l.b16 %v93
    %v192 = vunpack.c.h.b16 %v93
    %v193 = vunpack.c.l.b16 %v94
    %v194 = vunpack.c.h.b16 %v94
    %v195 = vunpack.c.l.b16 %v95
    %v196 = vunpack.c.h.b16 %v95
    %v197 = vunpack.c.l.b16 %v96
    %v198 = vunpack.c.h.b16 %v96
    %v199 = vunpack.c.l.b16 %v97
    %v200 = vunpack.c.h.b16 %v97
    %v201 = vunpack.c.l.b16 %v98
    %v202 = vunpack.c.h.b16 %v98
    %v203 = vunpack.c.l.b16 %v99
    %v204 = vunpack.c.h.b16 %v99
    %v205 = vunpack.c.l.b16 %v100
    %v206 = vunpack.c.h.b16 %v100
    %v207 = vunpack.c.l.b16 %v101
    %v208 = vunpack.c.h.b16 %v101
    %v209 = vunpack.c.l.b16 %v102
    %v210 = vunpack.c.h.b16 %v102
    %v211 = vunpack.c.l.b16 %v103
    %v212 = vunpack.c.h.b16 %v103
    %v213 = vunpack.c.l.b16 %v104
    %v214 = vunpack.c.h.b16 %v104
    %v215 = vunpack.c.l.b16 %v105
    %v216 = vunpack.c.h.b16 %v105
    %v217 = vunpack.c.l.b16 %v106
    %v218 = vunpack.c.h.b16 %v106
    %v219 = vunpack.c.l.b16 %v107
    %v220 = vunpack.c.h.b16 %v107
    %v221 = vunpack.c.l.b16 %v108
    %v222 = vunpack.c.h.b16 %v108
    %v223 = vunpack.c.l.b16 %v109
    %v224 = vunpack.c.h.b16 %v109
    %v225 = vunpack.c.l.b16 %v110
    %v226 = vunpack.c.h.b16 %v110
    %v227 = vunpack.c.l.b16 %v111
    %v228 = vunpack.c.h.b16 %v111
    %v229 = vunpack.c.l.b16 %v112
    %v230 = vunpack.c.h.b16 %v112
    %v231 = vpack.c.b16 %v171, %v167
    %v232 = vpack.c.b16 %v172, %v168
    %v233 = vpack.c.b16 %v173, %v169
    %v234 = vpack.c.b16 %v174, %v170
    %v235 = vpack.c.b16 %v179, %v175
    %v236 = vpack.c.b16 %v180, %v176
    %v237 = vpack.c.b16 %v181, %v177
    %v238 = vpack.c.b16 %v182, %v178
    %v239 = vpack.c.b16 %v187, %v183
    %v240 = vpack.c.b16 %v188, %v184
    %v241 = vpack.c.b16 %v189, %v185
    %v242 = vpack.c.b16 %v190, %v186
    %v243 = vpack.c.b16 %v195, %v191
    %v244 = vpack.c.b16 %v196, %v192
    %v245 = vpack.c.b16 %v197, %v193
    %v246 = vpack.c.b16 %v198, %v194
    %v247 = vpack.c.b16 %v203, %v199
    %v248 = vpack.c.b16 %v204, %v200
    %v249 = vpack.c.b16 %v205, %v201
    %v250 = vpack.c.b16 %v206, %v202
    %v251 = vpack.c.b16 %v211, %v207
    %v252 = vpack.c.b16 %v212, %v208
    %v253 = vpack.c.b16 %v213, %v209
    %v254 = vpack.c.b16 %v214, %v210
    %v255 = vpack.c.b16 %v219, %v215
    %v256 = vpack.c.b16 %v220, %v216
    %v257 = vpack.c.b16 %v221, %v217
    %v258 = vpack.c.b16 %v222, %v218
    %v259 = vpack.c.b16 %v227, %v223
    %v260 = vpack.c.b16 %v228, %v224
    %v261 = vpack.c.b16 %v229, %v225
    %v262 = vpack.c.b16 %v230, %v226
    %295 = vmatprep.subr.bf16.mxu0 %v260
    %296 = vmatpush1.bf16.msra.mxu0 %v259
    %297 = vmatprep.subr.bf16.mxu0 %v256
    %298 = vmatpush1.bf16.msra.mxu0 %v255
    %299 = vmatprep.subr.bf16.mxu0 %v252
    %300 = vmatpush1.bf16.msra.mxu0 %v251
    %301 = vmatprep.subr.bf16.mxu0 %v248
    %302 = vmatpush1.bf16.msra.mxu0 %v247
    %303 = vmatprep.subr.bf16.mxu0 %v244
    %304 = vmatpush1.bf16.msra.mxu0 %v243
    %305 = vmatprep.subr.bf16.mxu0 %v240
    %306 = vmatpush1.bf16.msra.mxu0 %v239
    %307 = vmatprep.subr.bf16.mxu0 %v236
    %308 = vmatpush1.bf16.msra.mxu0 %v235
    %309 = vmatprep.subr.bf16.mxu0 %v232
    %310 = vmatpush1.bf16.msra.mxu0 %v231
    %311 = vmatprep.subr.bf16.mxu0 0
    %312 = vmatpush2.bf16.msra.mxu0 0
    %313 = vmatprep.subr.bf16.mxu0 0
    %314 = vmatpush2.bf16.msra.mxu0 0
    %315 = vmatprep.subr.bf16.mxu0 0
    %316 = vmatpush2.bf16.msra.mxu0 0
    %317 = vmatprep.subr.bf16.mxu0 0
    %318 = vmatpush2.bf16.msra.mxu0 0
    %319 = vmatprep.subr.bf16.mxu0 0
    %320 = vmatpush2.bf16.msra.mxu0 0
    %321 = vmatprep.subr.bf16.mxu0 0
    %322 = vmatpush2.bf16.msra.mxu0 0
    %323 = vmatprep.subr.bf16.mxu0 0
    %324 = vmatpush2.bf16.msra.mxu0 0
    %325 = vmatprep.subr.bf16.mxu0 0
    %326 = vmatpush2.bf16.msra.mxu0 0
    %327 = vmatprep.mubr.bf16.mxu0 0
    %328 = vmatmul.mubr.bf16.gmra.mxu0 %v80
    %v329 = vpop.f32.mrf.mxu0
    %v330 = vadd.f32 %v118, %v329
    %v331 = vpop.f32.mrf.mxu0
    %v332 = vadd.f32 %v122, %v331
    %v333 = vpop.f32.mrf.mxu0
    %v334 = vpop.f32.mrf.mxu0
    %335 = vdwg.mxu0
    %336 = vmatprep.subr.bf16.mxu0 %v262
    %337 = vmatpush1.bf16.msra.mxu0 %v261
    %338 = vmatprep.subr.bf16.mxu0 %v258
    %339 = vmatpush1.bf16.msra.mxu0 %v257
    %340 = vmatprep.subr.bf16.mxu0 %v254
    %341 = vmatpush1.bf16.msra.mxu0 %v253
    %342 = vmatprep.subr.bf16.mxu0 %v250
    %343 = vmatpush1.bf16.msra.mxu0 %v249
    %344 = vmatprep.subr.bf16.mxu0 %v246
    %345 = vmatpush1.bf16.msra.mxu0 %v245
    %346 = vmatprep.subr.bf16.mxu0 %v242
    %347 = vmatpush1.bf16.msra.mxu0 %v241
    %348 = vmatprep.subr.bf16.mxu0 %v238
    %349 = vmatpush1.bf16.msra.mxu0 %v237
    %350 = vmatprep.subr.bf16.mxu0 %v234
    %351 = vmatpush1.bf16.msra.mxu0 %v233
    %352 = vmatprep.subr.bf16.mxu0 0
    %353 = vmatpush2.bf16.msra.mxu0 0
    %354 = vmatprep.subr.bf16.mxu0 0
    %355 = vmatpush2.bf16.msra.mxu0 0
    %356 = vmatprep.subr.bf16.mxu0 0
    %357 = vmatpush2.bf16.msra.mxu0 0
    %358 = vmatprep.subr.bf16.mxu0 0
    %359 = vmatpush2.bf16.msra.mxu0 0
    %360 = vmatprep.subr.bf16.mxu0 0
    %361 = vmatpush2.bf16.msra.mxu0 0
    %362 = vmatprep.subr.bf16.mxu0 0
    %363 = vmatpush2.bf16.msra.mxu0 0
    %364 = vmatprep.subr.bf16.mxu0 0
    %365 = vmatpush2.bf16.msra.mxu0 0
    %366 = vmatprep.subr.bf16.mxu0 0
    %367 = vmatpush2.bf16.msra.mxu0 0
    %368 = vmatprep.mubr.bf16.mxu0 0
    %369 = vmatmul.mubr.bf16.gmra.mxu0 %v80
    %v370 = vpop.f32.mrf.mxu0
    %v371 = vadd.f32 %v126, %v370
    %v372 = vpop.f32.mrf.mxu0
    %v373 = vadd.f32 %v130, %v372
    %v374 = vpop.f32.mrf.mxu0
    %v375 = vpop.f32.mrf.mxu0
    %376 = vdwg.mxu0
    %v377 = vpack.c.bf16 %v330, %v330
    %v378 = vpack.c.bf16 %v332, %v332
    %v379 = vpack.c.bf16 %v371, %v371
    %v380 = vunpack.c.l.bf16 %v64
    %381 = vmatprep.subr.bf16.mxu0 0
    %382 = vmatpush1.bf16.xpose.msra.mxu0 0
    %383 = vmatprep.subr.bf16.mxu0 0
    %384 = vmatpush1.bf16.xpose.msra.mxu0 0
    %385 = vmatprep.subr.bf16.mxu0 0
    %386 = vmatpush1.bf16.xpose.msra.mxu0 0
    %387 = vmatprep.subr.bf16.mxu0 0
    %388 = vmatpush1.bf16.xpose.msra.mxu0 0
    %389 = vmatprep.subr.bf16.mxu0 0
    %390 = vmatpush1.bf16.xpose.msra.mxu0 0
    %391 = vmatprep.subr.bf16.mxu0 0
    %392 = vmatpush1.bf16.xpose.msra.mxu0 0
    %393 = vmatprep.subr.bf16.mxu0 0
    %394 = vmatpush1.bf16.xpose.msra.mxu0 0
    %395 = vmatprep.subr.bf16.mxu0 0
    %396 = vmatpush1.bf16.xpose.msra.mxu0 %v378
    %397 = vmatprep.subr.bf16.mxu0 0
    %398 = vmatpush2.bf16.xpose.msra.mxu0 0
    %399 = vmatprep.subr.bf16.mxu0 0
    %400 = vmatpush2.bf16.xpose.msra.mxu0 0
    %401 = vmatprep.subr.bf16.mxu0 0
    %402 = vmatpush2.bf16.xpose.msra.mxu0 0
    %403 = vmatprep.subr.bf16.mxu0 0
    %404 = vmatpush2.bf16.xpose.msra.mxu0 0
    %405 = vmatprep.subr.bf16.mxu0 0
    %406 = vmatpush2.bf16.xpose.msra.mxu0 0
    %407 = vmatprep.subr.bf16.mxu0 0
    %408 = vmatpush2.bf16.xpose.msra.mxu0 0
    %409 = vmatprep.subr.bf16.mxu0 0
    %410 = vmatpush2.bf16.xpose.msra.mxu0 0
    %411 = vmatprep.subr.bf16.mxu0 0
    %412 = vmatpush2.bf16.xpose.msra.mxu0 0
    %413 = vmatprep.mubr.bf16.mxu0 0
    %414 = vmatmul.mubr.bf16.gmra.mxu0 %v377
    %v415 = vpop.f32.mrf.mxu0
    %v416 = vadd.f32 %v380, %v415
    %v417 = vpop.f32.mrf.mxu0
    %v418 = vpop.f32.mrf.mxu0
    %v419 = vpop.f32.mrf.mxu0
    %420 = vdwg.mxu0
    %vm421 = vcmask 64512
    %v422 = vsel %vm421, %v416, -inf
    %423 = vmax.xlane.f32.xlu0 %v422
    %v424 = vpop.xlane.xlu0 %423
    %v425 = vsub.f32 %v416, %v424
    %v426 = vpack.c.bf16 %v425, %v425
    %v428 = vmul.bf16 %v426, 1069105081
    %v429 = vpow.bf16.pop %v428
    %v430 = vunpack.c.l.bf16 %v429
    %v431 = vsel %vm421, %v430, 0.0
    %432 = vadd.xlane.f32.xlu0 %v431
    %v433 = vpop.xlane.xlu0 %432
    %v434 = vrcp.pop %v433
    %v435 = vpack.c.bf16 %v434, %v434
    %v436 = vmul.bf16 %v429, %v435
    %v438 = vsel %vm421, %v436, 0
    %vm440 = vcmask 1043456
    %v442 = vsel %vm440, %v379, 0
    %444 = vmatprep.subr.bf16.mxu0 0
    %445 = vmatpush1.bf16.msra.mxu0 0
    %446 = vmatprep.subr.bf16.mxu0 0
    %447 = vmatpush1.bf16.msra.mxu0 0
    %448 = vmatprep.subr.bf16.mxu0 0
    %449 = vmatpush1.bf16.msra.mxu0 0
    %450 = vmatprep.subr.bf16.mxu0 0
    %451 = vmatpush1.bf16.msra.mxu0 0
    %452 = vmatprep.subr.bf16.mxu0 0
    %453 = vmatpush1.bf16.msra.mxu0 0
    %454 = vmatprep.subr.bf16.mxu0 0
    %455 = vmatpush1.bf16.msra.mxu0 0
    %456 = vmatprep.subr.bf16.mxu0 0
    %457 = vmatpush1.bf16.msra.mxu0 0
    %458 = vmatprep.subr.bf16.mxu0 0
    %459 = vmatpush1.bf16.msra.mxu0 %v442
    %460 = vmatprep.subr.bf16.mxu0 0
    %461 = vmatpush2.bf16.msra.mxu0 0
    %462 = vmatprep.subr.bf16.mxu0 0
    %463 = vmatpush2.bf16.msra.mxu0 0
    %464 = vmatprep.subr.bf16.mxu0 0
    %465 = vmatpush2.bf16.msra.mxu0 0
    %466 = vmatprep.subr.bf16.mxu0 0
    %467 = vmatpush2.bf16.msra.mxu0 0
    %468 = vmatprep.subr.bf16.mxu0 0
    %469 = vmatpush2.bf16.msra.mxu0 0
    %470 = vmatprep.subr.bf16.mxu0 0
    %471 = vmatpush2.bf16.msra.mxu0 0
    %472 = vmatprep.subr.bf16.mxu0 0
    %473 = vmatpush2.bf16.msra.mxu0 0
    %474 = vmatprep.subr.bf16.mxu0 0
    %475 = vmatpush2.bf16.msra.mxu0 0
    %476 = vmatprep.mubr.bf16.mxu0 0
    %477 = vmatmul.mubr.bf16.gmra.mxu0 %v438
    %v478 = vpop.f32.mrf.mxu0
    %v479 = vadd.f32 0.0, %v478
    %v480 = vpop.f32.mrf.mxu0
    %v481 = vpop.f32.mrf.mxu0
    %v482 = vpop.f32.mrf.mxu0
    %483 = vdwg.mxu0
    %485 = vset.pattern.permute.xlu0 0
    %486 = vperm.xlu0 %485, %v77
    %v487 = vpop.permute.xlu0 %486
    %v489 = vmul.f32 %v479, %v487
    %v490 = vadd.f32 %v489, %v373
    %vm491 = vcmp.gt.f32.partialorder %v490, 0.0
    %v492 = vmin.f32 %v490, 0.0
    %v493 = vmul.f32 %v492, 1.442695
    %v494 = vpow.pop %v493
    %v495 = vsub.f32 %v494, 1.0
    %v496 = vsel %vm491, %v490, %v495
    %v497 = vpack.c.bf16 %v496, %v496
    %s498 = scalar_lea.vmem [#allocation4], 256
    %v499 = vld [vmem:[%s498] sm:$0xff]
    %v500 = vld [vmem:[%s498 + $0x8] sm:$0xff]
    %v501 = vld [vmem:[%s498 + $0x10] sm:$0xff]
    %v502 = vld [vmem:[%s498 + $0x18] sm:$0xff]
    %v503 = vld [vmem:[%s498 + $0x20] sm:$0xff]
    %v504 = vld [vmem:[%s498 + $0x28] sm:$0xff]
    %v505 = vld [vmem:[%s498 + $0x30] sm:$0xff]
    %v506 = vld [vmem:[%s498 + $0x38] sm:$0xff]
    %v507 = vld [vmem:[%s498 + $0x40] sm:$0xff]
    %v508 = vld [vmem:[%s498 + $0x48] sm:$0xff]
    %v509 = vld [vmem:[%s498 + $0x50] sm:$0xff]
    %v510 = vld [vmem:[%s498 + $0x58] sm:$0xff]
    %v511 = vld [vmem:[%s498 + $0x60] sm:$0xff]
    %v512 = vld [vmem:[%s498 + $0x68] sm:$0xff]
    %v513 = vld [vmem:[%s498 + $0x70] sm:$0xff]
    %v514 = vld [vmem:[%s498 + $0x78] sm:$0xff]
    %v515 = vld [vmem:[%s498 + $0x80] sm:$0xff]
    %v516 = vld [vmem:[%s498 + $0x88] sm:$0xff]
    %v517 = vld [vmem:[%s498 + $0x90] sm:$0xff]
    %v518 = vld [vmem:[%s498 + $0x98] sm:$0xff]
    %v519 = vld [vmem:[%s498 + $0xa0] sm:$0xff]
    %v520 = vld [vmem:[%s498 + $0xa8] sm:$0xff]
    %v521 = vld [vmem:[%s498 + $0xb0] sm:$0xff]
    %v522 = vld [vmem:[%s498 + $0xb8] sm:$0xff]
    %v523 = vld [vmem:[%s498 + $0xc0] sm:$0xff]
    %v524 = vld [vmem:[%s498 + $0xc8] sm:$0xff]
    %v525 = vld [vmem:[%s498 + $0xd0] sm:$0xff]
    %v526 = vld [vmem:[%s498 + $0xd8] sm:$0xff]
    %v527 = vld [vmem:[%s498 + $0xe0] sm:$0xff]
    %v528 = vld [vmem:[%s498 + $0xe8] sm:$0xff]
    %v529 = vld [vmem:[%s498 + $0xf0] sm:$0xff]
    %v530 = vld [vmem:[%s498 + $0xf8] sm:$0xff]
    %s531 = scalar_lea.vmem [#allocation6], 4
    %v532 = vld [vmem:[%s531] sm:$0xf]
    %v534 = vlaneseq
    %v535 = vshrl.u32 %v534, 7
    %v536 = vsub.s32 0, %v535
    %v537 = vrot.slane %v532, %v536
    %v538 = vlaneseq
    %v539 = vshrl.u32 %v538, 7
    %v540 = vsub.s32 1, %v539
    %v541 = vrot.slane %v532, %v540
    %v542 = vlaneseq
    %v543 = vshrl.u32 %v542, 7
    %v544 = vsub.s32 2, %v543
    %v545 = vrot.slane %v532, %v544
    %v546 = vlaneseq
    %v547 = vshrl.u32 %v546, 7
    %v548 = vsub.s32 3, %v547
    %v549 = vrot.slane %v532, %v548
    %v586 = vunpack.c.l.b16 %v499
    %v587 = vunpack.c.h.b16 %v499
    %v588 = vunpack.c.l.b16 %v500
    %v589 = vunpack.c.h.b16 %v500
    %v590 = vunpack.c.l.b16 %v501
    %v591 = vunpack.c.h.b16 %v501
    %v592 = vunpack.c.l.b16 %v502
    %v593 = vunpack.c.h.b16 %v502
    %v594 = vunpack.c.l.b16 %v503
    %v595 = vunpack.c.h.b16 %v503
    %v596 = vunpack.c.l.b16 %v504
    %v597 = vunpack.c.h.b16 %v504
    %v598 = vunpack.c.l.b16 %v505
    %v599 = vunpack.c.h.b16 %v505
    %v600 = vunpack.c.l.b16 %v506
    %v601 = vunpack.c.h.b16 %v506
    %v602 = vunpack.c.l.b16 %v507
    %v603 = vunpack.c.h.b16 %v507
    %v604 = vunpack.c.l.b16 %v508
    %v605 = vunpack.c.h.b16 %v508
    %v606 = vunpack.c.l.b16 %v509
    %v607 = vunpack.c.h.b16 %v509
    %v608 = vunpack.c.l.b16 %v510
    %v609 = vunpack.c.h.b16 %v510
    %v610 = vunpack.c.l.b16 %v511
    %v611 = vunpack.c.h.b16 %v511
    %v612 = vunpack.c.l.b16 %v512
    %v613 = vunpack.c.h.b16 %v512
    %v614 = vunpack.c.l.b16 %v513
    %v615 = vunpack.c.h.b16 %v513
    %v616 = vunpack.c.l.b16 %v514
    %v617 = vunpack.c.h.b16 %v514
    %v618 = vunpack.c.l.b16 %v515
    %v619 = vunpack.c.h.b16 %v515
    %v620 = vunpack.c.l.b16 %v516
    %v621 = vunpack.c.h.b16 %v516
    %v622 = vunpack.c.l.b16 %v517
    %v623 = vunpack.c.h.b16 %v517
    %v624 = vunpack.c.l.b16 %v518
    %v625 = vunpack.c.h.b16 %v518
    %v626 = vunpack.c.l.b16 %v519
    %v627 = vunpack.c.h.b16 %v519
    %v628 = vunpack.c.l.b16 %v520
    %v629 = vunpack.c.h.b16 %v520
    %v630 = vunpack.c.l.b16 %v521
    %v631 = vunpack.c.h.b16 %v521
    %v632 = vunpack.c.l.b16 %v522
    %v633 = vunpack.c.h.b16 %v522
    %v634 = vunpack.c.l.b16 %v523
    %v635 = vunpack.c.h.b16 %v523
    %v636 = vunpack.c.l.b16 %v524
    %v637 = vunpack.c.h.b16 %v524
    %v638 = vunpack.c.l.b16 %v525
    %v639 = vunpack.c.h.b16 %v525
    %v640 = vunpack.c.l.b16 %v526
    %v641 = vunpack.c.h.b16 %v526
    %v642 = vunpack.c.l.b16 %v527
    %v643 = vunpack.c.h.b16 %v527
    %v644 = vunpack.c.l.b16 %v528
    %v645 = vunpack.c.h.b16 %v528
    %v646 = vunpack.c.l.b16 %v529
    %v647 = vunpack.c.h.b16 %v529
    %v648 = vunpack.c.l.b16 %v530
    %v649 = vunpack.c.h.b16 %v530
    %v650 = vpack.c.b16 %v590, %v586
    %v651 = vpack.c.b16 %v591, %v587
    %v652 = vpack.c.b16 %v592, %v588
    %v653 = vpack.c.b16 %v593, %v589
    %v654 = vpack.c.b16 %v598, %v594
    %v655 = vpack.c.b16 %v599, %v595
    %v656 = vpack.c.b16 %v600, %v596
    %v657 = vpack.c.b16 %v601, %v597
    %v658 = vpack.c.b16 %v606, %v602
    %v659 = vpack.c.b16 %v607, %v603
    %v660 = vpack.c.b16 %v608, %v604
    %v661 = vpack.c.b16 %v609, %v605
    %v662 = vpack.c.b16 %v614, %v610
    %v663 = vpack.c.b16 %v615, %v611
    %v664 = vpack.c.b16 %v616, %v612
    %v665 = vpack.c.b16 %v617, %v613
    %v666 = vpack.c.b16 %v622, %v618
    %v667 = vpack.c.b16 %v623, %v619
    %v668 = vpack.c.b16 %v624, %v620
    %v669 = vpack.c.b16 %v625, %v621
    %v670 = vpack.c.b16 %v630, %v626
    %v671 = vpack.c.b16 %v631, %v627
    %v672 = vpack.c.b16 %v632, %v628
    %v673 = vpack.c.b16 %v633, %v629
    %v674 = vpack.c.b16 %v638, %v634
    %v675 = vpack.c.b16 %v639, %v635
    %v676 = vpack.c.b16 %v640, %v636
    %v677 = vpack.c.b16 %v641, %v637
    %v678 = vpack.c.b16 %v646, %v642
    %v679 = vpack.c.b16 %v647, %v643
    %v680 = vpack.c.b16 %v648, %v644
    %v681 = vpack.c.b16 %v649, %v645
    %714 = vmatprep.subr.bf16.mxu0 %v679
    %715 = vmatpush1.bf16.msra.mxu0 %v678
    %716 = vmatprep.subr.bf16.mxu0 %v675
    %717 = vmatpush1.bf16.msra.mxu0 %v674
    %718 = vmatprep.subr.bf16.mxu0 %v671
    %719 = vmatpush1.bf16.msra.mxu0 %v670
    %720 = vmatprep.subr.bf16.mxu0 %v667
    %721 = vmatpush1.bf16.msra.mxu0 %v666
    %722 = vmatprep.subr.bf16.mxu0 %v663
    %723 = vmatpush1.bf16.msra.mxu0 %v662
    %724 = vmatprep.subr.bf16.mxu0 %v659
    %725 = vmatpush1.bf16.msra.mxu0 %v658
    %726 = vmatprep.subr.bf16.mxu0 %v655
    %727 = vmatpush1.bf16.msra.mxu0 %v654
    %728 = vmatprep.subr.bf16.mxu0 %v651
    %729 = vmatpush1.bf16.msra.mxu0 %v650
    %730 = vmatprep.subr.bf16.mxu0 0
    %731 = vmatpush2.bf16.msra.mxu0 0
    %732 = vmatprep.subr.bf16.mxu0 0
    %733 = vmatpush2.bf16.msra.mxu0 0
    %734 = vmatprep.subr.bf16.mxu0 0
    %735 = vmatpush2.bf16.msra.mxu0 0
    %736 = vmatprep.subr.bf16.mxu0 0
    %737 = vmatpush2.bf16.msra.mxu0 0
    %738 = vmatprep.subr.bf16.mxu0 0
    %739 = vmatpush2.bf16.msra.mxu0 0
    %740 = vmatprep.subr.bf16.mxu0 0
    %741 = vmatpush2.bf16.msra.mxu0 0
    %742 = vmatprep.subr.bf16.mxu0 0
    %743 = vmatpush2.bf16.msra.mxu0 0
    %744 = vmatprep.subr.bf16.mxu0 0
    %745 = vmatpush2.bf16.msra.mxu0 0
    %746 = vmatprep.mubr.bf16.mxu0 0
    %747 = vmatmul.mubr.bf16.gmra.mxu0 %v497
    %v748 = vpop.f32.mrf.mxu0
    %v749 = vadd.f32 %v537, %v748
    %v750 = vpop.f32.mrf.mxu0
    %v751 = vadd.f32 %v541, %v750
    %v752 = vpop.f32.mrf.mxu0
    %v753 = vpop.f32.mrf.mxu0
    %754 = vdwg.mxu0
    %755 = vmatprep.subr.bf16.mxu0 %v681
    %756 = vmatpush1.bf16.msra.mxu0 %v680
    %757 = vmatprep.subr.bf16.mxu0 %v677
    %758 = vmatpush1.bf16.msra.mxu0 %v676
    %759 = vmatprep.subr.bf16.mxu0 %v673
    %760 = vmatpush1.bf16.msra.mxu0 %v672
    %761 = vmatprep.subr.bf16.mxu0 %v669
    %762 = vmatpush1.bf16.msra.mxu0 %v668
    %763 = vmatprep.subr.bf16.mxu0 %v665
    %764 = vmatpush1.bf16.msra.mxu0 %v664
    %765 = vmatprep.subr.bf16.mxu0 %v661
    %766 = vmatpush1.bf16.msra.mxu0 %v660
    %767 = vmatprep.subr.bf16.mxu0 %v657
    %768 = vmatpush1.bf16.msra.mxu0 %v656
    %769 = vmatprep.subr.bf16.mxu0 %v653
    %770 = vmatpush1.bf16.msra.mxu0 %v652
    %771 = vmatprep.subr.bf16.mxu0 0
    %772 = vmatpush2.bf16.msra.mxu0 0
    %773 = vmatprep.subr.bf16.mxu0 0
    %774 = vmatpush2.bf16.msra.mxu0 0
    %775 = vmatprep.subr.bf16.mxu0 0
    %776 = vmatpush2.bf16.msra.mxu0 0
    %777 = vmatprep.subr.bf16.mxu0 0
    %778 = vmatpush2.bf16.msra.mxu0 0
    %779 = vmatprep.subr.bf16.mxu0 0
    %780 = vmatpush2.bf16.msra.mxu0 0
    %781 = vmatprep.subr.bf16.mxu0 0
    %782 = vmatpush2.bf16.msra.mxu0 0
    %783 = vmatprep.subr.bf16.mxu0 0
    %784 = vmatpush2.bf16.msra.mxu0 0
    %785 = vmatprep.subr.bf16.mxu0 0
    %786 = vmatpush2.bf16.msra.mxu0 0
    %787 = vmatprep.mubr.bf16.mxu0 0
    %788 = vmatmul.mubr.bf16.gmra.mxu0 %v497
    %v789 = vpop.f32.mrf.mxu0
    %v790 = vadd.f32 %v545, %v789
    %v791 = vpop.f32.mrf.mxu0
    %v792 = vadd.f32 %v549, %v791
    %v793 = vpop.f32.mrf.mxu0
    %v794 = vpop.f32.mrf.mxu0
    %795 = vdwg.mxu0
    %v796 = vpack.c.bf16 %v749, %v749
    %v797 = vpack.c.bf16 %v751, %v751
    %v798 = vpack.c.bf16 %v790, %v790
    %799 = vmatprep.subr.bf16.mxu0 0
    %800 = vmatpush1.bf16.xpose.msra.mxu0 0
    %801 = vmatprep.subr.bf16.mxu0 0
    %802 = vmatpush1.bf16.xpose.msra.mxu0 0
    %803 = vmatprep.subr.bf16.mxu0 0
    %804 = vmatpush1.bf16.xpose.msra.mxu0 0
    %805 = vmatprep.subr.bf16.mxu0 0
    %806 = vmatpush1.bf16.xpose.msra.mxu0 0
    %807 = vmatprep.subr.bf16.mxu0 0
    %808 = vmatpush1.bf16.xpose.msra.mxu0 0
    %809 = vmatprep.subr.bf16.mxu0 0
    %810 = vmatpush1.bf16.xpose.msra.mxu0 0
    %811 = vmatprep.subr.bf16.mxu0 0
    %812 = vmatpush1.bf16.xpose.msra.mxu0 0
    %813 = vmatprep.subr.bf16.mxu0 0
    %814 = vmatpush1.bf16.xpose.msra.mxu0 %v797
    %815 = vmatprep.subr.bf16.mxu0 0
    %816 = vmatpush2.bf16.xpose.msra.mxu0 0
    %817 = vmatprep.subr.bf16.mxu0 0
    %818 = vmatpush2.bf16.xpose.msra.mxu0 0
    %819 = vmatprep.subr.bf16.mxu0 0
    %820 = vmatpush2.bf16.xpose.msra.mxu0 0
    %821 = vmatprep.subr.bf16.mxu0 0
    %822 = vmatpush2.bf16.xpose.msra.mxu0 0
    %823 = vmatprep.subr.bf16.mxu0 0
    %824 = vmatpush2.bf16.xpose.msra.mxu0 0
    %825 = vmatprep.subr.bf16.mxu0 0
    %826 = vmatpush2.bf16.xpose.msra.mxu0 0
    %827 = vmatprep.subr.bf16.mxu0 0
    %828 = vmatpush2.bf16.xpose.msra.mxu0 0
    %829 = vmatprep.subr.bf16.mxu0 0
    %830 = vmatpush2.bf16.xpose.msra.mxu0 0
    %831 = vmatprep.mubr.bf16.mxu0 0
    %832 = vmatmul.mubr.bf16.gmra.mxu0 %v796
    %v833 = vpop.f32.mrf.mxu0
    %v834 = vadd.f32 %v380, %v833
    %v835 = vpop.f32.mrf.mxu0
    %v836 = vpop.f32.mrf.mxu0
    %v837 = vpop.f32.mrf.mxu0
    %838 = vdwg.mxu0
    %v839 = vsel %vm421, %v834, -inf
    %840 = vmax.xlane.f32.xlu0 %v839
    %v841 = vpop.xlane.xlu0 %840
    %v842 = vsub.f32 %v834, %v841
    %v843 = vpack.c.bf16 %v842, %v842
    %v845 = vmul.bf16 %v843, 1069105081
    %v846 = vpow.bf16.pop %v845
    %v847 = vunpack.c.l.bf16 %v846
    %v848 = vsel %vm421, %v847, 0.0
    %849 = vadd.xlane.f32.xlu0 %v848
    %v850 = vpop.xlane.xlu0 %849
    %v851 = vrcp.pop %v850
    %v852 = vpack.c.bf16 %v851, %v851
    %v853 = vmul.bf16 %v846, %v852
    %v855 = vsel %vm421, %v853, 0
    %v858 = vsel %vm440, %v798, 0
    %860 = vmatprep.subr.bf16.mxu0 0
    %861 = vmatpush1.bf16.msra.mxu0 0
    %862 = vmatprep.subr.bf16.mxu0 0
    %863 = vmatpush1.bf16.msra.mxu0 0
    %864 = vmatprep.subr.bf16.mxu0 0
    %865 = vmatpush1.bf16.msra.mxu0 0
    %866 = vmatprep.subr.bf16.mxu0 0
    %867 = vmatpush1.bf16.msra.mxu0 0
    %868 = vmatprep.subr.bf16.mxu0 0
    %869 = vmatpush1.bf16.msra.mxu0 0
    %870 = vmatprep.subr.bf16.mxu0 0
    %871 = vmatpush1.bf16.msra.mxu0 0
    %872 = vmatprep.subr.bf16.mxu0 0
    %873 = vmatpush1.bf16.msra.mxu0 0
    %874 = vmatprep.subr.bf16.mxu0 0
    %875 = vmatpush1.bf16.msra.mxu0 %v858
    %876 = vmatprep.subr.bf16.mxu0 0
    %877 = vmatpush2.bf16.msra.mxu0 0
    %878 = vmatprep.subr.bf16.mxu0 0
    %879 = vmatpush2.bf16.msra.mxu0 0
    %880 = vmatprep.subr.bf16.mxu0 0
    %881 = vmatpush2.bf16.msra.mxu0 0
    %882 = vmatprep.subr.bf16.mxu0 0
    %883 = vmatpush2.bf16.msra.mxu0 0
    %884 = vmatprep.subr.bf16.mxu0 0
    %885 = vmatpush2.bf16.msra.mxu0 0
    %886 = vmatprep.subr.bf16.mxu0 0
    %887 = vmatpush2.bf16.msra.mxu0 0
    %888 = vmatprep.subr.bf16.mxu0 0
    %889 = vmatpush2.bf16.msra.mxu0 0
    %890 = vmatprep.subr.bf16.mxu0 0
    %891 = vmatpush2.bf16.msra.mxu0 0
    %892 = vmatprep.mubr.bf16.mxu0 0
    %893 = vmatmul.mubr.bf16.gmra.mxu0 %v855
    %v894 = vpop.f32.mrf.mxu0
    %v895 = vadd.f32 0.0, %v894
    %v896 = vpop.f32.mrf.mxu0
    %v897 = vpop.f32.mrf.mxu0
    %v898 = vpop.f32.mrf.mxu0
    %899 = vdwg.mxu0
    %v900 = vmul.f32 %v895, %v487
    %v901 = vadd.f32 %v900, %v792
    %v902 = vpack.c.bf16 %v901, %v901
    %s903 = scalar_lea.vmem [#allocation4], 512
    %v904 = vld [vmem:[%s903] sm:$0xff]
    %v905 = vld [vmem:[%s903 + $0x8] sm:$0xff]
    %v906 = vld [vmem:[%s903 + $0x10] sm:$0xff]
    %v907 = vld [vmem:[%s903 + $0x18] sm:$0xff]
    %v908 = vld [vmem:[%s903 + $0x20] sm:$0xff]
    %v909 = vld [vmem:[%s903 + $0x28] sm:$0xff]
    %v910 = vld [vmem:[%s903 + $0x30] sm:$0xff]
    %v911 = vld [vmem:[%s903 + $0x38] sm:$0xff]
    %v912 = vld [vmem:[%s903 + $0x40] sm:$0xff]
    %v913 = vld [vmem:[%s903 + $0x48] sm:$0xff]
    %v914 = vld [vmem:[%s903 + $0x50] sm:$0xff]
    %v915 = vld [vmem:[%s903 + $0x58] sm:$0xff]
    %v916 = vld [vmem:[%s903 + $0x60] sm:$0xff]
    %v917 = vld [vmem:[%s903 + $0x68] sm:$0xff]
    %v918 = vld [vmem:[%s903 + $0x70] sm:$0xff]
    %v919 = vld [vmem:[%s903 + $0x78] sm:$0xff]
    %v920 = vld [vmem:[%s903 + $0x80] sm:$0xff]
    %v921 = vld [vmem:[%s903 + $0x88] sm:$0xff]
    %v922 = vld [vmem:[%s903 + $0x90] sm:$0xff]
    %v923 = vld [vmem:[%s903 + $0x98] sm:$0xff]
    %v924 = vld [vmem:[%s903 + $0xa0] sm:$0xff]
    %v925 = vld [vmem:[%s903 + $0xa8] sm:$0xff]
    %v926 = vld [vmem:[%s903 + $0xb0] sm:$0xff]
    %v927 = vld [vmem:[%s903 + $0xb8] sm:$0xff]
    %v928 = vld [vmem:[%s903 + $0xc0] sm:$0xff]
    %v929 = vld [vmem:[%s903 + $0xc8] sm:$0xff]
    %v930 = vld [vmem:[%s903 + $0xd0] sm:$0xff]
    %v931 = vld [vmem:[%s903 + $0xd8] sm:$0xff]
    %v932 = vld [vmem:[%s903 + $0xe0] sm:$0xff]
    %v933 = vld [vmem:[%s903 + $0xe8] sm:$0xff]
    %v934 = vld [vmem:[%s903 + $0xf0] sm:$0xff]
    %v935 = vld [vmem:[%s903 + $0xf8] sm:$0xff]
    %s936 = scalar_lea.vmem [#allocation6], 8
    %v937 = vld [vmem:[%s936] sm:$0xf]
    %v939 = vlaneseq
    %v940 = vshrl.u32 %v939, 7
    %v941 = vsub.s32 0, %v940
    %v942 = vrot.slane %v937, %v941
    %v943 = vlaneseq
    %v944 = vshrl.u32 %v943, 7
    %v945 = vsub.s32 1, %v944
    %v946 = vrot.slane %v937, %v945
    %v947 = vlaneseq
    %v948 = vshrl.u32 %v947, 7
    %v949 = vsub.s32 2, %v948
    %v950 = vrot.slane %v937, %v949
    %v951 = vlaneseq
    %v952 = vshrl.u32 %v951, 7
    %v953 = vsub.s32 3, %v952
    %v954 = vrot.slane %v937, %v953
    %v991 = vunpack.c.l.b16 %v904
    %v992 = vunpack.c.h.b16 %v904
    %v993 = vunpack.c.l.b16 %v905
    %v994 = vunpack.c.h.b16 %v905
    %v995 = vunpack.c.l.b16 %v906
    %v996 = vunpack.c.h.b16 %v906
    %v997 = vunpack.c.l.b16 %v907
    %v998 = vunpack.c.h.b16 %v907
    %v999 = vunpack.c.l.b16 %v908
    %v1000 = vunpack.c.h.b16 %v908
    %v1001 = vunpack.c.l.b16 %v909
    %v1002 = vunpack.c.h.b16 %v909
    %v1003 = vunpack.c.l.b16 %v910
    %v1004 = vunpack.c.h.b16 %v910
    %v1005 = vunpack.c.l.b16 %v911
    %v1006 = vunpack.c.h.b16 %v911
    %v1007 = vunpack.c.l.b16 %v912
    %v1008 = vunpack.c.h.b16 %v912
    %v1009 = vunpack.c.l.b16 %v913
    %v1010 = vunpack.c.h.b16 %v913
    %v1011 = vunpack.c.l.b16 %v914
    %v1012 = vunpack.c.h.b16 %v914
    %v1013 = vunpack.c.l.b16 %v915
    %v1014 = vunpack.c.h.b16 %v915
    %v1015 = vunpack.c.l.b16 %v916
    %v1016 = vunpack.c.h.b16 %v916
    %v1017 = vunpack.c.l.b16 %v917
    %v1018 = vunpack.c.h.b16 %v917
    %v1019 = vunpack.c.l.b16 %v918
    %v1020 = vunpack.c.h.b16 %v918
    %v1021 = vunpack.c.l.b16 %v919
    %v1022 = vunpack.c.h.b16 %v919
    %v1023 = vunpack.c.l.b16 %v920
    %v1024 = vunpack.c.h.b16 %v920
    %v1025 = vunpack.c.l.b16 %v921
    %v1026 = vunpack.c.h.b16 %v921
    %v1027 = vunpack.c.l.b16 %v922
    %v1028 = vunpack.c.h.b16 %v922
    %v1029 = vunpack.c.l.b16 %v923
    %v1030 = vunpack.c.h.b16 %v923
    %v1031 = vunpack.c.l.b16 %v924
    %v1032 = vunpack.c.h.b16 %v924
    %v1033 = vunpack.c.l.b16 %v925
    %v1034 = vunpack.c.h.b16 %v925
    %v1035 = vunpack.c.l.b16 %v926
    %v1036 = vunpack.c.h.b16 %v926
    %v1037 = vunpack.c.l.b16 %v927
    %v1038 = vunpack.c.h.b16 %v927
    %v1039 = vunpack.c.l.b16 %v928
    %v1040 = vunpack.c.h.b16 %v928
    %v1041 = vunpack.c.l.b16 %v929
    %v1042 = vunpack.c.h.b16 %v929
    %v1043 = vunpack.c.l.b16 %v930
    %v1044 = vunpack.c.h.b16 %v930
    %v1045 = vunpack.c.l.b16 %v931
    %v1046 = vunpack.c.h.b16 %v931
    %v1047 = vunpack.c.l.b16 %v932
    %v1048 = vunpack.c.h.b16 %v932
    %v1049 = vunpack.c.l.b16 %v933
    %v1050 = vunpack.c.h.b16 %v933
    %v1051 = vunpack.c.l.b16 %v934
    %v1052 = vunpack.c.h.b16 %v934
    %v1053 = vunpack.c.l.b16 %v935
    %v1054 = vunpack.c.h.b16 %v935
    %v1055 = vpack.c.b16 %v995, %v991
    %v1056 = vpack.c.b16 %v996, %v992
    %v1057 = vpack.c.b16 %v997, %v993
    %v1058 = vpack.c.b16 %v998, %v994
    %v1059 = vpack.c.b16 %v1003, %v999
    %v1060 = vpack.c.b16 %v1004, %v1000
    %v1061 = vpack.c.b16 %v1005, %v1001
    %v1062 = vpack.c.b16 %v1006, %v1002
    %v1063 = vpack.c.b16 %v1011, %v1007
    %v1064 = vpack.c.b16 %v1012, %v1008
    %v1065 = vpack.c.b16 %v1013, %v1009
    %v1066 = vpack.c.b16 %v1014, %v1010
    %v1067 = vpack.c.b16 %v1019, %v1015
    %v1068 = vpack.c.b16 %v1020, %v1016
    %v1069 = vpack.c.b16 %v1021, %v1017
    %v1070 = vpack.c.b16 %v1022, %v1018
    %v1071 = vpack.c.b16 %v1027, %v1023
    %v1072 = vpack.c.b16 %v1028, %v1024
    %v1073 = vpack.c.b16 %v1029, %v1025
    %v1074 = vpack.c.b16 %v1030, %v1026
    %v1075 = vpack.c.b16 %v1035, %v1031
    %v1076 = vpack.c.b16 %v1036, %v1032
    %v1077 = vpack.c.b16 %v1037, %v1033
    %v1078 = vpack.c.b16 %v1038, %v1034
    %v1079 = vpack.c.b16 %v1043, %v1039
    %v1080 = vpack.c.b16 %v1044, %v1040
    %v1081 = vpack.c.b16 %v1045, %v1041
    %v1082 = vpack.c.b16 %v1046, %v1042
    %v1083 = vpack.c.b16 %v1051, %v1047
    %v1084 = vpack.c.b16 %v1052, %v1048
    %v1085 = vpack.c.b16 %v1053, %v1049
    %v1086 = vpack.c.b16 %v1054, %v1050
    %1119 = vmatprep.subr.bf16.mxu0 %v1084
    %1120 = vmatpush1.bf16.msra.mxu0 %v1083
    %1121 = vmatprep.subr.bf16.mxu0 %v1080
    %1122 = vmatpush1.bf16.msra.mxu0 %v1079
    %1123 = vmatprep.subr.bf16.mxu0 %v1076
    %1124 = vmatpush1.bf16.msra.mxu0 %v1075
    %1125 = vmatprep.subr.bf16.mxu0 %v1072
    %1126 = vmatpush1.bf16.msra.mxu0 %v1071
    %1127 = vmatprep.subr.bf16.mxu0 %v1068
    %1128 = vmatpush1.bf16.msra.mxu0 %v1067
    %1129 = vmatprep.subr.bf16.mxu0 %v1064
    %1130 = vmatpush1.bf16.msra.mxu0 %v1063
    %1131 = vmatprep.subr.bf16.mxu0 %v1060
    %1132 = vmatpush1.bf16.msra.mxu0 %v1059
    %1133 = vmatprep.subr.bf16.mxu0 %v1056
    %1134 = vmatpush1.bf16.msra.mxu0 %v1055
    %1135 = vmatprep.subr.bf16.mxu0 0
    %1136 = vmatpush2.bf16.msra.mxu0 0
    %1137 = vmatprep.subr.bf16.mxu0 0
    %1138 = vmatpush2.bf16.msra.mxu0 0
    %1139 = vmatprep.subr.bf16.mxu0 0
    %1140 = vmatpush2.bf16.msra.mxu0 0
    %1141 = vmatprep.subr.bf16.mxu0 0
    %1142 = vmatpush2.bf16.msra.mxu0 0
    %1143 = vmatprep.subr.bf16.mxu0 0
    %1144 = vmatpush2.bf16.msra.mxu0 0
    %1145 = vmatprep.subr.bf16.mxu0 0
    %1146 = vmatpush2.bf16.msra.mxu0 0
    %1147 = vmatprep.subr.bf16.mxu0 0
    %1148 = vmatpush2.bf16.msra.mxu0 0
    %1149 = vmatprep.subr.bf16.mxu0 0
    %1150 = vmatpush2.bf16.msra.mxu0 0
    %1151 = vmatprep.mubr.bf16.mxu0 0
    %1152 = vmatmul.mubr.bf16.gmra.mxu0 %v902
    %v1153 = vpop.f32.mrf.mxu0
    %v1154 = vadd.f32 %v942, %v1153
    %v1155 = vpop.f32.mrf.mxu0
    %v1156 = vadd.f32 %v946, %v1155
    %v1157 = vpop.f32.mrf.mxu0
    %v1158 = vpop.f32.mrf.mxu0
    %1159 = vdwg.mxu0
    %1160 = vmatprep.subr.bf16.mxu0 %v1086
    %1161 = vmatpush1.bf16.msra.mxu0 %v1085
    %1162 = vmatprep.subr.bf16.mxu0 %v1082
    %1163 = vmatpush1.bf16.msra.mxu0 %v1081
    %1164 = vmatprep.subr.bf16.mxu0 %v1078
    %1165 = vmatpush1.bf16.msra.mxu0 %v1077
    %1166 = vmatprep.subr.bf16.mxu0 %v1074
    %1167 = vmatpush1.bf16.msra.mxu0 %v1073
    %1168 = vmatprep.subr.bf16.mxu0 %v1070
    %1169 = vmatpush1.bf16.msra.mxu0 %v1069
    %1170 = vmatprep.subr.bf16.mxu0 %v1066
    %1171 = vmatpush1.bf16.msra.mxu0 %v1065
    %1172 = vmatprep.subr.bf16.mxu0 %v1062
    %1173 = vmatpush1.bf16.msra.mxu0 %v1061
    %1174 = vmatprep.subr.bf16.mxu0 %v1058
    %1175 = vmatpush1.bf16.msra.mxu0 %v1057
    %1176 = vmatprep.subr.bf16.mxu0 0
    %1177 = vmatpush2.bf16.msra.mxu0 0
    %1178 = vmatprep.subr.bf16.mxu0 0
    %1179 = vmatpush2.bf16.msra.mxu0 0
    %1180 = vmatprep.subr.bf16.mxu0 0
    %1181 = vmatpush2.bf16.msra.mxu0 0
    %1182 = vmatprep.subr.bf16.mxu0 0
    %1183 = vmatpush2.bf16.msra.mxu0 0
    %1184 = vmatprep.subr.bf16.mxu0 0
    %1185 = vmatpush2.bf16.msra.mxu0 0
    %1186 = vmatprep.subr.bf16.mxu0 0
    %1187 = vmatpush2.bf16.msra.mxu0 0
    %1188 = vmatprep.subr.bf16.mxu0 0
    %1189 = vmatpush2.bf16.msra.mxu0 0
    %1190 = vmatprep.subr.bf16.mxu0 0
    %1191 = vmatpush2.bf16.msra.mxu0 0
    %1192 = vmatprep.mubr.bf16.mxu0 0
    %1193 = vmatmul.mubr.bf16.gmra.mxu0 %v902
    %v1194 = vpop.f32.mrf.mxu0
    %v1195 = vadd.f32 %v950, %v1194
    %v1196 = vpop.f32.mrf.mxu0
    %v1197 = vadd.f32 %v954, %v1196
    %v1198 = vpop.f32.mrf.mxu0
    %v1199 = vpop.f32.mrf.mxu0
    %1200 = vdwg.mxu0
    %v1201 = vpack.c.bf16 %v1154, %v1154
    %v1202 = vpack.c.bf16 %v1156, %v1156
    %v1203 = vpack.c.bf16 %v1195, %v1195
    %1204 = vmatprep.subr.bf16.mxu0 0
    %1205 = vmatpush1.bf16.xpose.msra.mxu0 0
    %1206 = vmatprep.subr.bf16.mxu0 0
    %1207 = vmatpush1.bf16.xpose.msra.mxu0 0
    %1208 = vmatprep.subr.bf16.mxu0 0
    %1209 = vmatpush1.bf16.xpose.msra.mxu0 0
    %1210 = vmatprep.subr.bf16.mxu0 0
    %1211 = vmatpush1.bf16.xpose.msra.mxu0 0
    %1212 = vmatprep.subr.bf16.mxu0 0
    %1213 = vmatpush1.bf16.xpose.msra.mxu0 0
    %1214 = vmatprep.subr.bf16.mxu0 0
    %1215 = vmatpush1.bf16.xpose.msra.mxu0 0
    %1216 = vmatprep.subr.bf16.mxu0 0
    %1217 = vmatpush1.bf16.xpose.msra.mxu0 0
    %1218 = vmatprep.subr.bf16.mxu0 0
    %1219 = vmatpush1.bf16.xpose.msra.mxu0 %v1202
    %1220 = vmatprep.subr.bf16.mxu0 0
    %1221 = vmatpush2.bf16.xpose.msra.mxu0 0
    %1222 = vmatprep.subr.bf16.mxu0 0
    %1223 = vmatpush2.bf16.xpose.msra.mxu0 0
    %1224 = vmatprep.subr.bf16.mxu0 0
    %1225 = vmatpush2.bf16.xpose.msra.mxu0 0
    %1226 = vmatprep.subr.bf16.mxu0 0
    %1227 = vmatpush2.bf16.xpose.msra.mxu0 0
    %1228 = vmatprep.subr.bf16.mxu0 0
    %1229 = vmatpush2.bf16.xpose.msra.mxu0 0
    %1230 = vmatprep.subr.bf16.mxu0 0
    %1231 = vmatpush2.bf16.xpose.msra.mxu0 0
    %1232 = vmatprep.subr.bf16.mxu0 0
    %1233 = vmatpush2.bf16.xpose.msra.mxu0 0
    %1234 = vmatprep.subr.bf16.mxu0 0
    %1235 = vmatpush2.bf16.xpose.msra.mxu0 0
    %1236 = vmatprep.mubr.bf16.mxu0 0
    %1237 = vmatmul.mubr.bf16.gmra.mxu0 %v1201
    %v1238 = vpop.f32.mrf.mxu0
    %v1239 = vadd.f32 %v380, %v1238
    %v1240 = vpop.f32.mrf.mxu0
    %v1241 = vpop.f32.mrf.mxu0
    %v1242 = vpop.f32.mrf.mxu0
    %1243 = vdwg.mxu0
    %v1244 = vsel %vm421, %v1239, -inf
    %1245 = vmax.xlane.f32.xlu0 %v1244
    %v1246 = vpop.xlane.xlu0 %1245
    %v1247 = vsub.f32 %v1239, %v1246
    %v1248 = vpack.c.bf16 %v1247, %v1247
    %v1250 = vmul.bf16 %v1248, 1069105081
    %v1251 = vpow.bf16.pop %v1250
    %v1252 = vunpack.c.l.bf16 %v1251
    %v1253 = vsel %vm421, %v1252, 0.0
    %1254 = vadd.xlane.f32.xlu0 %v1253
    %v1255 = vpop.xlane.xlu0 %1254
    %v1256 = vrcp.pop %v1255
    %v1257 = vpack.c.bf16 %v1256, %v1256
    %v1258 = vmul.bf16 %v1251, %v1257
    %v1260 = vsel %vm421, %v1258, 0
    %v1263 = vsel %vm440, %v1203, 0
    %1265 = vmatprep.subr.bf16.mxu0 0
    %1266 = vmatpush1.bf16.msra.mxu0 0
    %1267 = vmatprep.subr.bf16.mxu0 0
    %1268 = vmatpush1.bf16.msra.mxu0 0
    %1269 = vmatprep.subr.bf16.mxu0 0
    %1270 = vmatpush1.bf16.msra.mxu0 0
    %1271 = vmatprep.subr.bf16.mxu0 0
    %1272 = vmatpush1.bf16.msra.mxu0 0
    %1273 = vmatprep.subr.bf16.mxu0 0
    %1274 = vmatpush1.bf16.msra.mxu0 0
    %1275 = vmatprep.subr.bf16.mxu0 0
    %1276 = vmatpush1.bf16.msra.mxu0 0
    %1277 = vmatprep.subr.bf16.mxu0 0
    %1278 = vmatpush1.bf16.msra.mxu0 0
    %1279 = vmatprep.subr.bf16.mxu0 0
    %1280 = vmatpush1.bf16.msra.mxu0 %v1263
    %1281 = vmatprep.subr.bf16.mxu0 0
    %1282 = vmatpush2.bf16.msra.mxu0 0
    %1283 = vmatprep.subr.bf16.mxu0 0
    %1284 = vmatpush2.bf16.msra.mxu0 0
    %1285 = vmatprep.subr.bf16.mxu0 0
    %1286 = vmatpush2.bf16.msra.mxu0 0
    %1287 = vmatprep.subr.bf16.mxu0 0
    %1288 = vmatpush2.bf16.msra.mxu0 0
    %1289 = vmatprep.subr.bf16.mxu0 0
    %1290 = vmatpush2.bf16.msra.mxu0 0
    %1291 = vmatprep.subr.bf16.mxu0 0
    %1292 = vmatpush2.bf16.msra.mxu0 0
    %1293 = vmatprep.subr.bf16.mxu0 0
    %1294 = vmatpush2.bf16.msra.mxu0 0
    %1295 = vmatprep.subr.bf16.mxu0 0
    %1296 = vmatpush2.bf16.msra.mxu0 0
    %1297 = vmatprep.mubr.bf16.mxu0 0
    %1298 = vmatmul.mubr.bf16.gmra.mxu0 %v1260
    %v1299 = vpop.f32.mrf.mxu0
    %v1300 = vadd.f32 0.0, %v1299
    %v1301 = vpop.f32.mrf.mxu0
    %v1302 = vpop.f32.mrf.mxu0
    %v1303 = vpop.f32.mrf.mxu0
    %1304 = vdwg.mxu0
    %v1305 = vmul.f32 %v1300, %v487
    %v1306 = vadd.f32 %v1305, %v1197
    %vm1307 = vcmp.gt.f32.partialorder %v1306, 0.0
    %v1308 = vmin.f32 %v1306, 0.0
    %v1309 = vmul.f32 %v1308, 1.442695
    %v1310 = vpow.pop %v1309
    %v1311 = vsub.f32 %v1310, 1.0
    %v1312 = vsel %vm1307, %v1306, %v1311
    %v1313 = vpack.c.bf16 %v1312, %v1312
    %s1314 = scalar_lea.vmem [#allocation4], 768
    %v1315 = vld [vmem:[%s1314] sm:$0xff]
    %v1316 = vld [vmem:[%s1314 + $0x8] sm:$0xff]
    %v1317 = vld [vmem:[%s1314 + $0x10] sm:$0xff]
    %v1318 = vld [vmem:[%s1314 + $0x18] sm:$0xff]
    %v1319 = vld [vmem:[%s1314 + $0x20] sm:$0xff]
    %v1320 = vld [vmem:[%s1314 + $0x28] sm:$0xff]
    %v1321 = vld [vmem:[%s1314 + $0x30] sm:$0xff]
    %v1322 = vld [vmem:[%s1314 + $0x38] sm:$0xff]
    %v1323 = vld [vmem:[%s1314 + $0x40] sm:$0xff]
    %v1324 = vld [vmem:[%s1314 + $0x48] sm:$0xff]
    %v1325 = vld [vmem:[%s1314 + $0x50] sm:$0xff]
    %v1326 = vld [vmem:[%s1314 + $0x58] sm:$0xff]
    %v1327 = vld [vmem:[%s1314 + $0x60] sm:$0xff]
    %v1328 = vld [vmem:[%s1314 + $0x68] sm:$0xff]
    %v1329 = vld [vmem:[%s1314 + $0x70] sm:$0xff]
    %v1330 = vld [vmem:[%s1314 + $0x78] sm:$0xff]
    %v1331 = vld [vmem:[%s1314 + $0x80] sm:$0xff]
    %v1332 = vld [vmem:[%s1314 + $0x88] sm:$0xff]
    %v1333 = vld [vmem:[%s1314 + $0x90] sm:$0xff]
    %v1334 = vld [vmem:[%s1314 + $0x98] sm:$0xff]
    %v1335 = vld [vmem:[%s1314 + $0xa0] sm:$0xff]
    %v1336 = vld [vmem:[%s1314 + $0xa8] sm:$0xff]
    %v1337 = vld [vmem:[%s1314 + $0xb0] sm:$0xff]
    %v1338 = vld [vmem:[%s1314 + $0xb8] sm:$0xff]
    %v1339 = vld [vmem:[%s1314 + $0xc0] sm:$0xff]
    %v1340 = vld [vmem:[%s1314 + $0xc8] sm:$0xff]
    %v1341 = vld [vmem:[%s1314 + $0xd0] sm:$0xff]
    %v1342 = vld [vmem:[%s1314 + $0xd8] sm:$0xff]
    %v1343 = vld [vmem:[%s1314 + $0xe0] sm:$0xff]
    %v1344 = vld [vmem:[%s1314 + $0xe8] sm:$0xff]
    %v1345 = vld [vmem:[%s1314 + $0xf0] sm:$0xff]
    %v1346 = vld [vmem:[%s1314 + $0xf8] sm:$0xff]
    %s1347 = scalar_lea.vmem [#allocation6], 12
    %v1348 = vld [vmem:[%s1347] sm:$0xf]
    %v1350 = vlaneseq
    %v1351 = vshrl.u32 %v1350, 7
    %v1352 = vsub.s32 0, %v1351
    %v1353 = vrot.slane %v1348, %v1352
    %v1354 = vlaneseq
    %v1355 = vshrl.u32 %v1354, 7
    %v1356 = vsub.s32 1, %v1355
    %v1357 = vrot.slane %v1348, %v1356
    %v1358 = vlaneseq
    %v1359 = vshrl.u32 %v1358, 7
    %v1360 = vsub.s32 2, %v1359
    %v1361 = vrot.slane %v1348, %v1360
    %v1362 = vlaneseq
    %v1363 = vshrl.u32 %v1362, 7
    %v1364 = vsub.s32 3, %v1363
    %v1365 = vrot.slane %v1348, %v1364
    %v1402 = vunpack.c.l.b16 %v1315
    %v1403 = vunpack.c.h.b16 %v1315
    %v1404 = vunpack.c.l.b16 %v1316
    %v1405 = vunpack.c.h.b16 %v1316
    %v1406 = vunpack.c.l.b16 %v1317
    %v1407 = vunpack.c.h.b16 %v1317
    %v1408 = vunpack.c.l.b16 %v1318
    %v1409 = vunpack.c.h.b16 %v1318
    %v1410 = vunpack.c.l.b16 %v1319
    %v1411 = vunpack.c.h.b16 %v1319
    %v1412 = vunpack.c.l.b16 %v1320
    %v1413 = vunpack.c.h.b16 %v1320
    %v1414 = vunpack.c.l.b16 %v1321
    %v1415 = vunpack.c.h.b16 %v1321
    %v1416 = vunpack.c.l.b16 %v1322
    %v1417 = vunpack.c.h.b16 %v1322
    %v1418 = vunpack.c.l.b16 %v1323
    %v1419 = vunpack.c.h.b16 %v1323
    %v1420 = vunpack.c.l.b16 %v1324
    %v1421 = vunpack.c.h.b16 %v1324
    %v1422 = vunpack.c.l.b16 %v1325
    %v1423 = vunpack.c.h.b16 %v1325
    %v1424 = vunpack.c.l.b16 %v1326
    %v1425 = vunpack.c.h.b16 %v1326
    %v1426 = vunpack.c.l.b16 %v1327
    %v1427 = vunpack.c.h.b16 %v1327
    %v1428 = vunpack.c.l.b16 %v1328
    %v1429 = vunpack.c.h.b16 %v1328
    %v1430 = vunpack.c.l.b16 %v1329
    %v1431 = vunpack.c.h.b16 %v1329
    %v1432 = vunpack.c.l.b16 %v1330
    %v1433 = vunpack.c.h.b16 %v1330
    %v1434 = vunpack.c.l.b16 %v1331
    %v1435 = vunpack.c.h.b16 %v1331
    %v1436 = vunpack.c.l.b16 %v1332
    %v1437 = vunpack.c.h.b16 %v1332
    %v1438 = vunpack.c.l.b16 %v1333
    %v1439 = vunpack.c.h.b16 %v1333
    %v1440 = vunpack.c.l.b16 %v1334
    %v1441 = vunpack.c.h.b16 %v1334
    %v1442 = vunpack.c.l.b16 %v1335
    %v1443 = vunpack.c.h.b16 %v1335
    %v1444 = vunpack.c.l.b16 %v1336
    %v1445 = vunpack.c.h.b16 %v1336
    %v1446 = vunpack.c.l.b16 %v1337
    %v1447 = vunpack.c.h.b16 %v1337
    %v1448 = vunpack.c.l.b16 %v1338
    %v1449 = vunpack.c.h.b16 %v1338
    %v1450 = vunpack.c.l.b16 %v1339
    %v1451 = vunpack.c.h.b16 %v1339
    %v1452 = vunpack.c.l.b16 %v1340
    %v1453 = vunpack.c.h.b16 %v1340
    %v1454 = vunpack.c.l.b16 %v1341
    %v1455 = vunpack.c.h.b16 %v1341
    %v1456 = vunpack.c.l.b16 %v1342
    %v1457 = vunpack.c.h.b16 %v1342
    %v1458 = vunpack.c.l.b16 %v1343
    %v1459 = vunpack.c.h.b16 %v1343
    %v1460 = vunpack.c.l.b16 %v1344
    %v1461 = vunpack.c.h.b16 %v1344
    %v1462 = vunpack.c.l.b16 %v1345
    %v1463 = vunpack.c.h.b16 %v1345
    %v1464 = vunpack.c.l.b16 %v1346
    %v1465 = vunpack.c.h.b16 %v1346
    %v1466 = vpack.c.b16 %v1406, %v1402
    %v1467 = vpack.c.b16 %v1407, %v1403
    %v1468 = vpack.c.b16 %v1408, %v1404
    %v1469 = vpack.c.b16 %v1409, %v1405
    %v1470 = vpack.c.b16 %v1414, %v1410
    %v1471 = vpack.c.b16 %v1415, %v1411
    %v1472 = vpack.c.b16 %v1416, %v1412
    %v1473 = vpack.c.b16 %v1417, %v1413
    %v1474 = vpack.c.b16 %v1422, %v1418
    %v1475 = vpack.c.b16 %v1423, %v1419
    %v1476 = vpack.c.b16 %v1424, %v1420
    %v1477 = vpack.c.b16 %v1425, %v1421
    %v1478 = vpack.c.b16 %v1430, %v1426
    %v1479 = vpack.c.b16 %v1431, %v1427
    %v1480 = vpack.c.b16 %v1432, %v1428
    %v1481 = vpack.c.b16 %v1433, %v1429
    %v1482 = vpack.c.b16 %v1438, %v1434
    %v1483 = vpack.c.b16 %v1439, %v1435
    %v1484 = vpack.c.b16 %v1440, %v1436
    %v1485 = vpack.c.b16 %v1441, %v1437
    %v1486 = vpack.c.b16 %v1446, %v1442
    %v1487 = vpack.c.b16 %v1447, %v1443
    %v1488 = vpack.c.b16 %v1448, %v1444
    %v1489 = vpack.c.b16 %v1449, %v1445
    %v1490 = vpack.c.b16 %v1454, %v1450
    %v1491 = vpack.c.b16 %v1455, %v1451
    %v1492 = vpack.c.b16 %v1456, %v1452
    %v1493 = vpack.c.b16 %v1457, %v1453
    %v1494 = vpack.c.b16 %v1462, %v1458
    %v1495 = vpack.c.b16 %v1463, %v1459
    %v1496 = vpack.c.b16 %v1464, %v1460
    %v1497 = vpack.c.b16 %v1465, %v1461
    %1530 = vmatprep.subr.bf16.mxu0 %v1495
    %1531 = vmatpush1.bf16.msra.mxu0 %v1494
    %1532 = vmatprep.subr.bf16.mxu0 %v1491
    %1533 = vmatpush1.bf16.msra.mxu0 %v1490
    %1534 = vmatprep.subr.bf16.mxu0 %v1487
    %1535 = vmatpush1.bf16.msra.mxu0 %v1486
    %1536 = vmatprep.subr.bf16.mxu0 %v1483
    %1537 = vmatpush1.bf16.msra.mxu0 %v1482
    %1538 = vmatprep.subr.bf16.mxu0 %v1479
    %1539 = vmatpush1.bf16.msra.mxu0 %v1478
    %1540 = vmatprep.subr.bf16.mxu0 %v1475
    %1541 = vmatpush1.bf16.msra.mxu0 %v1474
    %1542 = vmatprep.subr.bf16.mxu0 %v1471
    %1543 = vmatpush1.bf16.msra.mxu0 %v1470
    %1544 = vmatprep.subr.bf16.mxu0 %v1467
    %1545 = vmatpush1.bf16.msra.mxu0 %v1466
    %1546 = vmatprep.subr.bf16.mxu0 0
    %1547 = vmatpush2.bf16.msra.mxu0 0
    %1548 = vmatprep.subr.bf16.mxu0 0
    %1549 = vmatpush2.bf16.msra.mxu0 0
    %1550 = vmatprep.subr.bf16.mxu0 0
    %1551 = vmatpush2.bf16.msra.mxu0 0
    %1552 = vmatprep.subr.bf16.mxu0 0
    %1553 = vmatpush2.bf16.msra.mxu0 0
    %1554 = vmatprep.subr.bf16.mxu0 0
    %1555 = vmatpush2.bf16.msra.mxu0 0
    %1556 = vmatprep.subr.bf16.mxu0 0
    %1557 = vmatpush2.bf16.msra.mxu0 0
    %1558 = vmatprep.subr.bf16.mxu0 0
    %1559 = vmatpush2.bf16.msra.mxu0 0
    %1560 = vmatprep.subr.bf16.mxu0 0
    %1561 = vmatpush2.bf16.msra.mxu0 0
    %1562 = vmatprep.mubr.bf16.mxu0 0
    %1563 = vmatmul.mubr.bf16.gmra.mxu0 %v1313
    %v1564 = vpop.f32.mrf.mxu0
    %v1565 = vadd.f32 %v1353, %v1564
    %v1566 = vpop.f32.mrf.mxu0
    %v1567 = vadd.f32 %v1357, %v1566
    %v1568 = vpop.f32.mrf.mxu0
    %v1569 = vpop.f32.mrf.mxu0
    %1570 = vdwg.mxu0
    %1571 = vmatprep.subr.bf16.mxu0 %v1497
    %1572 = vmatpush1.bf16.msra.mxu0 %v1496
    %1573 = vmatprep.subr.bf16.mxu0 %v1493
    %1574 = vmatpush1.bf16.msra.mxu0 %v1492
    %1575 = vmatprep.subr.bf16.mxu0 %v1489
    %1576 = vmatpush1.bf16.msra.mxu0 %v1488
    %1577 = vmatprep.subr.bf16.mxu0 %v1485
    %1578 = vmatpush1.bf16.msra.mxu0 %v1484
    %1579 = vmatprep.subr.bf16.mxu0 %v1481
    %1580 = vmatpush1.bf16.msra.mxu0 %v1480
    %1581 = vmatprep.subr.bf16.mxu0 %v1477
    %1582 = vmatpush1.bf16.msra.mxu0 %v1476
    %1583 = vmatprep.subr.bf16.mxu0 %v1473
    %1584 = vmatpush1.bf16.msra.mxu0 %v1472
    %1585 = vmatprep.subr.bf16.mxu0 %v1469
    %1586 = vmatpush1.bf16.msra.mxu0 %v1468
    %1587 = vmatprep.subr.bf16.mxu0 0
    %1588 = vmatpush2.bf16.msra.mxu0 0
    %1589 = vmatprep.subr.bf16.mxu0 0
    %1590 = vmatpush2.bf16.msra.mxu0 0
    %1591 = vmatprep.subr.bf16.mxu0 0
    %1592 = vmatpush2.bf16.msra.mxu0 0
    %1593 = vmatprep.subr.bf16.mxu0 0
    %1594 = vmatpush2.bf16.msra.mxu0 0
    %1595 = vmatprep.subr.bf16.mxu0 0
    %1596 = vmatpush2.bf16.msra.mxu0 0
    %1597 = vmatprep.subr.bf16.mxu0 0
    %1598 = vmatpush2.bf16.msra.mxu0 0
    %1599 = vmatprep.subr.bf16.mxu0 0
    %1600 = vmatpush2.bf16.msra.mxu0 0
    %1601 = vmatprep.subr.bf16.mxu0 0
    %1602 = vmatpush2.bf16.msra.mxu0 0
    %1603 = vmatprep.mubr.bf16.mxu0 0
    %1604 = vmatmul.mubr.bf16.gmra.mxu0 %v1313
    %v1605 = vpop.f32.mrf.mxu0
    %v1606 = vadd.f32 %v1361, %v1605
    %v1607 = vpop.f32.mrf.mxu0
    %v1608 = vadd.f32 %v1365, %v1607
    %v1609 = vpop.f32.mrf.mxu0
    %v1610 = vpop.f32.mrf.mxu0
    %1611 = vdwg.mxu0
    %v1612 = vpack.c.bf16 %v1565, %v1565
    %v1613 = vpack.c.bf16 %v1567, %v1567
    %v1614 = vpack.c.bf16 %v1606, %v1606
    %1615 = vmatprep.subr.bf16.mxu0 0
    %1616 = vmatpush1.bf16.xpose.msra.mxu0 0
    %1617 = vmatprep.subr.bf16.mxu0 0
    %1618 = vmatpush1.bf16.xpose.msra.mxu0 0
    %1619 = vmatprep.subr.bf16.mxu0 0
    %1620 = vmatpush1.bf16.xpose.msra.mxu0 0
    %1621 = vmatprep.subr.bf16.mxu0 0
    %1622 = vmatpush1.bf16.xpose.msra.mxu0 0
    %1623 = vmatprep.subr.bf16.mxu0 0
    %1624 = vmatpush1.bf16.xpose.msra.mxu0 0
    %1625 = vmatprep.subr.bf16.mxu0 0
    %1626 = vmatpush1.bf16.xpose.msra.mxu0 0
    %1627 = vmatprep.subr.bf16.mxu0 0
    %1628 = vmatpush1.bf16.xpose.msra.mxu0 0
    %1629 = vmatprep.subr.bf16.mxu0 0
    %1630 = vmatpush1.bf16.xpose.msra.mxu0 %v1613
    %1631 = vmatprep.subr.bf16.mxu0 0
    %1632 = vmatpush2.bf16.xpose.msra.mxu0 0
    %1633 = vmatprep.subr.bf16.mxu0 0
    %1634 = vmatpush2.bf16.xpose.msra.mxu0 0
    %1635 = vmatprep.subr.bf16.mxu0 0
    %1636 = vmatpush2.bf16.xpose.msra.mxu0 0
    %1637 = vmatprep.subr.bf16.mxu0 0
    %1638 = vmatpush2.bf16.xpose.msra.mxu0 0
    %1639 = vmatprep.subr.bf16.mxu0 0
    %1640 = vmatpush2.bf16.xpose.msra.mxu0 0
    %1641 = vmatprep.subr.bf16.mxu0 0
    %1642 = vmatpush2.bf16.xpose.msra.mxu0 0
    %1643 = vmatprep.subr.bf16.mxu0 0
    %1644 = vmatpush2.bf16.xpose.msra.mxu0 0
    %1645 = vmatprep.subr.bf16.mxu0 0
    %1646 = vmatpush2.bf16.xpose.msra.mxu0 0
    %1647 = vmatprep.mubr.bf16.mxu0 0
    %1648 = vmatmul.mubr.bf16.gmra.mxu0 %v1612
    %v1649 = vpop.f32.mrf.mxu0
    %v1650 = vadd.f32 %v380, %v1649
    %v1651 = vpop.f32.mrf.mxu0
    %v1652 = vpop.f32.mrf.mxu0
    %v1653 = vpop.f32.mrf.mxu0
    %1654 = vdwg.mxu0
    %v1655 = vsel %vm421, %v1650, -inf
    %1656 = vmax.xlane.f32.xlu0 %v1655
    %v1657 = vpop.xlane.xlu0 %1656
    %v1658 = vsub.f32 %v1650, %v1657
    %v1659 = vpack.c.bf16 %v1658, %v1658
    %v1661 = vmul.bf16 %v1659, 1069105081
    %v1662 = vpow.bf16.pop %v1661
    %v1663 = vunpack.c.l.bf16 %v1662
    %v1664 = vsel %vm421, %v1663, 0.0
    %1665 = vadd.xlane.f32.xlu0 %v1664
    %v1666 = vpop.xlane.xlu0 %1665
    %v1667 = vrcp.pop %v1666
    %v1668 = vpack.c.bf16 %v1667, %v1667
    %v1669 = vmul.bf16 %v1662, %v1668
    %v1671 = vsel %vm421, %v1669, 0
    %v1674 = vsel %vm440, %v1614, 0
    %1676 = vmatprep.subr.bf16.mxu0 0
    %1677 = vmatpush1.bf16.msra.mxu0 0
    %1678 = vmatprep.subr.bf16.mxu0 0
    %1679 = vmatpush1.bf16.msra.mxu0 0
    %1680 = vmatprep.subr.bf16.mxu0 0
    %1681 = vmatpush1.bf16.msra.mxu0 0
    %1682 = vmatprep.subr.bf16.mxu0 0
    %1683 = vmatpush1.bf16.msra.mxu0 0
    %1684 = vmatprep.subr.bf16.mxu0 0
    %1685 = vmatpush1.bf16.msra.mxu0 0
    %1686 = vmatprep.subr.bf16.mxu0 0
    %1687 = vmatpush1.bf16.msra.mxu0 0
    %1688 = vmatprep.subr.bf16.mxu0 0
    %1689 = vmatpush1.bf16.msra.mxu0 0
    %1690 = vmatprep.subr.bf16.mxu0 0
    %1691 = vmatpush1.bf16.msra.mxu0 %v1674
    %1692 = vmatprep.subr.bf16.mxu0 0
    %1693 = vmatpush2.bf16.msra.mxu0 0
    %1694 = vmatprep.subr.bf16.mxu0 0
    %1695 = vmatpush2.bf16.msra.mxu0 0
    %1696 = vmatprep.subr.bf16.mxu0 0
    %1697 = vmatpush2.bf16.msra.mxu0 0
    %1698 = vmatprep.subr.bf16.mxu0 0
    %1699 = vmatpush2.bf16.msra.mxu0 0
    %1700 = vmatprep.subr.bf16.mxu0 0
    %1701 = vmatpush2.bf16.msra.mxu0 0
    %1702 = vmatprep.subr.bf16.mxu0 0
    %1703 = vmatpush2.bf16.msra.mxu0 0
    %1704 = vmatprep.subr.bf16.mxu0 0
    %1705 = vmatpush2.bf16.msra.mxu0 0
    %1706 = vmatprep.subr.bf16.mxu0 0
    %1707 = vmatpush2.bf16.msra.mxu0 0
    %1708 = vmatprep.mubr.bf16.mxu0 0
    %1709 = vmatmul.mubr.bf16.gmra.mxu0 %v1671
    %v1710 = vpop.f32.mrf.mxu0
    %v1711 = vadd.f32 0.0, %v1710
    %v1712 = vpop.f32.mrf.mxu0
    %v1713 = vpop.f32.mrf.mxu0
    %v1714 = vpop.f32.mrf.mxu0
    %1715 = vdwg.mxu0
    %v1716 = vmul.f32 %v1711, %v487
    %v1717 = vadd.f32 %v1716, %v1608
    %v1718 = vpack.c.bf16 %v79, %v79
    %s1719 = scalar_lea.vmem [#allocation4], 1024
    %v1720 = vld [vmem:[%s1719] sm:$0xff]
    %v1721 = vld [vmem:[%s1719 + $0x8] sm:$0xff]
    %v1722 = vld [vmem:[%s1719 + $0x10] sm:$0xff]
    %v1723 = vld [vmem:[%s1719 + $0x18] sm:$0xff]
    %v1724 = vld [vmem:[%s1719 + $0x20] sm:$0xff]
    %v1725 = vld [vmem:[%s1719 + $0x28] sm:$0xff]
    %v1726 = vld [vmem:[%s1719 + $0x30] sm:$0xff]
    %v1727 = vld [vmem:[%s1719 + $0x38] sm:$0xff]
    %v1728 = vld [vmem:[%s1719 + $0x40] sm:$0xff]
    %v1729 = vld [vmem:[%s1719 + $0x48] sm:$0xff]
    %v1730 = vld [vmem:[%s1719 + $0x50] sm:$0xff]
    %v1731 = vld [vmem:[%s1719 + $0x58] sm:$0xff]
    %v1732 = vld [vmem:[%s1719 + $0x60] sm:$0xff]
    %v1733 = vld [vmem:[%s1719 + $0x68] sm:$0xff]
    %v1734 = vld [vmem:[%s1719 + $0x70] sm:$0xff]
    %v1735 = vld [vmem:[%s1719 + $0x78] sm:$0xff]
    %v1736 = vld [vmem:[%s1719 + $0x80] sm:$0xff]
    %v1737 = vld [vmem:[%s1719 + $0x88] sm:$0xff]
    %v1738 = vld [vmem:[%s1719 + $0x90] sm:$0xff]
    %v1739 = vld [vmem:[%s1719 + $0x98] sm:$0xff]
    %v1740 = vld [vmem:[%s1719 + $0xa0] sm:$0xff]
    %v1741 = vld [vmem:[%s1719 + $0xa8] sm:$0xff]
    %v1742 = vld [vmem:[%s1719 + $0xb0] sm:$0xff]
    %v1743 = vld [vmem:[%s1719 + $0xb8] sm:$0xff]
    %v1744 = vld [vmem:[%s1719 + $0xc0] sm:$0xff]
    %v1745 = vld [vmem:[%s1719 + $0xc8] sm:$0xff]
    %v1746 = vld [vmem:[%s1719 + $0xd0] sm:$0xff]
    %v1747 = vld [vmem:[%s1719 + $0xd8] sm:$0xff]
    %v1748 = vld [vmem:[%s1719 + $0xe0] sm:$0xff]
    %v1749 = vld [vmem:[%s1719 + $0xe8] sm:$0xff]
    %v1750 = vld [vmem:[%s1719 + $0xf0] sm:$0xff]
    %v1751 = vld [vmem:[%s1719 + $0xf8] sm:$0xff]
    %s1752 = scalar_lea.vmem [#allocation6], 16
    %v1753 = vld [vmem:[%s1752] sm:$0xf]
    %v1755 = vlaneseq
    %v1756 = vshrl.u32 %v1755, 7
    %v1757 = vsub.s32 0, %v1756
    %v1758 = vrot.slane %v1753, %v1757
    %v1759 = vlaneseq
    %v1760 = vshrl.u32 %v1759, 7
    %v1761 = vsub.s32 1, %v1760
    %v1762 = vrot.slane %v1753, %v1761
    %v1763 = vlaneseq
    %v1764 = vshrl.u32 %v1763, 7
    %v1765 = vsub.s32 2, %v1764
    %v1766 = vrot.slane %v1753, %v1765
    %v1767 = vlaneseq
    %v1768 = vshrl.u32 %v1767, 7
    %v1769 = vsub.s32 3, %v1768
    %v1770 = vrot.slane %v1753, %v1769
    %v1807 = vunpack.c.l.b16 %v1720
    %v1808 = vunpack.c.h.b16 %v1720
    %v1809 = vunpack.c.l.b16 %v1721
    %v1810 = vunpack.c.h.b16 %v1721
    %v1811 = vunpack.c.l.b16 %v1722
    %v1812 = vunpack.c.h.b16 %v1722
    %v1813 = vunpack.c.l.b16 %v1723
    %v1814 = vunpack.c.h.b16 %v1723
    %v1815 = vunpack.c.l.b16 %v1724
    %v1816 = vunpack.c.h.b16 %v1724
    %v1817 = vunpack.c.l.b16 %v1725
    %v1818 = vunpack.c.h.b16 %v1725
    %v1819 = vunpack.c.l.b16 %v1726
    %v1820 = vunpack.c.h.b16 %v1726
    %v1821 = vunpack.c.l.b16 %v1727
    %v1822 = vunpack.c.h.b16 %v1727
    %v1823 = vunpack.c.l.b16 %v1728
    %v1824 = vunpack.c.h.b16 %v1728
    %v1825 = vunpack.c.l.b16 %v1729
    %v1826 = vunpack.c.h.b16 %v1729
    %v1827 = vunpack.c.l.b16 %v1730
    %v1828 = vunpack.c.h.b16 %v1730
    %v1829 = vunpack.c.l.b16 %v1731
    %v1830 = vunpack.c.h.b16 %v1731
    %v1831 = vunpack.c.l.b16 %v1732
    %v1832 = vunpack.c.h.b16 %v1732
    %v1833 = vunpack.c.l.b16 %v1733
    %v1834 = vunpack.c.h.b16 %v1733
    %v1835 = vunpack.c.l.b16 %v1734
    %v1836 = vunpack.c.h.b16 %v1734
    %v1837 = vunpack.c.l.b16 %v1735
    %v1838 = vunpack.c.h.b16 %v1735
    %v1839 = vunpack.c.l.b16 %v1736
    %v1840 = vunpack.c.h.b16 %v1736
    %v1841 = vunpack.c.l.b16 %v1737
    %v1842 = vunpack.c.h.b16 %v1737
    %v1843 = vunpack.c.l.b16 %v1738
    %v1844 = vunpack.c.h.b16 %v1738
    %v1845 = vunpack.c.l.b16 %v1739
    %v1846 = vunpack.c.h.b16 %v1739
    %v1847 = vunpack.c.l.b16 %v1740
    %v1848 = vunpack.c.h.b16 %v1740
    %v1849 = vunpack.c.l.b16 %v1741
    %v1850 = vunpack.c.h.b16 %v1741
    %v1851 = vunpack.c.l.b16 %v1742
    %v1852 = vunpack.c.h.b16 %v1742
    %v1853 = vunpack.c.l.b16 %v1743
    %v1854 = vunpack.c.h.b16 %v1743
    %v1855 = vunpack.c.l.b16 %v1744
    %v1856 = vunpack.c.h.b16 %v1744
    %v1857 = vunpack.c.l.b16 %v1745
    %v1858 = vunpack.c.h.b16 %v1745
    %v1859 = vunpack.c.l.b16 %v1746
    %v1860 = vunpack.c.h.b16 %v1746
    %v1861 = vunpack.c.l.b16 %v1747
    %v1862 = vunpack.c.h.b16 %v1747
    %v1863 = vunpack.c.l.b16 %v1748
    %v1864 = vunpack.c.h.b16 %v1748
    %v1865 = vunpack.c.l.b16 %v1749
    %v1866 = vunpack.c.h.b16 %v1749
    %v1867 = vunpack.c.l.b16 %v1750
    %v1868 = vunpack.c.h.b16 %v1750
    %v1869 = vunpack.c.l.b16 %v1751
    %v1870 = vunpack.c.h.b16 %v1751
    %v1871 = vpack.c.b16 %v1811, %v1807
    %v1872 = vpack.c.b16 %v1812, %v1808
    %v1873 = vpack.c.b16 %v1813, %v1809
    %v1874 = vpack.c.b16 %v1814, %v1810
    %v1875 = vpack.c.b16 %v1819, %v1815
    %v1876 = vpack.c.b16 %v1820, %v1816
    %v1877 = vpack.c.b16 %v1821, %v1817
    %v1878 = vpack.c.b16 %v1822, %v1818
    %v1879 = vpack.c.b16 %v1827, %v1823
    %v1880 = vpack.c.b16 %v1828, %v1824
    %v1881 = vpack.c.b16 %v1829, %v1825
    %v1882 = vpack.c.b16 %v1830, %v1826
    %v1883 = vpack.c.b16 %v1835, %v1831
    %v1884 = vpack.c.b16 %v1836, %v1832
    %v1885 = vpack.c.b16 %v1837, %v1833
    %v1886 = vpack.c.b16 %v1838, %v1834
    %v1887 = vpack.c.b16 %v1843, %v1839
    %v1888 = vpack.c.b16 %v1844, %v1840
    %v1889 = vpack.c.b16 %v1845, %v1841
    %v1890 = vpack.c.b16 %v1846, %v1842
    %v1891 = vpack.c.b16 %v1851, %v1847
    %v1892 = vpack.c.b16 %v1852, %v1848
    %v1893 = vpack.c.b16 %v1853, %v1849
    %v1894 = vpack.c.b16 %v1854, %v1850
    %v1895 = vpack.c.b16 %v1859, %v1855
    %v1896 = vpack.c.b16 %v1860, %v1856
    %v1897 = vpack.c.b16 %v1861, %v1857
    %v1898 = vpack.c.b16 %v1862, %v1858
    %v1899 = vpack.c.b16 %v1867, %v1863
    %v1900 = vpack.c.b16 %v1868, %v1864
    %v1901 = vpack.c.b16 %v1869, %v1865
    %v1902 = vpack.c.b16 %v1870, %v1866
    %1935 = vmatprep.subr.bf16.mxu0 %v1900
    %1936 = vmatpush1.bf16.msra.mxu0 %v1899
    %1937 = vmatprep.subr.bf16.mxu0 %v1896
    %1938 = vmatpush1.bf16.msra.mxu0 %v1895
    %1939 = vmatprep.subr.bf16.mxu0 %v1892
    %1940 = vmatpush1.bf16.msra.mxu0 %v1891
    %1941 = vmatprep.subr.bf16.mxu0 %v1888
    %1942 = vmatpush1.bf16.msra.mxu0 %v1887
    %1943 = vmatprep.subr.bf16.mxu0 %v1884
    %1944 = vmatpush1.bf16.msra.mxu0 %v1883
    %1945 = vmatprep.subr.bf16.mxu0 %v1880
    %1946 = vmatpush1.bf16.msra.mxu0 %v1879
    %1947 = vmatprep.subr.bf16.mxu0 %v1876
    %1948 = vmatpush1.bf16.msra.mxu0 %v1875
    %1949 = vmatprep.subr.bf16.mxu0 %v1872
    %1950 = vmatpush1.bf16.msra.mxu0 %v1871
    %1951 = vmatprep.subr.bf16.mxu0 0
    %1952 = vmatpush2.bf16.msra.mxu0 0
    %1953 = vmatprep.subr.bf16.mxu0 0
    %1954 = vmatpush2.bf16.msra.mxu0 0
    %1955 = vmatprep.subr.bf16.mxu0 0
    %1956 = vmatpush2.bf16.msra.mxu0 0
    %1957 = vmatprep.subr.bf16.mxu0 0
    %1958 = vmatpush2.bf16.msra.mxu0 0
    %1959 = vmatprep.subr.bf16.mxu0 0
    %1960 = vmatpush2.bf16.msra.mxu0 0
    %1961 = vmatprep.subr.bf16.mxu0 0
    %1962 = vmatpush2.bf16.msra.mxu0 0
    %1963 = vmatprep.subr.bf16.mxu0 0
    %1964 = vmatpush2.bf16.msra.mxu0 0
    %1965 = vmatprep.subr.bf16.mxu0 0
    %1966 = vmatpush2.bf16.msra.mxu0 0
    %1967 = vmatprep.mubr.bf16.mxu0 0
    %1968 = vmatmul.mubr.bf16.gmra.mxu0 %v1718
    %v1969 = vpop.f32.mrf.mxu0
    %v1970 = vadd.f32 %v1758, %v1969
    %v1971 = vpop.f32.mrf.mxu0
    %v1972 = vadd.f32 %v1762, %v1971
    %v1973 = vpop.f32.mrf.mxu0
    %v1974 = vpop.f32.mrf.mxu0
    %1975 = vdwg.mxu0
    %1976 = vmatprep.subr.bf16.mxu0 %v1902
    %1977 = vmatpush1.bf16.msra.mxu0 %v1901
    %1978 = vmatprep.subr.bf16.mxu0 %v1898
    %1979 = vmatpush1.bf16.msra.mxu0 %v1897
    %1980 = vmatprep.subr.bf16.mxu0 %v1894
    %1981 = vmatpush1.bf16.msra.mxu0 %v1893
    %1982 = vmatprep.subr.bf16.mxu0 %v1890
    %1983 = vmatpush1.bf16.msra.mxu0 %v1889
    %1984 = vmatprep.subr.bf16.mxu0 %v1886
    %1985 = vmatpush1.bf16.msra.mxu0 %v1885
    %1986 = vmatprep.subr.bf16.mxu0 %v1882
    %1987 = vmatpush1.bf16.msra.mxu0 %v1881
    %1988 = vmatprep.subr.bf16.mxu0 %v1878
    %1989 = vmatpush1.bf16.msra.mxu0 %v1877
    %1990 = vmatprep.subr.bf16.mxu0 %v1874
    %1991 = vmatpush1.bf16.msra.mxu0 %v1873
    %1992 = vmatprep.subr.bf16.mxu0 0
    %1993 = vmatpush2.bf16.msra.mxu0 0
    %1994 = vmatprep.subr.bf16.mxu0 0
    %1995 = vmatpush2.bf16.msra.mxu0 0
    %1996 = vmatprep.subr.bf16.mxu0 0
    %1997 = vmatpush2.bf16.msra.mxu0 0
    %1998 = vmatprep.subr.bf16.mxu0 0
    %1999 = vmatpush2.bf16.msra.mxu0 0
    %2000 = vmatprep.subr.bf16.mxu0 0
    %2001 = vmatpush2.bf16.msra.mxu0 0
    %2002 = vmatprep.subr.bf16.mxu0 0
    %2003 = vmatpush2.bf16.msra.mxu0 0
    %2004 = vmatprep.subr.bf16.mxu0 0
    %2005 = vmatpush2.bf16.msra.mxu0 0
    %2006 = vmatprep.subr.bf16.mxu0 0
    %2007 = vmatpush2.bf16.msra.mxu0 0
    %2008 = vmatprep.mubr.bf16.mxu0 0
    %2009 = vmatmul.mubr.bf16.gmra.mxu0 %v1718
    %v2010 = vpop.f32.mrf.mxu0
    %v2011 = vadd.f32 %v1766, %v2010
    %v2012 = vpop.f32.mrf.mxu0
    %v2013 = vadd.f32 %v1770, %v2012
    %v2014 = vpop.f32.mrf.mxu0
    %v2015 = vpop.f32.mrf.mxu0
    %2016 = vdwg.mxu0
    %v2017 = vpack.c.bf16 %v1970, %v1970
    %v2018 = vpack.c.bf16 %v1972, %v1972
    %v2019 = vpack.c.bf16 %v2011, %v2011
    %2020 = vmatprep.subr.bf16.mxu0 0
    %2021 = vmatpush1.bf16.xpose.msra.mxu0 0
    %2022 = vmatprep.subr.bf16.mxu0 0
    %2023 = vmatpush1.bf16.xpose.msra.mxu0 0
    %2024 = vmatprep.subr.bf16.mxu0 0
    %2025 = vmatpush1.bf16.xpose.msra.mxu0 0
    %2026 = vmatprep.subr.bf16.mxu0 0
    %2027 = vmatpush1.bf16.xpose.msra.mxu0 0
    %2028 = vmatprep.subr.bf16.mxu0 0
    %2029 = vmatpush1.bf16.xpose.msra.mxu0 0
    %2030 = vmatprep.subr.bf16.mxu0 0
    %2031 = vmatpush1.bf16.xpose.msra.mxu0 0
    %2032 = vmatprep.subr.bf16.mxu0 0
    %2033 = vmatpush1.bf16.xpose.msra.mxu0 0
    %2034 = vmatprep.subr.bf16.mxu0 0
    %2035 = vmatpush1.bf16.xpose.msra.mxu0 %v2018
    %2036 = vmatprep.subr.bf16.mxu0 0
    %2037 = vmatpush2.bf16.xpose.msra.mxu0 0
    %2038 = vmatprep.subr.bf16.mxu0 0
    %2039 = vmatpush2.bf16.xpose.msra.mxu0 0
    %2040 = vmatprep.subr.bf16.mxu0 0
    %2041 = vmatpush2.bf16.xpose.msra.mxu0 0
    %2042 = vmatprep.subr.bf16.mxu0 0
    %2043 = vmatpush2.bf16.xpose.msra.mxu0 0
    %2044 = vmatprep.subr.bf16.mxu0 0
    %2045 = vmatpush2.bf16.xpose.msra.mxu0 0
    %2046 = vmatprep.subr.bf16.mxu0 0
    %2047 = vmatpush2.bf16.xpose.msra.mxu0 0
    %2048 = vmatprep.subr.bf16.mxu0 0
    %2049 = vmatpush2.bf16.xpose.msra.mxu0 0
    %2050 = vmatprep.subr.bf16.mxu0 0
    %2051 = vmatpush2.bf16.xpose.msra.mxu0 0
    %2052 = vmatprep.mubr.bf16.mxu0 0
    %2053 = vmatmul.mubr.bf16.gmra.mxu0 %v2017
    %v2054 = vpop.f32.mrf.mxu0
    %v2055 = vadd.f32 %v380, %v2054
    %v2056 = vpop.f32.mrf.mxu0
    %v2057 = vpop.f32.mrf.mxu0
    %v2058 = vpop.f32.mrf.mxu0
    %2059 = vdwg.mxu0
    %v2060 = vsel %vm421, %v2055, -inf
    %2061 = vmax.xlane.f32.xlu0 %v2060
    %v2062 = vpop.xlane.xlu0 %2061
    %v2063 = vsub.f32 %v2055, %v2062
    %v2064 = vpack.c.bf16 %v2063, %v2063
    %v2066 = vmul.bf16 %v2064, 1069105081
    %v2067 = vpow.bf16.pop %v2066
    %v2068 = vunpack.c.l.bf16 %v2067
    %v2069 = vsel %vm421, %v2068, 0.0
    %2070 = vadd.xlane.f32.xlu0 %v2069
    %v2071 = vpop.xlane.xlu0 %2070
    %v2072 = vrcp.pop %v2071
    %v2073 = vpack.c.bf16 %v2072, %v2072
    %v2074 = vmul.bf16 %v2067, %v2073
    %v2076 = vsel %vm421, %v2074, 0
    %v2079 = vsel %vm440, %v2019, 0
    %2081 = vmatprep.subr.bf16.mxu0 0
    %2082 = vmatpush1.bf16.msra.mxu0 0
    %2083 = vmatprep.subr.bf16.mxu0 0
    %2084 = vmatpush1.bf16.msra.mxu0 0
    %2085 = vmatprep.subr.bf16.mxu0 0
    %2086 = vmatpush1.bf16.msra.mxu0 0
    %2087 = vmatprep.subr.bf16.mxu0 0
    %2088 = vmatpush1.bf16.msra.mxu0 0
    %2089 = vmatprep.subr.bf16.mxu0 0
    %2090 = vmatpush1.bf16.msra.mxu0 0
    %2091 = vmatprep.subr.bf16.mxu0 0
    %2092 = vmatpush1.bf16.msra.mxu0 0
    %2093 = vmatprep.subr.bf16.mxu0 0
    %2094 = vmatpush1.bf16.msra.mxu0 0
    %2095 = vmatprep.subr.bf16.mxu0 0
    %2096 = vmatpush1.bf16.msra.mxu0 %v2079
    %2097 = vmatprep.subr.bf16.mxu0 0
    %2098 = vmatpush2.bf16.msra.mxu0 0
    %2099 = vmatprep.subr.bf16.mxu0 0
    %2100 = vmatpush2.bf16.msra.mxu0 0
    %2101 = vmatprep.subr.bf16.mxu0 0
    %2102 = vmatpush2.bf16.msra.mxu0 0
    %2103 = vmatprep.subr.bf16.mxu0 0
    %2104 = vmatpush2.bf16.msra.mxu0 0
    %2105 = vmatprep.subr.bf16.mxu0 0
    %2106 = vmatpush2.bf16.msra.mxu0 0
    %2107 = vmatprep.subr.bf16.mxu0 0
    %2108 = vmatpush2.bf16.msra.mxu0 0
    %2109 = vmatprep.subr.bf16.mxu0 0
    %2110 = vmatpush2.bf16.msra.mxu0 0
    %2111 = vmatprep.subr.bf16.mxu0 0
    %2112 = vmatpush2.bf16.msra.mxu0 0
    %2113 = vmatprep.mubr.bf16.mxu0 0
    %2114 = vmatmul.mubr.bf16.gmra.mxu0 %v2076
    %v2115 = vpop.f32.mrf.mxu0
    %v2116 = vadd.f32 0.0, %v2115
    %v2117 = vpop.f32.mrf.mxu0
    %v2118 = vpop.f32.mrf.mxu0
    %v2119 = vpop.f32.mrf.mxu0
    %2120 = vdwg.mxu0
    %v2121 = vmul.f32 %v2116, %v487
    %v2122 = vadd.f32 %v2121, %v2013
    %vm2123 = vcmp.gt.f32.partialorder %v2122, 0.0
    %v2124 = vmin.f32 %v2122, 0.0
    %v2125 = vmul.f32 %v2124, 1.442695
    %v2126 = vpow.pop %v2125
    %v2127 = vsub.f32 %v2126, 1.0
    %v2128 = vsel %vm2123, %v2122, %v2127
    %v2129 = vpack.c.bf16 %v2128, %v2128
    %s2130 = scalar_lea.vmem [#allocation4], 1280
    %v2131 = vld [vmem:[%s2130] sm:$0xff]
    %v2132 = vld [vmem:[%s2130 + $0x8] sm:$0xff]
    %v2133 = vld [vmem:[%s2130 + $0x10] sm:$0xff]
    %v2134 = vld [vmem:[%s2130 + $0x18] sm:$0xff]
    %v2135 = vld [vmem:[%s2130 + $0x20] sm:$0xff]
    %v2136 = vld [vmem:[%s2130 + $0x28] sm:$0xff]
    %v2137 = vld [vmem:[%s2130 + $0x30] sm:$0xff]
    %v2138 = vld [vmem:[%s2130 + $0x38] sm:$0xff]
    %v2139 = vld [vmem:[%s2130 + $0x40] sm:$0xff]
    %v2140 = vld [vmem:[%s2130 + $0x48] sm:$0xff]
    %v2141 = vld [vmem:[%s2130 + $0x50] sm:$0xff]
    %v2142 = vld [vmem:[%s2130 + $0x58] sm:$0xff]
    %v2143 = vld [vmem:[%s2130 + $0x60] sm:$0xff]
    %v2144 = vld [vmem:[%s2130 + $0x68] sm:$0xff]
    %v2145 = vld [vmem:[%s2130 + $0x70] sm:$0xff]
    %v2146 = vld [vmem:[%s2130 + $0x78] sm:$0xff]
    %v2147 = vld [vmem:[%s2130 + $0x80] sm:$0xff]
    %v2148 = vld [vmem:[%s2130 + $0x88] sm:$0xff]
    %v2149 = vld [vmem:[%s2130 + $0x90] sm:$0xff]
    %v2150 = vld [vmem:[%s2130 + $0x98] sm:$0xff]
    %v2151 = vld [vmem:[%s2130 + $0xa0] sm:$0xff]
    %v2152 = vld [vmem:[%s2130 + $0xa8] sm:$0xff]
    %v2153 = vld [vmem:[%s2130 + $0xb0] sm:$0xff]
    %v2154 = vld [vmem:[%s2130 + $0xb8] sm:$0xff]
    %v2155 = vld [vmem:[%s2130 + $0xc0] sm:$0xff]
    %v2156 = vld [vmem:[%s2130 + $0xc8] sm:$0xff]
    %v2157 = vld [vmem:[%s2130 + $0xd0] sm:$0xff]
    %v2158 = vld [vmem:[%s2130 + $0xd8] sm:$0xff]
    %v2159 = vld [vmem:[%s2130 + $0xe0] sm:$0xff]
    %v2160 = vld [vmem:[%s2130 + $0xe8] sm:$0xff]
    %v2161 = vld [vmem:[%s2130 + $0xf0] sm:$0xff]
    %v2162 = vld [vmem:[%s2130 + $0xf8] sm:$0xff]
    %s2163 = scalar_lea.vmem [#allocation6], 20
    %v2164 = vld [vmem:[%s2163] sm:$0xf]
    %v2166 = vlaneseq
    %v2167 = vshrl.u32 %v2166, 7
    %v2168 = vsub.s32 0, %v2167
    %v2169 = vrot.slane %v2164, %v2168
    %v2170 = vlaneseq
    %v2171 = vshrl.u32 %v2170, 7
    %v2172 = vsub.s32 1, %v2171
    %v2173 = vrot.slane %v2164, %v2172
    %v2174 = vlaneseq
    %v2175 = vshrl.u32 %v2174, 7
    %v2176 = vsub.s32 2, %v2175
    %v2177 = vrot.slane %v2164, %v2176
    %v2178 = vlaneseq
    %v2179 = vshrl.u32 %v2178, 7
    %v2180 = vsub.s32 3, %v2179
    %v2181 = vrot.slane %v2164, %v2180
    %v2218 = vunpack.c.l.b16 %v2131
    %v2219 = vunpack.c.h.b16 %v2131
    %v2220 = vunpack.c.l.b16 %v2132
    %v2221 = vunpack.c.h.b16 %v2132
    %v2222 = vunpack.c.l.b16 %v2133
    %v2223 = vunpack.c.h.b16 %v2133
    %v2224 = vunpack.c.l.b16 %v2134
    %v2225 = vunpack.c.h.b16 %v2134
    %v2226 = vunpack.c.l.b16 %v2135
    %v2227 = vunpack.c.h.b16 %v2135
    %v2228 = vunpack.c.l.b16 %v2136
    %v2229 = vunpack.c.h.b16 %v2136
    %v2230 = vunpack.c.l.b16 %v2137
    %v2231 = vunpack.c.h.b16 %v2137
    %v2232 = vunpack.c.l.b16 %v2138
    %v2233 = vunpack.c.h.b16 %v2138
    %v2234 = vunpack.c.l.b16 %v2139
    %v2235 = vunpack.c.h.b16 %v2139
    %v2236 = vunpack.c.l.b16 %v2140
    %v2237 = vunpack.c.h.b16 %v2140
    %v2238 = vunpack.c.l.b16 %v2141
    %v2239 = vunpack.c.h.b16 %v2141
    %v2240 = vunpack.c.l.b16 %v2142
    %v2241 = vunpack.c.h.b16 %v2142
    %v2242 = vunpack.c.l.b16 %v2143
    %v2243 = vunpack.c.h.b16 %v2143
    %v2244 = vunpack.c.l.b16 %v2144
    %v2245 = vunpack.c.h.b16 %v2144
    %v2246 = vunpack.c.l.b16 %v2145
    %v2247 = vunpack.c.h.b16 %v2145
    %v2248 = vunpack.c.l.b16 %v2146
    %v2249 = vunpack.c.h.b16 %v2146
    %v2250 = vunpack.c.l.b16 %v2147
    %v2251 = vunpack.c.h.b16 %v2147
    %v2252 = vunpack.c.l.b16 %v2148
    %v2253 = vunpack.c.h.b16 %v2148
    %v2254 = vunpack.c.l.b16 %v2149
    %v2255 = vunpack.c.h.b16 %v2149
    %v2256 = vunpack.c.l.b16 %v2150
    %v2257 = vunpack.c.h.b16 %v2150
    %v2258 = vunpack.c.l.b16 %v2151
    %v2259 = vunpack.c.h.b16 %v2151
    %v2260 = vunpack.c.l.b16 %v2152
    %v2261 = vunpack.c.h.b16 %v2152
    %v2262 = vunpack.c.l.b16 %v2153
    %v2263 = vunpack.c.h.b16 %v2153
    %v2264 = vunpack.c.l.b16 %v2154
    %v2265 = vunpack.c.h.b16 %v2154
    %v2266 = vunpack.c.l.b16 %v2155
    %v2267 = vunpack.c.h.b16 %v2155
    %v2268 = vunpack.c.l.b16 %v2156
    %v2269 = vunpack.c.h.b16 %v2156
    %v2270 = vunpack.c.l.b16 %v2157
    %v2271 = vunpack.c.h.b16 %v2157
    %v2272 = vunpack.c.l.b16 %v2158
    %v2273 = vunpack.c.h.b16 %v2158
    %v2274 = vunpack.c.l.b16 %v2159
    %v2275 = vunpack.c.h.b16 %v2159
    %v2276 = vunpack.c.l.b16 %v2160
    %v2277 = vunpack.c.h.b16 %v2160
    %v2278 = vunpack.c.l.b16 %v2161
    %v2279 = vunpack.c.h.b16 %v2161
    %v2280 = vunpack.c.l.b16 %v2162
    %v2281 = vunpack.c.h.b16 %v2162
    %v2282 = vpack.c.b16 %v2222, %v2218
    %v2283 = vpack.c.b16 %v2223, %v2219
    %v2284 = vpack.c.b16 %v2224, %v2220
    %v2285 = vpack.c.b16 %v2225, %v2221
    %v2286 = vpack.c.b16 %v2230, %v2226
    %v2287 = vpack.c.b16 %v2231, %v2227
    %v2288 = vpack.c.b16 %v2232, %v2228
    %v2289 = vpack.c.b16 %v2233, %v2229
    %v2290 = vpack.c.b16 %v2238, %v2234
    %v2291 = vpack.c.b16 %v2239, %v2235
    %v2292 = vpack.c.b16 %v2240, %v2236
    %v2293 = vpack.c.b16 %v2241, %v2237
    %v2294 = vpack.c.b16 %v2246, %v2242
    %v2295 = vpack.c.b16 %v2247, %v2243
    %v2296 = vpack.c.b16 %v2248, %v2244
    %v2297 = vpack.c.b16 %v2249, %v2245
    %v2298 = vpack.c.b16 %v2254, %v2250
    %v2299 = vpack.c.b16 %v2255, %v2251
    %v2300 = vpack.c.b16 %v2256, %v2252
    %v2301 = vpack.c.b16 %v2257, %v2253
    %v2302 = vpack.c.b16 %v2262, %v2258
    %v2303 = vpack.c.b16 %v2263, %v2259
    %v2304 = vpack.c.b16 %v2264, %v2260
    %v2305 = vpack.c.b16 %v2265, %v2261
    %v2306 = vpack.c.b16 %v2270, %v2266
    %v2307 = vpack.c.b16 %v2271, %v2267
    %v2308 = vpack.c.b16 %v2272, %v2268
    %v2309 = vpack.c.b16 %v2273, %v2269
    %v2310 = vpack.c.b16 %v2278, %v2274
    %v2311 = vpack.c.b16 %v2279, %v2275
    %v2312 = vpack.c.b16 %v2280, %v2276
    %v2313 = vpack.c.b16 %v2281, %v2277
    %2346 = vmatprep.subr.bf16.mxu0 %v2311
    %2347 = vmatpush1.bf16.msra.mxu0 %v2310
    %2348 = vmatprep.subr.bf16.mxu0 %v2307
    %2349 = vmatpush1.bf16.msra.mxu0 %v2306
    %2350 = vmatprep.subr.bf16.mxu0 %v2303
    %2351 = vmatpush1.bf16.msra.mxu0 %v2302
    %2352 = vmatprep.subr.bf16.mxu0 %v2299
    %2353 = vmatpush1.bf16.msra.mxu0 %v2298
    %2354 = vmatprep.subr.bf16.mxu0 %v2295
    %2355 = vmatpush1.bf16.msra.mxu0 %v2294
    %2356 = vmatprep.subr.bf16.mxu0 %v2291
    %2357 = vmatpush1.bf16.msra.mxu0 %v2290
    %2358 = vmatprep.subr.bf16.mxu0 %v2287
    %2359 = vmatpush1.bf16.msra.mxu0 %v2286
    %2360 = vmatprep.subr.bf16.mxu0 %v2283
    %2361 = vmatpush1.bf16.msra.mxu0 %v2282
    %2362 = vmatprep.subr.bf16.mxu0 0
    %2363 = vmatpush2.bf16.msra.mxu0 0
    %2364 = vmatprep.subr.bf16.mxu0 0
    %2365 = vmatpush2.bf16.msra.mxu0 0
    %2366 = vmatprep.subr.bf16.mxu0 0
    %2367 = vmatpush2.bf16.msra.mxu0 0
    %2368 = vmatprep.subr.bf16.mxu0 0
    %2369 = vmatpush2.bf16.msra.mxu0 0
    %2370 = vmatprep.subr.bf16.mxu0 0
    %2371 = vmatpush2.bf16.msra.mxu0 0
    %2372 = vmatprep.subr.bf16.mxu0 0
    %2373 = vmatpush2.bf16.msra.mxu0 0
    %2374 = vmatprep.subr.bf16.mxu0 0
    %2375 = vmatpush2.bf16.msra.mxu0 0
    %2376 = vmatprep.subr.bf16.mxu0 0
    %2377 = vmatpush2.bf16.msra.mxu0 0
    %2378 = vmatprep.mubr.bf16.mxu0 0
    %2379 = vmatmul.mubr.bf16.gmra.mxu0 %v2129
    %v2380 = vpop.f32.mrf.mxu0
    %v2381 = vadd.f32 %v2169, %v2380
    %v2382 = vpop.f32.mrf.mxu0
    %v2383 = vadd.f32 %v2173, %v2382
    %v2384 = vpop.f32.mrf.mxu0
    %v2385 = vpop.f32.mrf.mxu0
    %2386 = vdwg.mxu0
    %2387 = vmatprep.subr.bf16.mxu0 %v2313
    %2388 = vmatpush1.bf16.msra.mxu0 %v2312
    %2389 = vmatprep.subr.bf16.mxu0 %v2309
    %2390 = vmatpush1.bf16.msra.mxu0 %v2308
    %2391 = vmatprep.subr.bf16.mxu0 %v2305
    %2392 = vmatpush1.bf16.msra.mxu0 %v2304
    %2393 = vmatprep.subr.bf16.mxu0 %v2301
    %2394 = vmatpush1.bf16.msra.mxu0 %v2300
    %2395 = vmatprep.subr.bf16.mxu0 %v2297
    %2396 = vmatpush1.bf16.msra.mxu0 %v2296
    %2397 = vmatprep.subr.bf16.mxu0 %v2293
    %2398 = vmatpush1.bf16.msra.mxu0 %v2292
    %2399 = vmatprep.subr.bf16.mxu0 %v2289
    %2400 = vmatpush1.bf16.msra.mxu0 %v2288
    %2401 = vmatprep.subr.bf16.mxu0 %v2285
    %2402 = vmatpush1.bf16.msra.mxu0 %v2284
    %2403 = vmatprep.subr.bf16.mxu0 0
    %2404 = vmatpush2.bf16.msra.mxu0 0
    %2405 = vmatprep.subr.bf16.mxu0 0
    %2406 = vmatpush2.bf16.msra.mxu0 0
    %2407 = vmatprep.subr.bf16.mxu0 0
    %2408 = vmatpush2.bf16.msra.mxu0 0
    %2409 = vmatprep.subr.bf16.mxu0 0
    %2410 = vmatpush2.bf16.msra.mxu0 0
    %2411 = vmatprep.subr.bf16.mxu0 0
    %2412 = vmatpush2.bf16.msra.mxu0 0
    %2413 = vmatprep.subr.bf16.mxu0 0
    %2414 = vmatpush2.bf16.msra.mxu0 0
    %2415 = vmatprep.subr.bf16.mxu0 0
    %2416 = vmatpush2.bf16.msra.mxu0 0
    %2417 = vmatprep.subr.bf16.mxu0 0
    %2418 = vmatpush2.bf16.msra.mxu0 0
    %2419 = vmatprep.mubr.bf16.mxu0 0
    %2420 = vmatmul.mubr.bf16.gmra.mxu0 %v2129
    %v2421 = vpop.f32.mrf.mxu0
    %v2422 = vadd.f32 %v2177, %v2421
    %v2423 = vpop.f32.mrf.mxu0
    %v2424 = vadd.f32 %v2181, %v2423
    %v2425 = vpop.f32.mrf.mxu0
    %v2426 = vpop.f32.mrf.mxu0
    %2427 = vdwg.mxu0
    %v2428 = vpack.c.bf16 %v2381, %v2381
    %v2429 = vpack.c.bf16 %v2383, %v2383
    %v2430 = vpack.c.bf16 %v2422, %v2422
    %2431 = vmatprep.subr.bf16.mxu0 0
    %2432 = vmatpush1.bf16.xpose.msra.mxu0 0
    %2433 = vmatprep.subr.bf16.mxu0 0
    %2434 = vmatpush1.bf16.xpose.msra.mxu0 0
    %2435 = vmatprep.subr.bf16.mxu0 0
    %2436 = vmatpush1.bf16.xpose.msra.mxu0 0
    %2437 = vmatprep.subr.bf16.mxu0 0
    %2438 = vmatpush1.bf16.xpose.msra.mxu0 0
    %2439 = vmatprep.subr.bf16.mxu0 0
    %2440 = vmatpush1.bf16.xpose.msra.mxu0 0
    %2441 = vmatprep.subr.bf16.mxu0 0
    %2442 = vmatpush1.bf16.xpose.msra.mxu0 0
    %2443 = vmatprep.subr.bf16.mxu0 0
    %2444 = vmatpush1.bf16.xpose.msra.mxu0 0
    %2445 = vmatprep.subr.bf16.mxu0 0
    %2446 = vmatpush1.bf16.xpose.msra.mxu0 %v2429
    %2447 = vmatprep.subr.bf16.mxu0 0
    %2448 = vmatpush2.bf16.xpose.msra.mxu0 0
    %2449 = vmatprep.subr.bf16.mxu0 0
    %2450 = vmatpush2.bf16.xpose.msra.mxu0 0
    %2451 = vmatprep.subr.bf16.mxu0 0
    %2452 = vmatpush2.bf16.xpose.msra.mxu0 0
    %2453 = vmatprep.subr.bf16.mxu0 0
    %2454 = vmatpush2.bf16.xpose.msra.mxu0 0
    %2455 = vmatprep.subr.bf16.mxu0 0
    %2456 = vmatpush2.bf16.xpose.msra.mxu0 0
    %2457 = vmatprep.subr.bf16.mxu0 0
    %2458 = vmatpush2.bf16.xpose.msra.mxu0 0
    %2459 = vmatprep.subr.bf16.mxu0 0
    %2460 = vmatpush2.bf16.xpose.msra.mxu0 0
    %2461 = vmatprep.subr.bf16.mxu0 0
    %2462 = vmatpush2.bf16.xpose.msra.mxu0 0
    %2463 = vmatprep.mubr.bf16.mxu0 0
    %2464 = vmatmul.mubr.bf16.gmra.mxu0 %v2428
    %v2465 = vpop.f32.mrf.mxu0
    %v2466 = vadd.f32 %v380, %v2465
    %v2467 = vpop.f32.mrf.mxu0
    %v2468 = vpop.f32.mrf.mxu0
    %v2469 = vpop.f32.mrf.mxu0
    %2470 = vdwg.mxu0
    %v2471 = vsel %vm421, %v2466, -inf
    %2472 = vmax.xlane.f32.xlu0 %v2471
    %v2473 = vpop.xlane.xlu0 %2472
    %v2474 = vsub.f32 %v2466, %v2473
    %v2475 = vpack.c.bf16 %v2474, %v2474
    %v2477 = vmul.bf16 %v2475, 1069105081
    %v2478 = vpow.bf16.pop %v2477
    %v2479 = vunpack.c.l.bf16 %v2478
    %v2480 = vsel %vm421, %v2479, 0.0
    %2481 = vadd.xlane.f32.xlu0 %v2480
    %v2482 = vpop.xlane.xlu0 %2481
    %v2483 = vrcp.pop %v2482
    %v2484 = vpack.c.bf16 %v2483, %v2483
    %v2485 = vmul.bf16 %v2478, %v2484
    %v2487 = vsel %vm421, %v2485, 0
    %v2490 = vsel %vm440, %v2430, 0
    %2492 = vmatprep.subr.bf16.mxu0 0
    %2493 = vmatpush1.bf16.msra.mxu0 0
    %2494 = vmatprep.subr.bf16.mxu0 0
    %2495 = vmatpush1.bf16.msra.mxu0 0
    %2496 = vmatprep.subr.bf16.mxu0 0
    %2497 = vmatpush1.bf16.msra.mxu0 0
    %2498 = vmatprep.subr.bf16.mxu0 0
    %2499 = vmatpush1.bf16.msra.mxu0 0
    %2500 = vmatprep.subr.bf16.mxu0 0
    %2501 = vmatpush1.bf16.msra.mxu0 0
    %2502 = vmatprep.subr.bf16.mxu0 0
    %2503 = vmatpush1.bf16.msra.mxu0 0
    %2504 = vmatprep.subr.bf16.mxu0 0
    %2505 = vmatpush1.bf16.msra.mxu0 0
    %2506 = vmatprep.subr.bf16.mxu0 0
    %2507 = vmatpush1.bf16.msra.mxu0 %v2490
    %2508 = vmatprep.subr.bf16.mxu0 0
    %2509 = vmatpush2.bf16.msra.mxu0 0
    %2510 = vmatprep.subr.bf16.mxu0 0
    %2511 = vmatpush2.bf16.msra.mxu0 0
    %2512 = vmatprep.subr.bf16.mxu0 0
    %2513 = vmatpush2.bf16.msra.mxu0 0
    %2514 = vmatprep.subr.bf16.mxu0 0
    %2515 = vmatpush2.bf16.msra.mxu0 0
    %2516 = vmatprep.subr.bf16.mxu0 0
    %2517 = vmatpush2.bf16.msra.mxu0 0
    %2518 = vmatprep.subr.bf16.mxu0 0
    %2519 = vmatpush2.bf16.msra.mxu0 0
    %2520 = vmatprep.subr.bf16.mxu0 0
    %2521 = vmatpush2.bf16.msra.mxu0 0
    %2522 = vmatprep.subr.bf16.mxu0 0
    %2523 = vmatpush2.bf16.msra.mxu0 0
    %2524 = vmatprep.mubr.bf16.mxu0 0
    %2525 = vmatmul.mubr.bf16.gmra.mxu0 %v2487
    %v2526 = vpop.f32.mrf.mxu0
    %v2527 = vadd.f32 0.0, %v2526
    %v2528 = vpop.f32.mrf.mxu0
    %v2529 = vpop.f32.mrf.mxu0
    %v2530 = vpop.f32.mrf.mxu0
    %2531 = vdwg.mxu0
    %v2532 = vmul.f32 %v2527, %v487
    %v2533 = vadd.f32 %v2532, %v2424
    %v2534 = vpack.c.bf16 %v2533, %v2533
    %s2535 = scalar_lea.vmem [#allocation4], 1536
    %v2536 = vld [vmem:[%s2535] sm:$0xff]
    %v2537 = vld [vmem:[%s2535 + $0x8] sm:$0xff]
    %v2538 = vld [vmem:[%s2535 + $0x10] sm:$0xff]
    %v2539 = vld [vmem:[%s2535 + $0x18] sm:$0xff]
    %v2540 = vld [vmem:[%s2535 + $0x20] sm:$0xff]
    %v2541 = vld [vmem:[%s2535 + $0x28] sm:$0xff]
    %v2542 = vld [vmem:[%s2535 + $0x30] sm:$0xff]
    %v2543 = vld [vmem:[%s2535 + $0x38] sm:$0xff]
    %v2544 = vld [vmem:[%s2535 + $0x40] sm:$0xff]
    %v2545 = vld [vmem:[%s2535 + $0x48] sm:$0xff]
    %v2546 = vld [vmem:[%s2535 + $0x50] sm:$0xff]
    %v2547 = vld [vmem:[%s2535 + $0x58] sm:$0xff]
    %v2548 = vld [vmem:[%s2535 + $0x60] sm:$0xff]
    %v2549 = vld [vmem:[%s2535 + $0x68] sm:$0xff]
    %v2550 = vld [vmem:[%s2535 + $0x70] sm:$0xff]
    %v2551 = vld [vmem:[%s2535 + $0x78] sm:$0xff]
    %v2552 = vld [vmem:[%s2535 + $0x80] sm:$0xff]
    %v2553 = vld [vmem:[%s2535 + $0x88] sm:$0xff]
    %v2554 = vld [vmem:[%s2535 + $0x90] sm:$0xff]
    %v2555 = vld [vmem:[%s2535 + $0x98] sm:$0xff]
    %v2556 = vld [vmem:[%s2535 + $0xa0] sm:$0xff]
    %v2557 = vld [vmem:[%s2535 + $0xa8] sm:$0xff]
    %v2558 = vld [vmem:[%s2535 + $0xb0] sm:$0xff]
    %v2559 = vld [vmem:[%s2535 + $0xb8] sm:$0xff]
    %v2560 = vld [vmem:[%s2535 + $0xc0] sm:$0xff]
    %v2561 = vld [vmem:[%s2535 + $0xc8] sm:$0xff]
    %v2562 = vld [vmem:[%s2535 + $0xd0] sm:$0xff]
    %v2563 = vld [vmem:[%s2535 + $0xd8] sm:$0xff]
    %v2564 = vld [vmem:[%s2535 + $0xe0] sm:$0xff]
    %v2565 = vld [vmem:[%s2535 + $0xe8] sm:$0xff]
    %v2566 = vld [vmem:[%s2535 + $0xf0] sm:$0xff]
    %v2567 = vld [vmem:[%s2535 + $0xf8] sm:$0xff]
    %s2568 = scalar_lea.vmem [#allocation6], 24
    %v2569 = vld [vmem:[%s2568] sm:$0xf]
    %v2571 = vlaneseq
    %v2572 = vshrl.u32 %v2571, 7
    %v2573 = vsub.s32 0, %v2572
    %v2574 = vrot.slane %v2569, %v2573
    %v2575 = vlaneseq
    %v2576 = vshrl.u32 %v2575, 7
    %v2577 = vsub.s32 1, %v2576
    %v2578 = vrot.slane %v2569, %v2577
    %v2579 = vlaneseq
    %v2580 = vshrl.u32 %v2579, 7
    %v2581 = vsub.s32 2, %v2580
    %v2582 = vrot.slane %v2569, %v2581
    %v2583 = vlaneseq
    %v2584 = vshrl.u32 %v2583, 7
    %v2585 = vsub.s32 3, %v2584
    %v2586 = vrot.slane %v2569, %v2585
    %v2623 = vunpack.c.l.b16 %v2536
    %v2624 = vunpack.c.h.b16 %v2536
    %v2625 = vunpack.c.l.b16 %v2537
    %v2626 = vunpack.c.h.b16 %v2537
    %v2627 = vunpack.c.l.b16 %v2538
    %v2628 = vunpack.c.h.b16 %v2538
    %v2629 = vunpack.c.l.b16 %v2539
    %v2630 = vunpack.c.h.b16 %v2539
    %v2631 = vunpack.c.l.b16 %v2540
    %v2632 = vunpack.c.h.b16 %v2540
    %v2633 = vunpack.c.l.b16 %v2541
    %v2634 = vunpack.c.h.b16 %v2541
    %v2635 = vunpack.c.l.b16 %v2542
    %v2636 = vunpack.c.h.b16 %v2542
    %v2637 = vunpack.c.l.b16 %v2543
    %v2638 = vunpack.c.h.b16 %v2543
    %v2639 = vunpack.c.l.b16 %v2544
    %v2640 = vunpack.c.h.b16 %v2544
    %v2641 = vunpack.c.l.b16 %v2545
    %v2642 = vunpack.c.h.b16 %v2545
    %v2643 = vunpack.c.l.b16 %v2546
    %v2644 = vunpack.c.h.b16 %v2546
    %v2645 = vunpack.c.l.b16 %v2547
    %v2646 = vunpack.c.h.b16 %v2547
    %v2647 = vunpack.c.l.b16 %v2548
    %v2648 = vunpack.c.h.b16 %v2548
    %v2649 = vunpack.c.l.b16 %v2549
    %v2650 = vunpack.c.h.b16 %v2549
    %v2651 = vunpack.c.l.b16 %v2550
    %v2652 = vunpack.c.h.b16 %v2550
    %v2653 = vunpack.c.l.b16 %v2551
    %v2654 = vunpack.c.h.b16 %v2551
    %v2655 = vunpack.c.l.b16 %v2552
    %v2656 = vunpack.c.h.b16 %v2552
    %v2657 = vunpack.c.l.b16 %v2553
    %v2658 = vunpack.c.h.b16 %v2553
    %v2659 = vunpack.c.l.b16 %v2554
    %v2660 = vunpack.c.h.b16 %v2554
    %v2661 = vunpack.c.l.b16 %v2555
    %v2662 = vunpack.c.h.b16 %v2555
    %v2663 = vunpack.c.l.b16 %v2556
    %v2664 = vunpack.c.h.b16 %v2556
    %v2665 = vunpack.c.l.b16 %v2557
    %v2666 = vunpack.c.h.b16 %v2557
    %v2667 = vunpack.c.l.b16 %v2558
    %v2668 = vunpack.c.h.b16 %v2558
    %v2669 = vunpack.c.l.b16 %v2559
    %v2670 = vunpack.c.h.b16 %v2559
    %v2671 = vunpack.c.l.b16 %v2560
    %v2672 = vunpack.c.h.b16 %v2560
    %v2673 = vunpack.c.l.b16 %v2561
    %v2674 = vunpack.c.h.b16 %v2561
    %v2675 = vunpack.c.l.b16 %v2562
    %v2676 = vunpack.c.h.b16 %v2562
    %v2677 = vunpack.c.l.b16 %v2563
    %v2678 = vunpack.c.h.b16 %v2563
    %v2679 = vunpack.c.l.b16 %v2564
    %v2680 = vunpack.c.h.b16 %v2564
    %v2681 = vunpack.c.l.b16 %v2565
    %v2682 = vunpack.c.h.b16 %v2565
    %v2683 = vunpack.c.l.b16 %v2566
    %v2684 = vunpack.c.h.b16 %v2566
    %v2685 = vunpack.c.l.b16 %v2567
    %v2686 = vunpack.c.h.b16 %v2567
    %v2687 = vpack.c.b16 %v2627, %v2623
    %v2688 = vpack.c.b16 %v2628, %v2624
    %v2689 = vpack.c.b16 %v2629, %v2625
    %v2690 = vpack.c.b16 %v2630, %v2626
    %v2691 = vpack.c.b16 %v2635, %v2631
    %v2692 = vpack.c.b16 %v2636, %v2632
    %v2693 = vpack.c.b16 %v2637, %v2633
    %v2694 = vpack.c.b16 %v2638, %v2634
    %v2695 = vpack.c.b16 %v2643, %v2639
    %v2696 = vpack.c.b16 %v2644, %v2640
    %v2697 = vpack.c.b16 %v2645, %v2641
    %v2698 = vpack.c.b16 %v2646, %v2642
    %v2699 = vpack.c.b16 %v2651, %v2647
    %v2700 = vpack.c.b16 %v2652, %v2648
    %v2701 = vpack.c.b16 %v2653, %v2649
    %v2702 = vpack.c.b16 %v2654, %v2650
    %v2703 = vpack.c.b16 %v2659, %v2655
    %v2704 = vpack.c.b16 %v2660, %v2656
    %v2705 = vpack.c.b16 %v2661, %v2657
    %v2706 = vpack.c.b16 %v2662, %v2658
    %v2707 = vpack.c.b16 %v2667, %v2663
    %v2708 = vpack.c.b16 %v2668, %v2664
    %v2709 = vpack.c.b16 %v2669, %v2665
    %v2710 = vpack.c.b16 %v2670, %v2666
    %v2711 = vpack.c.b16 %v2675, %v2671
    %v2712 = vpack.c.b16 %v2676, %v2672
    %v2713 = vpack.c.b16 %v2677, %v2673
    %v2714 = vpack.c.b16 %v2678, %v2674
    %v2715 = vpack.c.b16 %v2683, %v2679
    %v2716 = vpack.c.b16 %v2684, %v2680
    %v2717 = vpack.c.b16 %v2685, %v2681
    %v2718 = vpack.c.b16 %v2686, %v2682
    %2751 = vmatprep.subr.bf16.mxu0 %v2716
    %2752 = vmatpush1.bf16.msra.mxu0 %v2715
    %2753 = vmatprep.subr.bf16.mxu0 %v2712
    %2754 = vmatpush1.bf16.msra.mxu0 %v2711
    %2755 = vmatprep.subr.bf16.mxu0 %v2708
    %2756 = vmatpush1.bf16.msra.mxu0 %v2707
    %2757 = vmatprep.subr.bf16.mxu0 %v2704
    %2758 = vmatpush1.bf16.msra.mxu0 %v2703
    %2759 = vmatprep.subr.bf16.mxu0 %v2700
    %2760 = vmatpush1.bf16.msra.mxu0 %v2699
    %2761 = vmatprep.subr.bf16.mxu0 %v2696
    %2762 = vmatpush1.bf16.msra.mxu0 %v2695
    %2763 = vmatprep.subr.bf16.mxu0 %v2692
    %2764 = vmatpush1.bf16.msra.mxu0 %v2691
    %2765 = vmatprep.subr.bf16.mxu0 %v2688
    %2766 = vmatpush1.bf16.msra.mxu0 %v2687
    %2767 = vmatprep.subr.bf16.mxu0 0
    %2768 = vmatpush2.bf16.msra.mxu0 0
    %2769 = vmatprep.subr.bf16.mxu0 0
    %2770 = vmatpush2.bf16.msra.mxu0 0
    %2771 = vmatprep.subr.bf16.mxu0 0
    %2772 = vmatpush2.bf16.msra.mxu0 0
    %2773 = vmatprep.subr.bf16.mxu0 0
    %2774 = vmatpush2.bf16.msra.mxu0 0
    %2775 = vmatprep.subr.bf16.mxu0 0
    %2776 = vmatpush2.bf16.msra.mxu0 0
    %2777 = vmatprep.subr.bf16.mxu0 0
    %2778 = vmatpush2.bf16.msra.mxu0 0
    %2779 = vmatprep.subr.bf16.mxu0 0
    %2780 = vmatpush2.bf16.msra.mxu0 0
    %2781 = vmatprep.subr.bf16.mxu0 0
    %2782 = vmatpush2.bf16.msra.mxu0 0
    %2783 = vmatprep.mubr.bf16.mxu0 0
    %2784 = vmatmul.mubr.bf16.gmra.mxu0 %v2534
    %v2785 = vpop.f32.mrf.mxu0
    %v2786 = vadd.f32 %v2574, %v2785
    %v2787 = vpop.f32.mrf.mxu0
    %v2788 = vadd.f32 %v2578, %v2787
    %v2789 = vpop.f32.mrf.mxu0
    %v2790 = vpop.f32.mrf.mxu0
    %2791 = vdwg.mxu0
    %2792 = vmatprep.subr.bf16.mxu0 %v2718
    %2793 = vmatpush1.bf16.msra.mxu0 %v2717
    %2794 = vmatprep.subr.bf16.mxu0 %v2714
    %2795 = vmatpush1.bf16.msra.mxu0 %v2713
    %2796 = vmatprep.subr.bf16.mxu0 %v2710
    %2797 = vmatpush1.bf16.msra.mxu0 %v2709
    %2798 = vmatprep.subr.bf16.mxu0 %v2706
    %2799 = vmatpush1.bf16.msra.mxu0 %v2705
    %2800 = vmatprep.subr.bf16.mxu0 %v2702
    %2801 = vmatpush1.bf16.msra.mxu0 %v2701
    %2802 = vmatprep.subr.bf16.mxu0 %v2698
    %2803 = vmatpush1.bf16.msra.mxu0 %v2697
    %2804 = vmatprep.subr.bf16.mxu0 %v2694
    %2805 = vmatpush1.bf16.msra.mxu0 %v2693
    %2806 = vmatprep.subr.bf16.mxu0 %v2690
    %2807 = vmatpush1.bf16.msra.mxu0 %v2689
    %2808 = vmatprep.subr.bf16.mxu0 0
    %2809 = vmatpush2.bf16.msra.mxu0 0
    %2810 = vmatprep.subr.bf16.mxu0 0
    %2811 = vmatpush2.bf16.msra.mxu0 0
    %2812 = vmatprep.subr.bf16.mxu0 0
    %2813 = vmatpush2.bf16.msra.mxu0 0
    %2814 = vmatprep.subr.bf16.mxu0 0
    %2815 = vmatpush2.bf16.msra.mxu0 0
    %2816 = vmatprep.subr.bf16.mxu0 0
    %2817 = vmatpush2.bf16.msra.mxu0 0
    %2818 = vmatprep.subr.bf16.mxu0 0
    %2819 = vmatpush2.bf16.msra.mxu0 0
    %2820 = vmatprep.subr.bf16.mxu0 0
    %2821 = vmatpush2.bf16.msra.mxu0 0
    %2822 = vmatprep.subr.bf16.mxu0 0
    %2823 = vmatpush2.bf16.msra.mxu0 0
    %2824 = vmatprep.mubr.bf16.mxu0 0
    %2825 = vmatmul.mubr.bf16.gmra.mxu0 %v2534
    %v2826 = vpop.f32.mrf.mxu0
    %v2827 = vadd.f32 %v2582, %v2826
    %v2828 = vpop.f32.mrf.mxu0
    %v2829 = vadd.f32 %v2586, %v2828
    %v2830 = vpop.f32.mrf.mxu0
    %v2831 = vpop.f32.mrf.mxu0
    %2832 = vdwg.mxu0
    %v2833 = vpack.c.bf16 %v2786, %v2786
    %v2834 = vpack.c.bf16 %v2788, %v2788
    %v2835 = vpack.c.bf16 %v2827, %v2827
    %2836 = vmatprep.subr.bf16.mxu0 0
    %2837 = vmatpush1.bf16.xpose.msra.mxu0 0
    %2838 = vmatprep.subr.bf16.mxu0 0
    %2839 = vmatpush1.bf16.xpose.msra.mxu0 0
    %2840 = vmatprep.subr.bf16.mxu0 0
    %2841 = vmatpush1.bf16.xpose.msra.mxu0 0
    %2842 = vmatprep.subr.bf16.mxu0 0
    %2843 = vmatpush1.bf16.xpose.msra.mxu0 0
    %2844 = vmatprep.subr.bf16.mxu0 0
    %2845 = vmatpush1.bf16.xpose.msra.mxu0 0
    %2846 = vmatprep.subr.bf16.mxu0 0
    %2847 = vmatpush1.bf16.xpose.msra.mxu0 0
    %2848 = vmatprep.subr.bf16.mxu0 0
    %2849 = vmatpush1.bf16.xpose.msra.mxu0 0
    %2850 = vmatprep.subr.bf16.mxu0 0
    %2851 = vmatpush1.bf16.xpose.msra.mxu0 %v2834
    %2852 = vmatprep.subr.bf16.mxu0 0
    %2853 = vmatpush2.bf16.xpose.msra.mxu0 0
    %2854 = vmatprep.subr.bf16.mxu0 0
    %2855 = vmatpush2.bf16.xpose.msra.mxu0 0
    %2856 = vmatprep.subr.bf16.mxu0 0
    %2857 = vmatpush2.bf16.xpose.msra.mxu0 0
    %2858 = vmatprep.subr.bf16.mxu0 0
    %2859 = vmatpush2.bf16.xpose.msra.mxu0 0
    %2860 = vmatprep.subr.bf16.mxu0 0
    %2861 = vmatpush2.bf16.xpose.msra.mxu0 0
    %2862 = vmatprep.subr.bf16.mxu0 0
    %2863 = vmatpush2.bf16.xpose.msra.mxu0 0
    %2864 = vmatprep.subr.bf16.mxu0 0
    %2865 = vmatpush2.bf16.xpose.msra.mxu0 0
    %2866 = vmatprep.subr.bf16.mxu0 0
    %2867 = vmatpush2.bf16.xpose.msra.mxu0 0
    %2868 = vmatprep.mubr.bf16.mxu0 0
    %2869 = vmatmul.mubr.bf16.gmra.mxu0 %v2833
    %v2870 = vpop.f32.mrf.mxu0
    %v2871 = vadd.f32 %v380, %v2870
    %v2872 = vpop.f32.mrf.mxu0
    %v2873 = vpop.f32.mrf.mxu0
    %v2874 = vpop.f32.mrf.mxu0
    %2875 = vdwg.mxu0
    %v2876 = vsel %vm421, %v2871, -inf
    %2877 = vmax.xlane.f32.xlu0 %v2876
    %v2878 = vpop.xlane.xlu0 %2877
    %v2879 = vsub.f32 %v2871, %v2878
    %v2880 = vpack.c.bf16 %v2879, %v2879
    %v2882 = vmul.bf16 %v2880, 1069105081
    %v2883 = vpow.bf16.pop %v2882
    %v2884 = vunpack.c.l.bf16 %v2883
    %v2885 = vsel %vm421, %v2884, 0.0
    %2886 = vadd.xlane.f32.xlu0 %v2885
    %v2887 = vpop.xlane.xlu0 %2886
    %v2888 = vrcp.pop %v2887
    %v2889 = vpack.c.bf16 %v2888, %v2888
    %v2890 = vmul.bf16 %v2883, %v2889
    %v2892 = vsel %vm421, %v2890, 0
    %v2895 = vsel %vm440, %v2835, 0
    %2897 = vmatprep.subr.bf16.mxu0 0
    %2898 = vmatpush1.bf16.msra.mxu0 0
    %2899 = vmatprep.subr.bf16.mxu0 0
    %2900 = vmatpush1.bf16.msra.mxu0 0
    %2901 = vmatprep.subr.bf16.mxu0 0
    %2902 = vmatpush1.bf16.msra.mxu0 0
    %2903 = vmatprep.subr.bf16.mxu0 0
    %2904 = vmatpush1.bf16.msra.mxu0 0
    %2905 = vmatprep.subr.bf16.mxu0 0
    %2906 = vmatpush1.bf16.msra.mxu0 0
    %2907 = vmatprep.subr.bf16.mxu0 0
    %2908 = vmatpush1.bf16.msra.mxu0 0
    %2909 = vmatprep.subr.bf16.mxu0 0
    %2910 = vmatpush1.bf16.msra.mxu0 0
    %2911 = vmatprep.subr.bf16.mxu0 0
    %2912 = vmatpush1.bf16.msra.mxu0 %v2895
    %2913 = vmatprep.subr.bf16.mxu0 0
    %2914 = vmatpush2.bf16.msra.mxu0 0
    %2915 = vmatprep.subr.bf16.mxu0 0
    %2916 = vmatpush2.bf16.msra.mxu0 0
    %2917 = vmatprep.subr.bf16.mxu0 0
    %2918 = vmatpush2.bf16.msra.mxu0 0
    %2919 = vmatprep.subr.bf16.mxu0 0
    %2920 = vmatpush2.bf16.msra.mxu0 0
    %2921 = vmatprep.subr.bf16.mxu0 0
    %2922 = vmatpush2.bf16.msra.mxu0 0
    %2923 = vmatprep.subr.bf16.mxu0 0
    %2924 = vmatpush2.bf16.msra.mxu0 0
    %2925 = vmatprep.subr.bf16.mxu0 0
    %2926 = vmatpush2.bf16.msra.mxu0 0
    %2927 = vmatprep.subr.bf16.mxu0 0
    %2928 = vmatpush2.bf16.msra.mxu0 0
    %2929 = vmatprep.mubr.bf16.mxu0 0
    %2930 = vmatmul.mubr.bf16.gmra.mxu0 %v2892
    %v2931 = vpop.f32.mrf.mxu0
    %v2932 = vadd.f32 0.0, %v2931
    %v2933 = vpop.f32.mrf.mxu0
    %v2934 = vpop.f32.mrf.mxu0
    %v2935 = vpop.f32.mrf.mxu0
    %2936 = vdwg.mxu0
    %v2937 = vmul.f32 %v2932, %v487
    %v2938 = vadd.f32 %v2937, %v2829
    %vm2939 = vcmp.gt.f32.partialorder %v2938, 0.0
    %v2940 = vmin.f32 %v2938, 0.0
    %v2941 = vmul.f32 %v2940, 1.442695
    %v2942 = vpow.pop %v2941
    %v2943 = vsub.f32 %v2942, 1.0
    %v2944 = vsel %vm2939, %v2938, %v2943
    %v2945 = vpack.c.bf16 %v2944, %v2944
    %s2946 = scalar_lea.vmem [#allocation4], 1792
    %v2947 = vld [vmem:[%s2946] sm:$0xff]
    %v2948 = vld [vmem:[%s2946 + $0x8] sm:$0xff]
    %v2949 = vld [vmem:[%s2946 + $0x10] sm:$0xff]
    %v2950 = vld [vmem:[%s2946 + $0x18] sm:$0xff]
    %v2951 = vld [vmem:[%s2946 + $0x20] sm:$0xff]
    %v2952 = vld [vmem:[%s2946 + $0x28] sm:$0xff]
    %v2953 = vld [vmem:[%s2946 + $0x30] sm:$0xff]
    %v2954 = vld [vmem:[%s2946 + $0x38] sm:$0xff]
    %v2955 = vld [vmem:[%s2946 + $0x40] sm:$0xff]
    %v2956 = vld [vmem:[%s2946 + $0x48] sm:$0xff]
    %v2957 = vld [vmem:[%s2946 + $0x50] sm:$0xff]
    %v2958 = vld [vmem:[%s2946 + $0x58] sm:$0xff]
    %v2959 = vld [vmem:[%s2946 + $0x60] sm:$0xff]
    %v2960 = vld [vmem:[%s2946 + $0x68] sm:$0xff]
    %v2961 = vld [vmem:[%s2946 + $0x70] sm:$0xff]
    %v2962 = vld [vmem:[%s2946 + $0x78] sm:$0xff]
    %v2963 = vld [vmem:[%s2946 + $0x80] sm:$0xff]
    %v2964 = vld [vmem:[%s2946 + $0x88] sm:$0xff]
    %v2965 = vld [vmem:[%s2946 + $0x90] sm:$0xff]
    %v2966 = vld [vmem:[%s2946 + $0x98] sm:$0xff]
    %v2967 = vld [vmem:[%s2946 + $0xa0] sm:$0xff]
    %v2968 = vld [vmem:[%s2946 + $0xa8] sm:$0xff]
    %v2969 = vld [vmem:[%s2946 + $0xb0] sm:$0xff]
    %v2970 = vld [vmem:[%s2946 + $0xb8] sm:$0xff]
    %v2971 = vld [vmem:[%s2946 + $0xc0] sm:$0xff]
    %v2972 = vld [vmem:[%s2946 + $0xc8] sm:$0xff]
    %v2973 = vld [vmem:[%s2946 + $0xd0] sm:$0xff]
    %v2974 = vld [vmem:[%s2946 + $0xd8] sm:$0xff]
    %v2975 = vld [vmem:[%s2946 + $0xe0] sm:$0xff]
    %v2976 = vld [vmem:[%s2946 + $0xe8] sm:$0xff]
    %v2977 = vld [vmem:[%s2946 + $0xf0] sm:$0xff]
    %v2978 = vld [vmem:[%s2946 + $0xf8] sm:$0xff]
    %s2979 = scalar_lea.vmem [#allocation6], 28
    %v2980 = vld [vmem:[%s2979] sm:$0xf]
    %v2982 = vlaneseq
    %v2983 = vshrl.u32 %v2982, 7
    %v2984 = vsub.s32 0, %v2983
    %v2985 = vrot.slane %v2980, %v2984
    %v2986 = vlaneseq
    %v2987 = vshrl.u32 %v2986, 7
    %v2988 = vsub.s32 1, %v2987
    %v2989 = vrot.slane %v2980, %v2988
    %v2990 = vlaneseq
    %v2991 = vshrl.u32 %v2990, 7
    %v2992 = vsub.s32 2, %v2991
    %v2993 = vrot.slane %v2980, %v2992
    %v2994 = vlaneseq
    %v2995 = vshrl.u32 %v2994, 7
    %v2996 = vsub.s32 3, %v2995
    %v2997 = vrot.slane %v2980, %v2996
    %v3034 = vunpack.c.l.b16 %v2947
    %v3035 = vunpack.c.h.b16 %v2947
    %v3036 = vunpack.c.l.b16 %v2948
    %v3037 = vunpack.c.h.b16 %v2948
    %v3038 = vunpack.c.l.b16 %v2949
    %v3039 = vunpack.c.h.b16 %v2949
    %v3040 = vunpack.c.l.b16 %v2950
    %v3041 = vunpack.c.h.b16 %v2950
    %v3042 = vunpack.c.l.b16 %v2951
    %v3043 = vunpack.c.h.b16 %v2951
    %v3044 = vunpack.c.l.b16 %v2952
    %v3045 = vunpack.c.h.b16 %v2952
    %v3046 = vunpack.c.l.b16 %v2953
    %v3047 = vunpack.c.h.b16 %v2953
    %v3048 = vunpack.c.l.b16 %v2954
    %v3049 = vunpack.c.h.b16 %v2954
    %v3050 = vunpack.c.l.b16 %v2955
    %v3051 = vunpack.c.h.b16 %v2955
    %v3052 = vunpack.c.l.b16 %v2956
    %v3053 = vunpack.c.h.b16 %v2956
    %v3054 = vunpack.c.l.b16 %v2957
    %v3055 = vunpack.c.h.b16 %v2957
    %v3056 = vunpack.c.l.b16 %v2958
    %v3057 = vunpack.c.h.b16 %v2958
    %v3058 = vunpack.c.l.b16 %v2959
    %v3059 = vunpack.c.h.b16 %v2959
    %v3060 = vunpack.c.l.b16 %v2960
    %v3061 = vunpack.c.h.b16 %v2960
    %v3062 = vunpack.c.l.b16 %v2961
    %v3063 = vunpack.c.h.b16 %v2961
    %v3064 = vunpack.c.l.b16 %v2962
    %v3065 = vunpack.c.h.b16 %v2962
    %v3066 = vunpack.c.l.b16 %v2963
    %v3067 = vunpack.c.h.b16 %v2963
    %v3068 = vunpack.c.l.b16 %v2964
    %v3069 = vunpack.c.h.b16 %v2964
    %v3070 = vunpack.c.l.b16 %v2965
    %v3071 = vunpack.c.h.b16 %v2965
    %v3072 = vunpack.c.l.b16 %v2966
    %v3073 = vunpack.c.h.b16 %v2966
    %v3074 = vunpack.c.l.b16 %v2967
    %v3075 = vunpack.c.h.b16 %v2967
    %v3076 = vunpack.c.l.b16 %v2968
    %v3077 = vunpack.c.h.b16 %v2968
    %v3078 = vunpack.c.l.b16 %v2969
    %v3079 = vunpack.c.h.b16 %v2969
    %v3080 = vunpack.c.l.b16 %v2970
    %v3081 = vunpack.c.h.b16 %v2970
    %v3082 = vunpack.c.l.b16 %v2971
    %v3083 = vunpack.c.h.b16 %v2971
    %v3084 = vunpack.c.l.b16 %v2972
    %v3085 = vunpack.c.h.b16 %v2972
    %v3086 = vunpack.c.l.b16 %v2973
    %v3087 = vunpack.c.h.b16 %v2973
    %v3088 = vunpack.c.l.b16 %v2974
    %v3089 = vunpack.c.h.b16 %v2974
    %v3090 = vunpack.c.l.b16 %v2975
    %v3091 = vunpack.c.h.b16 %v2975
    %v3092 = vunpack.c.l.b16 %v2976
    %v3093 = vunpack.c.h.b16 %v2976
    %v3094 = vunpack.c.l.b16 %v2977
    %v3095 = vunpack.c.h.b16 %v2977
    %v3096 = vunpack.c.l.b16 %v2978
    %v3097 = vunpack.c.h.b16 %v2978
    %v3098 = vpack.c.b16 %v3038, %v3034
    %v3099 = vpack.c.b16 %v3039, %v3035
    %v3100 = vpack.c.b16 %v3040, %v3036
    %v3101 = vpack.c.b16 %v3041, %v3037
    %v3102 = vpack.c.b16 %v3046, %v3042
    %v3103 = vpack.c.b16 %v3047, %v3043
    %v3104 = vpack.c.b16 %v3048, %v3044
    %v3105 = vpack.c.b16 %v3049, %v3045
    %v3106 = vpack.c.b16 %v3054, %v3050
    %v3107 = vpack.c.b16 %v3055, %v3051
    %v3108 = vpack.c.b16 %v3056, %v3052
    %v3109 = vpack.c.b16 %v3057, %v3053
    %v3110 = vpack.c.b16 %v3062, %v3058
    %v3111 = vpack.c.b16 %v3063, %v3059
    %v3112 = vpack.c.b16 %v3064, %v3060
    %v3113 = vpack.c.b16 %v3065, %v3061
    %v3114 = vpack.c.b16 %v3070, %v3066
    %v3115 = vpack.c.b16 %v3071, %v3067
    %v3116 = vpack.c.b16 %v3072, %v3068
    %v3117 = vpack.c.b16 %v3073, %v3069
    %v3118 = vpack.c.b16 %v3078, %v3074
    %v3119 = vpack.c.b16 %v3079, %v3075
    %v3120 = vpack.c.b16 %v3080, %v3076
    %v3121 = vpack.c.b16 %v3081, %v3077
    %v3122 = vpack.c.b16 %v3086, %v3082
    %v3123 = vpack.c.b16 %v3087, %v3083
    %v3124 = vpack.c.b16 %v3088, %v3084
    %v3125 = vpack.c.b16 %v3089, %v3085
    %v3126 = vpack.c.b16 %v3094, %v3090
    %v3127 = vpack.c.b16 %v3095, %v3091
    %v3128 = vpack.c.b16 %v3096, %v3092
    %v3129 = vpack.c.b16 %v3097, %v3093
    %3162 = vmatprep.subr.bf16.mxu0 %v3127
    %3163 = vmatpush1.bf16.msra.mxu0 %v3126
    %3164 = vmatprep.subr.bf16.mxu0 %v3123
    %3165 = vmatpush1.bf16.msra.mxu0 %v3122
    %3166 = vmatprep.subr.bf16.mxu0 %v3119
    %3167 = vmatpush1.bf16.msra.mxu0 %v3118
    %3168 = vmatprep.subr.bf16.mxu0 %v3115
    %3169 = vmatpush1.bf16.msra.mxu0 %v3114
    %3170 = vmatprep.subr.bf16.mxu0 %v3111
    %3171 = vmatpush1.bf16.msra.mxu0 %v3110
    %3172 = vmatprep.subr.bf16.mxu0 %v3107
    %3173 = vmatpush1.bf16.msra.mxu0 %v3106
    %3174 = vmatprep.subr.bf16.mxu0 %v3103
    %3175 = vmatpush1.bf16.msra.mxu0 %v3102
    %3176 = vmatprep.subr.bf16.mxu0 %v3099
    %3177 = vmatpush1.bf16.msra.mxu0 %v3098
    %3178 = vmatprep.subr.bf16.mxu0 0
    %3179 = vmatpush2.bf16.msra.mxu0 0
    %3180 = vmatprep.subr.bf16.mxu0 0
    %3181 = vmatpush2.bf16.msra.mxu0 0
    %3182 = vmatprep.subr.bf16.mxu0 0
    %3183 = vmatpush2.bf16.msra.mxu0 0
    %3184 = vmatprep.subr.bf16.mxu0 0
    %3185 = vmatpush2.bf16.msra.mxu0 0
    %3186 = vmatprep.subr.bf16.mxu0 0
    %3187 = vmatpush2.bf16.msra.mxu0 0
    %3188 = vmatprep.subr.bf16.mxu0 0
    %3189 = vmatpush2.bf16.msra.mxu0 0
    %3190 = vmatprep.subr.bf16.mxu0 0
    %3191 = vmatpush2.bf16.msra.mxu0 0
    %3192 = vmatprep.subr.bf16.mxu0 0
    %3193 = vmatpush2.bf16.msra.mxu0 0
    %3194 = vmatprep.mubr.bf16.mxu0 0
    %3195 = vmatmul.mubr.bf16.gmra.mxu0 %v2945
    %v3196 = vpop.f32.mrf.mxu0
    %v3197 = vadd.f32 %v2985, %v3196
    %v3198 = vpop.f32.mrf.mxu0
    %v3199 = vadd.f32 %v2989, %v3198
    %v3200 = vpop.f32.mrf.mxu0
    %v3201 = vpop.f32.mrf.mxu0
    %3202 = vdwg.mxu0
    %3203 = vmatprep.subr.bf16.mxu0 %v3129
    %3204 = vmatpush1.bf16.msra.mxu0 %v3128
    %3205 = vmatprep.subr.bf16.mxu0 %v3125
    %3206 = vmatpush1.bf16.msra.mxu0 %v3124
    %3207 = vmatprep.subr.bf16.mxu0 %v3121
    %3208 = vmatpush1.bf16.msra.mxu0 %v3120
    %3209 = vmatprep.subr.bf16.mxu0 %v3117
    %3210 = vmatpush1.bf16.msra.mxu0 %v3116
    %3211 = vmatprep.subr.bf16.mxu0 %v3113
    %3212 = vmatpush1.bf16.msra.mxu0 %v3112
    %3213 = vmatprep.subr.bf16.mxu0 %v3109
    %3214 = vmatpush1.bf16.msra.mxu0 %v3108
    %3215 = vmatprep.subr.bf16.mxu0 %v3105
    %3216 = vmatpush1.bf16.msra.mxu0 %v3104
    %3217 = vmatprep.subr.bf16.mxu0 %v3101
    %3218 = vmatpush1.bf16.msra.mxu0 %v3100
    %3219 = vmatprep.subr.bf16.mxu0 0
    %3220 = vmatpush2.bf16.msra.mxu0 0
    %3221 = vmatprep.subr.bf16.mxu0 0
    %3222 = vmatpush2.bf16.msra.mxu0 0
    %3223 = vmatprep.subr.bf16.mxu0 0
    %3224 = vmatpush2.bf16.msra.mxu0 0
    %3225 = vmatprep.subr.bf16.mxu0 0
    %3226 = vmatpush2.bf16.msra.mxu0 0
    %3227 = vmatprep.subr.bf16.mxu0 0
    %3228 = vmatpush2.bf16.msra.mxu0 0
    %3229 = vmatprep.subr.bf16.mxu0 0
    %3230 = vmatpush2.bf16.msra.mxu0 0
    %3231 = vmatprep.subr.bf16.mxu0 0
    %3232 = vmatpush2.bf16.msra.mxu0 0
    %3233 = vmatprep.subr.bf16.mxu0 0
    %3234 = vmatpush2.bf16.msra.mxu0 0
    %3235 = vmatprep.mubr.bf16.mxu0 0
    %3236 = vmatmul.mubr.bf16.gmra.mxu0 %v2945
    %v3237 = vpop.f32.mrf.mxu0
    %v3238 = vadd.f32 %v2993, %v3237
    %v3239 = vpop.f32.mrf.mxu0
    %v3240 = vadd.f32 %v2997, %v3239
    %v3241 = vpop.f32.mrf.mxu0
    %v3242 = vpop.f32.mrf.mxu0
    %3243 = vdwg.mxu0
    %v3244 = vpack.c.bf16 %v3197, %v3197
    %v3245 = vpack.c.bf16 %v3199, %v3199
    %v3246 = vpack.c.bf16 %v3238, %v3238
    %3247 = vmatprep.subr.bf16.mxu0 0
    %3248 = vmatpush1.bf16.xpose.msra.mxu0 0
    %3249 = vmatprep.subr.bf16.mxu0 0
    %3250 = vmatpush1.bf16.xpose.msra.mxu0 0
    %3251 = vmatprep.subr.bf16.mxu0 0
    %3252 = vmatpush1.bf16.xpose.msra.mxu0 0
    %3253 = vmatprep.subr.bf16.mxu0 0
    %3254 = vmatpush1.bf16.xpose.msra.mxu0 0
    %3255 = vmatprep.subr.bf16.mxu0 0
    %3256 = vmatpush1.bf16.xpose.msra.mxu0 0
    %3257 = vmatprep.subr.bf16.mxu0 0
    %3258 = vmatpush1.bf16.xpose.msra.mxu0 0
    %3259 = vmatprep.subr.bf16.mxu0 0
    %3260 = vmatpush1.bf16.xpose.msra.mxu0 0
    %3261 = vmatprep.subr.bf16.mxu0 0
    %3262 = vmatpush1.bf16.xpose.msra.mxu0 %v3245
    %3263 = vmatprep.subr.bf16.mxu0 0
    %3264 = vmatpush2.bf16.xpose.msra.mxu0 0
    %3265 = vmatprep.subr.bf16.mxu0 0
    %3266 = vmatpush2.bf16.xpose.msra.mxu0 0
    %3267 = vmatprep.subr.bf16.mxu0 0
    %3268 = vmatpush2.bf16.xpose.msra.mxu0 0
    %3269 = vmatprep.subr.bf16.mxu0 0
    %3270 = vmatpush2.bf16.xpose.msra.mxu0 0
    %3271 = vmatprep.subr.bf16.mxu0 0
    %3272 = vmatpush2.bf16.xpose.msra.mxu0 0
    %3273 = vmatprep.subr.bf16.mxu0 0
    %3274 = vmatpush2.bf16.xpose.msra.mxu0 0
    %3275 = vmatprep.subr.bf16.mxu0 0
    %3276 = vmatpush2.bf16.xpose.msra.mxu0 0
    %3277 = vmatprep.subr.bf16.mxu0 0
    %3278 = vmatpush2.bf16.xpose.msra.mxu0 0
    %3279 = vmatprep.mubr.bf16.mxu0 0
    %3280 = vmatmul.mubr.bf16.gmra.mxu0 %v3244
    %v3281 = vpop.f32.mrf.mxu0
    %v3282 = vadd.f32 %v380, %v3281
    %v3283 = vpop.f32.mrf.mxu0
    %v3284 = vpop.f32.mrf.mxu0
    %v3285 = vpop.f32.mrf.mxu0
    %3286 = vdwg.mxu0
    %v3287 = vsel %vm421, %v3282, -inf
    %3288 = vmax.xlane.f32.xlu0 %v3287
    %v3289 = vpop.xlane.xlu0 %3288
    %v3290 = vsub.f32 %v3282, %v3289
    %v3291 = vpack.c.bf16 %v3290, %v3290
    %v3293 = vmul.bf16 %v3291, 1069105081
    %v3294 = vpow.bf16.pop %v3293
    %v3295 = vunpack.c.l.bf16 %v3294
    %v3296 = vsel %vm421, %v3295, 0.0
    %3297 = vadd.xlane.f32.xlu0 %v3296
    %v3298 = vpop.xlane.xlu0 %3297
    %v3299 = vrcp.pop %v3298
    %v3300 = vpack.c.bf16 %v3299, %v3299
    %v3301 = vmul.bf16 %v3294, %v3300
    %v3303 = vsel %vm421, %v3301, 0
    %v3306 = vsel %vm440, %v3246, 0
    %3308 = vmatprep.subr.bf16.mxu0 0
    %3309 = vmatpush1.bf16.msra.mxu0 0
    %3310 = vmatprep.subr.bf16.mxu0 0
    %3311 = vmatpush1.bf16.msra.mxu0 0
    %3312 = vmatprep.subr.bf16.mxu0 0
    %3313 = vmatpush1.bf16.msra.mxu0 0
    %3314 = vmatprep.subr.bf16.mxu0 0
    %3315 = vmatpush1.bf16.msra.mxu0 0
    %3316 = vmatprep.subr.bf16.mxu0 0
    %3317 = vmatpush1.bf16.msra.mxu0 0
    %3318 = vmatprep.subr.bf16.mxu0 0
    %3319 = vmatpush1.bf16.msra.mxu0 0
    %3320 = vmatprep.subr.bf16.mxu0 0
    %3321 = vmatpush1.bf16.msra.mxu0 0
    %3322 = vmatprep.subr.bf16.mxu0 0
    %3323 = vmatpush1.bf16.msra.mxu0 %v3306
    %3324 = vmatprep.subr.bf16.mxu0 0
    %3325 = vmatpush2.bf16.msra.mxu0 0
    %3326 = vmatprep.subr.bf16.mxu0 0
    %3327 = vmatpush2.bf16.msra.mxu0 0
    %3328 = vmatprep.subr.bf16.mxu0 0
    %3329 = vmatpush2.bf16.msra.mxu0 0
    %3330 = vmatprep.subr.bf16.mxu0 0
    %3331 = vmatpush2.bf16.msra.mxu0 0
    %3332 = vmatprep.subr.bf16.mxu0 0
    %3333 = vmatpush2.bf16.msra.mxu0 0
    %3334 = vmatprep.subr.bf16.mxu0 0
    %3335 = vmatpush2.bf16.msra.mxu0 0
    %3336 = vmatprep.subr.bf16.mxu0 0
    %3337 = vmatpush2.bf16.msra.mxu0 0
    %3338 = vmatprep.subr.bf16.mxu0 0
    %3339 = vmatpush2.bf16.msra.mxu0 0
    %3340 = vmatprep.mubr.bf16.mxu0 0
    %3341 = vmatmul.mubr.bf16.gmra.mxu0 %v3303
    %v3342 = vpop.f32.mrf.mxu0
    %v3343 = vadd.f32 0.0, %v3342
    %v3344 = vpop.f32.mrf.mxu0
    %v3345 = vpop.f32.mrf.mxu0
    %v3346 = vpop.f32.mrf.mxu0
    %3347 = vdwg.mxu0
    %v3348 = vmul.f32 %v3343, %v487
    %v3349 = vadd.f32 %v3348, %v3240
    %s3350 = scalar_lea.vmem [#allocation4], 2048
    %v3351 = vld [vmem:[%s3350] sm:$0xff]
    %v3352 = vld [vmem:[%s3350 + $0x8] sm:$0xff]
    %v3353 = vld [vmem:[%s3350 + $0x10] sm:$0xff]
    %v3354 = vld [vmem:[%s3350 + $0x18] sm:$0xff]
    %v3355 = vld [vmem:[%s3350 + $0x20] sm:$0xff]
    %v3356 = vld [vmem:[%s3350 + $0x28] sm:$0xff]
    %v3357 = vld [vmem:[%s3350 + $0x30] sm:$0xff]
    %v3358 = vld [vmem:[%s3350 + $0x38] sm:$0xff]
    %v3359 = vld [vmem:[%s3350 + $0x40] sm:$0xff]
    %v3360 = vld [vmem:[%s3350 + $0x48] sm:$0xff]
    %v3361 = vld [vmem:[%s3350 + $0x50] sm:$0xff]
    %v3362 = vld [vmem:[%s3350 + $0x58] sm:$0xff]
    %v3363 = vld [vmem:[%s3350 + $0x60] sm:$0xff]
    %v3364 = vld [vmem:[%s3350 + $0x68] sm:$0xff]
    %v3365 = vld [vmem:[%s3350 + $0x70] sm:$0xff]
    %v3366 = vld [vmem:[%s3350 + $0x78] sm:$0xff]
    %v3367 = vld [vmem:[%s3350 + $0x80] sm:$0xff]
    %v3368 = vld [vmem:[%s3350 + $0x88] sm:$0xff]
    %v3369 = vld [vmem:[%s3350 + $0x90] sm:$0xff]
    %v3370 = vld [vmem:[%s3350 + $0x98] sm:$0xff]
    %v3371 = vld [vmem:[%s3350 + $0xa0] sm:$0xff]
    %v3372 = vld [vmem:[%s3350 + $0xa8] sm:$0xff]
    %v3373 = vld [vmem:[%s3350 + $0xb0] sm:$0xff]
    %v3374 = vld [vmem:[%s3350 + $0xb8] sm:$0xff]
    %v3375 = vld [vmem:[%s3350 + $0xc0] sm:$0xff]
    %v3376 = vld [vmem:[%s3350 + $0xc8] sm:$0xff]
    %v3377 = vld [vmem:[%s3350 + $0xd0] sm:$0xff]
    %v3378 = vld [vmem:[%s3350 + $0xd8] sm:$0xff]
    %v3379 = vld [vmem:[%s3350 + $0xe0] sm:$0xff]
    %v3380 = vld [vmem:[%s3350 + $0xe8] sm:$0xff]
    %v3381 = vld [vmem:[%s3350 + $0xf0] sm:$0xff]
    %v3382 = vld [vmem:[%s3350 + $0xf8] sm:$0xff]
    %s3383 = scalar_lea.vmem [#allocation4], 2304
    %v3384 = vld [vmem:[%s3383] sm:$0xff]
    %v3385 = vld [vmem:[%s3383 + $0x8] sm:$0xff]
    %v3386 = vld [vmem:[%s3383 + $0x10] sm:$0xff]
    %v3387 = vld [vmem:[%s3383 + $0x18] sm:$0xff]
    %v3388 = vld [vmem:[%s3383 + $0x20] sm:$0xff]
    %v3389 = vld [vmem:[%s3383 + $0x28] sm:$0xff]
    %v3390 = vld [vmem:[%s3383 + $0x30] sm:$0xff]
    %v3391 = vld [vmem:[%s3383 + $0x38] sm:$0xff]
    %v3392 = vld [vmem:[%s3383 + $0x40] sm:$0xff]
    %v3393 = vld [vmem:[%s3383 + $0x48] sm:$0xff]
    %v3394 = vld [vmem:[%s3383 + $0x50] sm:$0xff]
    %v3395 = vld [vmem:[%s3383 + $0x58] sm:$0xff]
    %v3396 = vld [vmem:[%s3383 + $0x60] sm:$0xff]
    %v3397 = vld [vmem:[%s3383 + $0x68] sm:$0xff]
    %v3398 = vld [vmem:[%s3383 + $0x70] sm:$0xff]
    %v3399 = vld [vmem:[%s3383 + $0x78] sm:$0xff]
    %v3400 = vld [vmem:[%s3383 + $0x80] sm:$0xff]
    %v3401 = vld [vmem:[%s3383 + $0x88] sm:$0xff]
    %v3402 = vld [vmem:[%s3383 + $0x90] sm:$0xff]
    %v3403 = vld [vmem:[%s3383 + $0x98] sm:$0xff]
    %v3404 = vld [vmem:[%s3383 + $0xa0] sm:$0xff]
    %v3405 = vld [vmem:[%s3383 + $0xa8] sm:$0xff]
    %v3406 = vld [vmem:[%s3383 + $0xb0] sm:$0xff]
    %v3407 = vld [vmem:[%s3383 + $0xb8] sm:$0xff]
    %v3408 = vld [vmem:[%s3383 + $0xc0] sm:$0xff]
    %v3409 = vld [vmem:[%s3383 + $0xc8] sm:$0xff]
    %v3410 = vld [vmem:[%s3383 + $0xd0] sm:$0xff]
    %v3411 = vld [vmem:[%s3383 + $0xd8] sm:$0xff]
    %v3412 = vld [vmem:[%s3383 + $0xe0] sm:$0xff]
    %v3413 = vld [vmem:[%s3383 + $0xe8] sm:$0xff]
    %v3414 = vld [vmem:[%s3383 + $0xf0] sm:$0xff]
    %v3415 = vld [vmem:[%s3383 + $0xf8] sm:$0xff]
    %v3448 = vunpack.c.l.b16 %v3384
    %v3449 = vunpack.c.h.b16 %v3384
    %v3450 = vunpack.c.l.b16 %v3385
    %v3451 = vunpack.c.h.b16 %v3385
    %v3452 = vunpack.c.l.b16 %v3386
    %v3453 = vunpack.c.h.b16 %v3386
    %v3454 = vunpack.c.l.b16 %v3387
    %v3455 = vunpack.c.h.b16 %v3387
    %v3456 = vunpack.c.l.b16 %v3388
    %v3457 = vunpack.c.h.b16 %v3388
    %v3458 = vunpack.c.l.b16 %v3389
    %v3459 = vunpack.c.h.b16 %v3389
    %v3460 = vunpack.c.l.b16 %v3390
    %v3461 = vunpack.c.h.b16 %v3390
    %v3462 = vunpack.c.l.b16 %v3391
    %v3463 = vunpack.c.h.b16 %v3391
    %v3464 = vunpack.c.l.b16 %v3392
    %v3465 = vunpack.c.h.b16 %v3392
    %v3466 = vunpack.c.l.b16 %v3393
    %v3467 = vunpack.c.h.b16 %v3393
    %v3468 = vunpack.c.l.b16 %v3394
    %v3469 = vunpack.c.h.b16 %v3394
    %v3470 = vunpack.c.l.b16 %v3395
    %v3471 = vunpack.c.h.b16 %v3395
    %v3472 = vunpack.c.l.b16 %v3396
    %v3473 = vunpack.c.h.b16 %v3396
    %v3474 = vunpack.c.l.b16 %v3397
    %v3475 = vunpack.c.h.b16 %v3397
    %v3476 = vunpack.c.l.b16 %v3398
    %v3477 = vunpack.c.h.b16 %v3398
    %v3478 = vunpack.c.l.b16 %v3399
    %v3479 = vunpack.c.h.b16 %v3399
    %v3480 = vunpack.c.l.b16 %v3400
    %v3481 = vunpack.c.h.b16 %v3400
    %v3482 = vunpack.c.l.b16 %v3401
    %v3483 = vunpack.c.h.b16 %v3401
    %v3484 = vunpack.c.l.b16 %v3402
    %v3485 = vunpack.c.h.b16 %v3402
    %v3486 = vunpack.c.l.b16 %v3403
    %v3487 = vunpack.c.h.b16 %v3403
    %v3488 = vunpack.c.l.b16 %v3404
    %v3489 = vunpack.c.h.b16 %v3404
    %v3490 = vunpack.c.l.b16 %v3405
    %v3491 = vunpack.c.h.b16 %v3405
    %v3492 = vunpack.c.l.b16 %v3406
    %v3493 = vunpack.c.h.b16 %v3406
    %v3494 = vunpack.c.l.b16 %v3407
    %v3495 = vunpack.c.h.b16 %v3407
    %v3496 = vunpack.c.l.b16 %v3408
    %v3497 = vunpack.c.h.b16 %v3408
    %v3498 = vunpack.c.l.b16 %v3409
    %v3499 = vunpack.c.h.b16 %v3409
    %v3500 = vunpack.c.l.b16 %v3410
    %v3501 = vunpack.c.h.b16 %v3410
    %v3502 = vunpack.c.l.b16 %v3411
    %v3503 = vunpack.c.h.b16 %v3411
    %v3504 = vunpack.c.l.b16 %v3412
    %v3505 = vunpack.c.h.b16 %v3412
    %v3506 = vunpack.c.l.b16 %v3413
    %v3507 = vunpack.c.h.b16 %v3413
    %v3508 = vunpack.c.l.b16 %v3414
    %v3509 = vunpack.c.h.b16 %v3414
    %v3510 = vunpack.c.l.b16 %v3415
    %v3511 = vunpack.c.h.b16 %v3415
    %v3512 = vpack.c.b16 %v3452, %v3448
    %v3513 = vpack.c.b16 %v3453, %v3449
    %v3514 = vpack.c.b16 %v3454, %v3450
    %v3515 = vpack.c.b16 %v3455, %v3451
    %v3516 = vpack.c.b16 %v3460, %v3456
    %v3517 = vpack.c.b16 %v3461, %v3457
    %v3518 = vpack.c.b16 %v3462, %v3458
    %v3519 = vpack.c.b16 %v3463, %v3459
    %v3520 = vpack.c.b16 %v3468, %v3464
    %v3521 = vpack.c.b16 %v3469, %v3465
    %v3522 = vpack.c.b16 %v3470, %v3466
    %v3523 = vpack.c.b16 %v3471, %v3467
    %v3524 = vpack.c.b16 %v3476, %v3472
    %v3525 = vpack.c.b16 %v3477, %v3473
    %v3526 = vpack.c.b16 %v3478, %v3474
    %v3527 = vpack.c.b16 %v3479, %v3475
    %v3528 = vpack.c.b16 %v3484, %v3480
    %v3529 = vpack.c.b16 %v3485, %v3481
    %v3530 = vpack.c.b16 %v3486, %v3482
    %v3531 = vpack.c.b16 %v3487, %v3483
    %v3532 = vpack.c.b16 %v3492, %v3488
    %v3533 = vpack.c.b16 %v3493, %v3489
    %v3534 = vpack.c.b16 %v3494, %v3490
    %v3535 = vpack.c.b16 %v3495, %v3491
    %v3536 = vpack.c.b16 %v3500, %v3496
    %v3537 = vpack.c.b16 %v3501, %v3497
    %v3538 = vpack.c.b16 %v3502, %v3498
    %v3539 = vpack.c.b16 %v3503, %v3499
    %v3540 = vpack.c.b16 %v3508, %v3504
    %v3541 = vpack.c.b16 %v3509, %v3505
    %v3542 = vpack.c.b16 %v3510, %v3506
    %v3543 = vpack.c.b16 %v3511, %v3507
    %3576 = vmatprep.subr.bf16.mxu0 %v3541
    %3577 = vmatpush1.bf16.msra.mxu0 %v3540
    %3578 = vmatprep.subr.bf16.mxu0 %v3537
    %3579 = vmatpush1.bf16.msra.mxu0 %v3536
    %3580 = vmatprep.subr.bf16.mxu0 %v3533
    %3581 = vmatpush1.bf16.msra.mxu0 %v3532
    %3582 = vmatprep.subr.bf16.mxu0 %v3529
    %3583 = vmatpush1.bf16.msra.mxu0 %v3528
    %3584 = vmatprep.subr.bf16.mxu0 %v3525
    %3585 = vmatpush1.bf16.msra.mxu0 %v3524
    %3586 = vmatprep.subr.bf16.mxu0 %v3521
    %3587 = vmatpush1.bf16.msra.mxu0 %v3520
    %3588 = vmatprep.subr.bf16.mxu0 %v3517
    %3589 = vmatpush1.bf16.msra.mxu0 %v3516
    %3590 = vmatprep.subr.bf16.mxu0 %v3513
    %3591 = vmatpush1.bf16.msra.mxu0 %v3512
    %3592 = vmatprep.subr.bf16.mxu0 0
    %3593 = vmatpush2.bf16.msra.mxu0 0
    %3594 = vmatprep.subr.bf16.mxu0 0
    %3595 = vmatpush2.bf16.msra.mxu0 0
    %3596 = vmatprep.subr.bf16.mxu0 0
    %3597 = vmatpush2.bf16.msra.mxu0 0
    %3598 = vmatprep.subr.bf16.mxu0 0
    %3599 = vmatpush2.bf16.msra.mxu0 0
    %3600 = vmatprep.subr.bf16.mxu0 0
    %3601 = vmatpush2.bf16.msra.mxu0 0
    %3602 = vmatprep.subr.bf16.mxu0 0
    %3603 = vmatpush2.bf16.msra.mxu0 0
    %3604 = vmatprep.subr.bf16.mxu0 0
    %3605 = vmatpush2.bf16.msra.mxu0 0
    %3606 = vmatprep.subr.bf16.mxu0 0
    %3607 = vmatpush2.bf16.msra.mxu0 0
    %3608 = vmatprep.mubr.bf16.mxu0 0
    %3609 = vmatmul.mubr.bf16.gmra.mxu0 %v2534
    %v3610 = vpop.f32.mrf.mxu0
    %v3611 = vadd.f32 0.0, %v3610
    %v3612 = vpop.f32.mrf.mxu0
    %v3613 = vadd.f32 0.0, %v3612
    %v3614 = vpop.f32.mrf.mxu0
    %v3615 = vpop.f32.mrf.mxu0
    %3616 = vdwg.mxu0
    %3617 = vmatprep.subr.bf16.mxu0 %v3543
    %3618 = vmatpush1.bf16.msra.mxu0 %v3542
    %3619 = vmatprep.subr.bf16.mxu0 %v3539
    %3620 = vmatpush1.bf16.msra.mxu0 %v3538
    %3621 = vmatprep.subr.bf16.mxu0 %v3535
    %3622 = vmatpush1.bf16.msra.mxu0 %v3534
    %3623 = vmatprep.subr.bf16.mxu0 %v3531
    %3624 = vmatpush1.bf16.msra.mxu0 %v3530
    %3625 = vmatprep.subr.bf16.mxu0 %v3527
    %3626 = vmatpush1.bf16.msra.mxu0 %v3526
    %3627 = vmatprep.subr.bf16.mxu0 %v3523
    %3628 = vmatpush1.bf16.msra.mxu0 %v3522
    %3629 = vmatprep.subr.bf16.mxu0 %v3519
    %3630 = vmatpush1.bf16.msra.mxu0 %v3518
    %3631 = vmatprep.subr.bf16.mxu0 %v3515
    %3632 = vmatpush1.bf16.msra.mxu0 %v3514
    %3633 = vmatprep.subr.bf16.mxu0 0
    %3634 = vmatpush2.bf16.msra.mxu0 0
    %3635 = vmatprep.subr.bf16.mxu0 0
    %3636 = vmatpush2.bf16.msra.mxu0 0
    %3637 = vmatprep.subr.bf16.mxu0 0
    %3638 = vmatpush2.bf16.msra.mxu0 0
    %3639 = vmatprep.subr.bf16.mxu0 0
    %3640 = vmatpush2.bf16.msra.mxu0 0
    %3641 = vmatprep.subr.bf16.mxu0 0
    %3642 = vmatpush2.bf16.msra.mxu0 0
    %3643 = vmatprep.subr.bf16.mxu0 0
    %3644 = vmatpush2.bf16.msra.mxu0 0
    %3645 = vmatprep.subr.bf16.mxu0 0
    %3646 = vmatpush2.bf16.msra.mxu0 0
    %3647 = vmatprep.subr.bf16.mxu0 0
    %3648 = vmatpush2.bf16.msra.mxu0 0
    %3649 = vmatprep.mubr.bf16.mxu0 0
    %3650 = vmatmul.mubr.bf16.gmra.mxu0 %v2534
    %v3651 = vpop.f32.mrf.mxu0
    %v3652 = vadd.f32 0.0, %v3651
    %v3653 = vpop.f32.mrf.mxu0
    %v3654 = vadd.f32 0.0, %v3653
    %v3655 = vpop.f32.mrf.mxu0
    %v3656 = vpop.f32.mrf.mxu0
    %3657 = vdwg.mxu0
    %v3690 = vunpack.c.l.b16 %v3351
    %v3691 = vunpack.c.h.b16 %v3351
    %v3692 = vunpack.c.l.b16 %v3352
    %v3693 = vunpack.c.h.b16 %v3352
    %v3694 = vunpack.c.l.b16 %v3353
    %v3695 = vunpack.c.h.b16 %v3353
    %v3696 = vunpack.c.l.b16 %v3354
    %v3697 = vunpack.c.h.b16 %v3354
    %v3698 = vunpack.c.l.b16 %v3355
    %v3699 = vunpack.c.h.b16 %v3355
    %v3700 = vunpack.c.l.b16 %v3356
    %v3701 = vunpack.c.h.b16 %v3356
    %v3702 = vunpack.c.l.b16 %v3357
    %v3703 = vunpack.c.h.b16 %v3357
    %v3704 = vunpack.c.l.b16 %v3358
    %v3705 = vunpack.c.h.b16 %v3358
    %v3706 = vunpack.c.l.b16 %v3359
    %v3707 = vunpack.c.h.b16 %v3359
    %v3708 = vunpack.c.l.b16 %v3360
    %v3709 = vunpack.c.h.b16 %v3360
    %v3710 = vunpack.c.l.b16 %v3361
    %v3711 = vunpack.c.h.b16 %v3361
    %v3712 = vunpack.c.l.b16 %v3362
    %v3713 = vunpack.c.h.b16 %v3362
    %v3714 = vunpack.c.l.b16 %v3363
    %v3715 = vunpack.c.h.b16 %v3363
    %v3716 = vunpack.c.l.b16 %v3364
    %v3717 = vunpack.c.h.b16 %v3364
    %v3718 = vunpack.c.l.b16 %v3365
    %v3719 = vunpack.c.h.b16 %v3365
    %v3720 = vunpack.c.l.b16 %v3366
    %v3721 = vunpack.c.h.b16 %v3366
    %v3722 = vunpack.c.l.b16 %v3367
    %v3723 = vunpack.c.h.b16 %v3367
    %v3724 = vunpack.c.l.b16 %v3368
    %v3725 = vunpack.c.h.b16 %v3368
    %v3726 = vunpack.c.l.b16 %v3369
    %v3727 = vunpack.c.h.b16 %v3369
    %v3728 = vunpack.c.l.b16 %v3370
    %v3729 = vunpack.c.h.b16 %v3370
    %v3730 = vunpack.c.l.b16 %v3371
    %v3731 = vunpack.c.h.b16 %v3371
    %v3732 = vunpack.c.l.b16 %v3372
    %v3733 = vunpack.c.h.b16 %v3372
    %v3734 = vunpack.c.l.b16 %v3373
    %v3735 = vunpack.c.h.b16 %v3373
    %v3736 = vunpack.c.l.b16 %v3374
    %v3737 = vunpack.c.h.b16 %v3374
    %v3738 = vunpack.c.l.b16 %v3375
    %v3739 = vunpack.c.h.b16 %v3375
    %v3740 = vunpack.c.l.b16 %v3376
    %v3741 = vunpack.c.h.b16 %v3376
    %v3742 = vunpack.c.l.b16 %v3377
    %v3743 = vunpack.c.h.b16 %v3377
    %v3744 = vunpack.c.l.b16 %v3378
    %v3745 = vunpack.c.h.b16 %v3378
    %v3746 = vunpack.c.l.b16 %v3379
    %v3747 = vunpack.c.h.b16 %v3379
    %v3748 = vunpack.c.l.b16 %v3380
    %v3749 = vunpack.c.h.b16 %v3380
    %v3750 = vunpack.c.l.b16 %v3381
    %v3751 = vunpack.c.h.b16 %v3381
    %v3752 = vunpack.c.l.b16 %v3382
    %v3753 = vunpack.c.h.b16 %v3382
    %v3754 = vpack.c.b16 %v3694, %v3690
    %v3755 = vpack.c.b16 %v3695, %v3691
    %v3756 = vpack.c.b16 %v3696, %v3692
    %v3757 = vpack.c.b16 %v3697, %v3693
    %v3758 = vpack.c.b16 %v3702, %v3698
    %v3759 = vpack.c.b16 %v3703, %v3699
    %v3760 = vpack.c.b16 %v3704, %v3700
    %v3761 = vpack.c.b16 %v3705, %v3701
    %v3762 = vpack.c.b16 %v3710, %v3706
    %v3763 = vpack.c.b16 %v3711, %v3707
    %v3764 = vpack.c.b16 %v3712, %v3708
    %v3765 = vpack.c.b16 %v3713, %v3709
    %v3766 = vpack.c.b16 %v3718, %v3714
    %v3767 = vpack.c.b16 %v3719, %v3715
    %v3768 = vpack.c.b16 %v3720, %v3716
    %v3769 = vpack.c.b16 %v3721, %v3717
    %v3770 = vpack.c.b16 %v3726, %v3722
    %v3771 = vpack.c.b16 %v3727, %v3723
    %v3772 = vpack.c.b16 %v3728, %v3724
    %v3773 = vpack.c.b16 %v3729, %v3725
    %v3774 = vpack.c.b16 %v3734, %v3730
    %v3775 = vpack.c.b16 %v3735, %v3731
    %v3776 = vpack.c.b16 %v3736, %v3732
    %v3777 = vpack.c.b16 %v3737, %v3733
    %v3778 = vpack.c.b16 %v3742, %v3738
    %v3779 = vpack.c.b16 %v3743, %v3739
    %v3780 = vpack.c.b16 %v3744, %v3740
    %v3781 = vpack.c.b16 %v3745, %v3741
    %v3782 = vpack.c.b16 %v3750, %v3746
    %v3783 = vpack.c.b16 %v3751, %v3747
    %v3784 = vpack.c.b16 %v3752, %v3748
    %v3785 = vpack.c.b16 %v3753, %v3749
    %3818 = vmatprep.subr.bf16.mxu0 %v3783
    %3819 = vmatpush1.bf16.msra.mxu0 %v3782
    %3820 = vmatprep.subr.bf16.mxu0 %v3779
    %3821 = vmatpush1.bf16.msra.mxu0 %v3778
    %3822 = vmatprep.subr.bf16.mxu0 %v3775
    %3823 = vmatpush1.bf16.msra.mxu0 %v3774
    %3824 = vmatprep.subr.bf16.mxu0 %v3771
    %3825 = vmatpush1.bf16.msra.mxu0 %v3770
    %3826 = vmatprep.subr.bf16.mxu0 %v3767
    %3827 = vmatpush1.bf16.msra.mxu0 %v3766
    %3828 = vmatprep.subr.bf16.mxu0 %v3763
    %3829 = vmatpush1.bf16.msra.mxu0 %v3762
    %3830 = vmatprep.subr.bf16.mxu0 %v3759
    %3831 = vmatpush1.bf16.msra.mxu0 %v3758
    %3832 = vmatprep.subr.bf16.mxu0 %v3755
    %3833 = vmatpush1.bf16.msra.mxu0 %v3754
    %3834 = vmatprep.subr.bf16.mxu0 0
    %3835 = vmatpush2.bf16.msra.mxu0 0
    %3836 = vmatprep.subr.bf16.mxu0 0
    %3837 = vmatpush2.bf16.msra.mxu0 0
    %3838 = vmatprep.subr.bf16.mxu0 0
    %3839 = vmatpush2.bf16.msra.mxu0 0
    %3840 = vmatprep.subr.bf16.mxu0 0
    %3841 = vmatpush2.bf16.msra.mxu0 0
    %3842 = vmatprep.subr.bf16.mxu0 0
    %3843 = vmatpush2.bf16.msra.mxu0 0
    %3844 = vmatprep.subr.bf16.mxu0 0
    %3845 = vmatpush2.bf16.msra.mxu0 0
    %3846 = vmatprep.subr.bf16.mxu0 0
    %3847 = vmatpush2.bf16.msra.mxu0 0
    %3848 = vmatprep.subr.bf16.mxu0 0
    %3849 = vmatpush2.bf16.msra.mxu0 0
    %3850 = vmatprep.mubr.bf16.mxu0 0
    %3851 = vmatmul.mubr.bf16.gmra.mxu0 %v902
    %v3852 = vpop.f32.mrf.mxu0
    %v3853 = vadd.f32 %v3611, %v3852
    %v3854 = vpop.f32.mrf.mxu0
    %v3855 = vadd.f32 %v3613, %v3854
    %v3856 = vpop.f32.mrf.mxu0
    %v3857 = vpop.f32.mrf.mxu0
    %3858 = vdwg.mxu0
    %3859 = vmatprep.subr.bf16.mxu0 %v3785
    %3860 = vmatpush1.bf16.msra.mxu0 %v3784
    %3861 = vmatprep.subr.bf16.mxu0 %v3781
    %3862 = vmatpush1.bf16.msra.mxu0 %v3780
    %3863 = vmatprep.subr.bf16.mxu0 %v3777
    %3864 = vmatpush1.bf16.msra.mxu0 %v3776
    %3865 = vmatprep.subr.bf16.mxu0 %v3773
    %3866 = vmatpush1.bf16.msra.mxu0 %v3772
    %3867 = vmatprep.subr.bf16.mxu0 %v3769
    %3868 = vmatpush1.bf16.msra.mxu0 %v3768
    %3869 = vmatprep.subr.bf16.mxu0 %v3765
    %3870 = vmatpush1.bf16.msra.mxu0 %v3764
    %3871 = vmatprep.subr.bf16.mxu0 %v3761
    %3872 = vmatpush1.bf16.msra.mxu0 %v3760
    %3873 = vmatprep.subr.bf16.mxu0 %v3757
    %3874 = vmatpush1.bf16.msra.mxu0 %v3756
    %3875 = vmatprep.subr.bf16.mxu0 0
    %3876 = vmatpush2.bf16.msra.mxu0 0
    %3877 = vmatprep.subr.bf16.mxu0 0
    %3878 = vmatpush2.bf16.msra.mxu0 0
    %3879 = vmatprep.subr.bf16.mxu0 0
    %3880 = vmatpush2.bf16.msra.mxu0 0
    %3881 = vmatprep.subr.bf16.mxu0 0
    %3882 = vmatpush2.bf16.msra.mxu0 0
    %3883 = vmatprep.subr.bf16.mxu0 0
    %3884 = vmatpush2.bf16.msra.mxu0 0
    %3885 = vmatprep.subr.bf16.mxu0 0
    %3886 = vmatpush2.bf16.msra.mxu0 0
    %3887 = vmatprep.subr.bf16.mxu0 0
    %3888 = vmatpush2.bf16.msra.mxu0 0
    %3889 = vmatprep.subr.bf16.mxu0 0
    %3890 = vmatpush2.bf16.msra.mxu0 0
    %3891 = vmatprep.mubr.bf16.mxu0 0
    %3892 = vmatmul.mubr.bf16.gmra.mxu0 %v902
    %v3893 = vpop.f32.mrf.mxu0
    %v3894 = vadd.f32 %v3652, %v3893
    %v3895 = vpop.f32.mrf.mxu0
    %v3896 = vadd.f32 %v3654, %v3895
    %v3897 = vpop.f32.mrf.mxu0
    %v3898 = vpop.f32.mrf.mxu0
    %3899 = vdwg.mxu0
    %s3900 = scalar_lea.vmem [#allocation6], 32
    %v3901 = vld [vmem:[%s3900] sm:$0xf]
    %v3903 = vlaneseq
    %v3904 = vshrl.u32 %v3903, 7
    %v3905 = vsub.s32 0, %v3904
    %v3906 = vrot.slane %v3901, %v3905
    %v3907 = vlaneseq
    %v3908 = vshrl.u32 %v3907, 7
    %v3909 = vsub.s32 1, %v3908
    %v3910 = vrot.slane %v3901, %v3909
    %v3911 = vlaneseq
    %v3912 = vshrl.u32 %v3911, 7
    %v3913 = vsub.s32 2, %v3912
    %v3914 = vrot.slane %v3901, %v3913
    %v3915 = vlaneseq
    %v3916 = vshrl.u32 %v3915, 7
    %v3917 = vsub.s32 3, %v3916
    %v3918 = vrot.slane %v3901, %v3917
    %v3923 = vadd.f32 %v3853, %v3906
    %v3924 = vadd.f32 %v3855, %v3910
    %v3925 = vadd.f32 %v3894, %v3914
    %v3926 = vadd.f32 %v3896, %v3918
    %v3927 = vpack.c.bf16 %v3923, %v3923
    %v3928 = vpack.c.bf16 %v3924, %v3924
    %v3929 = vpack.c.bf16 %v3925, %v3925
    %3930 = vmatprep.subr.bf16.mxu0 0
    %3931 = vmatpush1.bf16.xpose.msra.mxu0 0
    %3932 = vmatprep.subr.bf16.mxu0 0
    %3933 = vmatpush1.bf16.xpose.msra.mxu0 0
    %3934 = vmatprep.subr.bf16.mxu0 0
    %3935 = vmatpush1.bf16.xpose.msra.mxu0 0
    %3936 = vmatprep.subr.bf16.mxu0 0
    %3937 = vmatpush1.bf16.xpose.msra.mxu0 0
    %3938 = vmatprep.subr.bf16.mxu0 0
    %3939 = vmatpush1.bf16.xpose.msra.mxu0 0
    %3940 = vmatprep.subr.bf16.mxu0 0
    %3941 = vmatpush1.bf16.xpose.msra.mxu0 0
    %3942 = vmatprep.subr.bf16.mxu0 0
    %3943 = vmatpush1.bf16.xpose.msra.mxu0 0
    %3944 = vmatprep.subr.bf16.mxu0 0
    %3945 = vmatpush1.bf16.xpose.msra.mxu0 %v3928
    %3946 = vmatprep.subr.bf16.mxu0 0
    %3947 = vmatpush2.bf16.xpose.msra.mxu0 0
    %3948 = vmatprep.subr.bf16.mxu0 0
    %3949 = vmatpush2.bf16.xpose.msra.mxu0 0
    %3950 = vmatprep.subr.bf16.mxu0 0
    %3951 = vmatpush2.bf16.xpose.msra.mxu0 0
    %3952 = vmatprep.subr.bf16.mxu0 0
    %3953 = vmatpush2.bf16.xpose.msra.mxu0 0
    %3954 = vmatprep.subr.bf16.mxu0 0
    %3955 = vmatpush2.bf16.xpose.msra.mxu0 0
    %3956 = vmatprep.subr.bf16.mxu0 0
    %3957 = vmatpush2.bf16.xpose.msra.mxu0 0
    %3958 = vmatprep.subr.bf16.mxu0 0
    %3959 = vmatpush2.bf16.xpose.msra.mxu0 0
    %3960 = vmatprep.subr.bf16.mxu0 0
    %3961 = vmatpush2.bf16.xpose.msra.mxu0 0
    %3962 = vmatprep.mubr.bf16.mxu0 0
    %3963 = vmatmul.mubr.bf16.gmra.mxu0 %v3927
    %v3964 = vpop.f32.mrf.mxu0
    %v3965 = vadd.f32 %v380, %v3964
    %v3966 = vpop.f32.mrf.mxu0
    %v3967 = vpop.f32.mrf.mxu0
    %v3968 = vpop.f32.mrf.mxu0
    %3969 = vdwg.mxu0
    %v3970 = vsel %vm421, %v3965, -inf
    %3971 = vmax.xlane.f32.xlu0 %v3970
    %v3972 = vpop.xlane.xlu0 %3971
    %v3973 = vsub.f32 %v3965, %v3972
    %v3974 = vpack.c.bf16 %v3973, %v3973
    %v3976 = vmul.bf16 %v3974, 1069105081
    %v3977 = vpow.bf16.pop %v3976
    %v3978 = vunpack.c.l.bf16 %v3977
    %v3979 = vsel %vm421, %v3978, 0.0
    %3980 = vadd.xlane.f32.xlu0 %v3979
    %v3981 = vpop.xlane.xlu0 %3980
    %v3982 = vrcp.pop %v3981
    %v3983 = vpack.c.bf16 %v3982, %v3982
    %v3984 = vmul.bf16 %v3977, %v3983
    %v3986 = vsel %vm421, %v3984, 0
    %v3989 = vsel %vm440, %v3929, 0
    %3991 = vmatprep.subr.bf16.mxu0 0
    %3992 = vmatpush1.bf16.msra.mxu0 0
    %3993 = vmatprep.subr.bf16.mxu0 0
    %3994 = vmatpush1.bf16.msra.mxu0 0
    %3995 = vmatprep.subr.bf16.mxu0 0
    %3996 = vmatpush1.bf16.msra.mxu0 0
    %3997 = vmatprep.subr.bf16.mxu0 0
    %3998 = vmatpush1.bf16.msra.mxu0 0
    %3999 = vmatprep.subr.bf16.mxu0 0
    %4000 = vmatpush1.bf16.msra.mxu0 0
    %4001 = vmatprep.subr.bf16.mxu0 0
    %4002 = vmatpush1.bf16.msra.mxu0 0
    %4003 = vmatprep.subr.bf16.mxu0 0
    %4004 = vmatpush1.bf16.msra.mxu0 0
    %4005 = vmatprep.subr.bf16.mxu0 0
    %4006 = vmatpush1.bf16.msra.mxu0 %v3989
    %4007 = vmatprep.subr.bf16.mxu0 0
    %4008 = vmatpush2.bf16.msra.mxu0 0
    %4009 = vmatprep.subr.bf16.mxu0 0
    %4010 = vmatpush2.bf16.msra.mxu0 0
    %4011 = vmatprep.subr.bf16.mxu0 0
    %4012 = vmatpush2.bf16.msra.mxu0 0
    %4013 = vmatprep.subr.bf16.mxu0 0
    %4014 = vmatpush2.bf16.msra.mxu0 0
    %4015 = vmatprep.subr.bf16.mxu0 0
    %4016 = vmatpush2.bf16.msra.mxu0 0
    %4017 = vmatprep.subr.bf16.mxu0 0
    %4018 = vmatpush2.bf16.msra.mxu0 0
    %4019 = vmatprep.subr.bf16.mxu0 0
    %4020 = vmatpush2.bf16.msra.mxu0 0
    %4021 = vmatprep.subr.bf16.mxu0 0
    %4022 = vmatpush2.bf16.msra.mxu0 0
    %4023 = vmatprep.mubr.bf16.mxu0 0
    %4024 = vmatmul.mubr.bf16.gmra.mxu0 %v3986
    %v4025 = vpop.f32.mrf.mxu0
    %v4026 = vadd.f32 0.0, %v4025
    %v4027 = vpop.f32.mrf.mxu0
    %v4028 = vpop.f32.mrf.mxu0
    %v4029 = vpop.f32.mrf.mxu0
    %4030 = vdwg.mxu0
    %v4031 = vmul.f32 %v4026, %v487
    %v4032 = vadd.f32 %v4031, %v3926
    %vm4033 = vcmp.gt.f32.partialorder %v4032, 0.0
    %v4034 = vmin.f32 %v4032, 0.0
    %v4035 = vmul.f32 %v4034, 1.442695
    %v4036 = vpow.pop %v4035
    %v4037 = vsub.f32 %v4036, 1.0
    %v4038 = vsel %vm4033, %v4032, %v4037
    %v4039 = vpack.c.bf16 %v4038, %v4038
    %s4040 = scalar_lea.vmem [#allocation4], 2560
    %v4041 = vld [vmem:[%s4040] sm:$0xff]
    %v4042 = vld [vmem:[%s4040 + $0x8] sm:$0xff]
    %v4043 = vld [vmem:[%s4040 + $0x10] sm:$0xff]
    %v4044 = vld [vmem:[%s4040 + $0x18] sm:$0xff]
    %v4045 = vld [vmem:[%s4040 + $0x20] sm:$0xff]
    %v4046 = vld [vmem:[%s4040 + $0x28] sm:$0xff]
    %v4047 = vld [vmem:[%s4040 + $0x30] sm:$0xff]
    %v4048 = vld [vmem:[%s4040 + $0x38] sm:$0xff]
    %v4049 = vld [vmem:[%s4040 + $0x40] sm:$0xff]
    %v4050 = vld [vmem:[%s4040 + $0x48] sm:$0xff]
    %v4051 = vld [vmem:[%s4040 + $0x50] sm:$0xff]
    %v4052 = vld [vmem:[%s4040 + $0x58] sm:$0xff]
    %v4053 = vld [vmem:[%s4040 + $0x60] sm:$0xff]
    %v4054 = vld [vmem:[%s4040 + $0x68] sm:$0xff]
    %v4055 = vld [vmem:[%s4040 + $0x70] sm:$0xff]
    %v4056 = vld [vmem:[%s4040 + $0x78] sm:$0xff]
    %v4057 = vld [vmem:[%s4040 + $0x80] sm:$0xff]
    %v4058 = vld [vmem:[%s4040 + $0x88] sm:$0xff]
    %v4059 = vld [vmem:[%s4040 + $0x90] sm:$0xff]
    %v4060 = vld [vmem:[%s4040 + $0x98] sm:$0xff]
    %v4061 = vld [vmem:[%s4040 + $0xa0] sm:$0xff]
    %v4062 = vld [vmem:[%s4040 + $0xa8] sm:$0xff]
    %v4063 = vld [vmem:[%s4040 + $0xb0] sm:$0xff]
    %v4064 = vld [vmem:[%s4040 + $0xb8] sm:$0xff]
    %v4065 = vld [vmem:[%s4040 + $0xc0] sm:$0xff]
    %v4066 = vld [vmem:[%s4040 + $0xc8] sm:$0xff]
    %v4067 = vld [vmem:[%s4040 + $0xd0] sm:$0xff]
    %v4068 = vld [vmem:[%s4040 + $0xd8] sm:$0xff]
    %v4069 = vld [vmem:[%s4040 + $0xe0] sm:$0xff]
    %v4070 = vld [vmem:[%s4040 + $0xe8] sm:$0xff]
    %v4071 = vld [vmem:[%s4040 + $0xf0] sm:$0xff]
    %v4072 = vld [vmem:[%s4040 + $0xf8] sm:$0xff]
    %s4073 = scalar_lea.vmem [#allocation6], 40
    %v4074 = vld [vmem:[%s4073] sm:$0xf]
    %v4076 = vlaneseq
    %v4077 = vshrl.u32 %v4076, 7
    %v4078 = vsub.s32 0, %v4077
    %v4079 = vrot.slane %v4074, %v4078
    %v4080 = vlaneseq
    %v4081 = vshrl.u32 %v4080, 7
    %v4082 = vsub.s32 1, %v4081
    %v4083 = vrot.slane %v4074, %v4082
    %v4084 = vlaneseq
    %v4085 = vshrl.u32 %v4084, 7
    %v4086 = vsub.s32 2, %v4085
    %v4087 = vrot.slane %v4074, %v4086
    %v4088 = vlaneseq
    %v4089 = vshrl.u32 %v4088, 7
    %v4090 = vsub.s32 3, %v4089
    %v4091 = vrot.slane %v4074, %v4090
    %v4128 = vunpack.c.l.b16 %v4041
    %v4129 = vunpack.c.h.b16 %v4041
    %v4130 = vunpack.c.l.b16 %v4042
    %v4131 = vunpack.c.h.b16 %v4042
    %v4132 = vunpack.c.l.b16 %v4043
    %v4133 = vunpack.c.h.b16 %v4043
    %v4134 = vunpack.c.l.b16 %v4044
    %v4135 = vunpack.c.h.b16 %v4044
    %v4136 = vunpack.c.l.b16 %v4045
    %v4137 = vunpack.c.h.b16 %v4045
    %v4138 = vunpack.c.l.b16 %v4046
    %v4139 = vunpack.c.h.b16 %v4046
    %v4140 = vunpack.c.l.b16 %v4047
    %v4141 = vunpack.c.h.b16 %v4047
    %v4142 = vunpack.c.l.b16 %v4048
    %v4143 = vunpack.c.h.b16 %v4048
    %v4144 = vunpack.c.l.b16 %v4049
    %v4145 = vunpack.c.h.b16 %v4049
    %v4146 = vunpack.c.l.b16 %v4050
    %v4147 = vunpack.c.h.b16 %v4050
    %v4148 = vunpack.c.l.b16 %v4051
    %v4149 = vunpack.c.h.b16 %v4051
    %v4150 = vunpack.c.l.b16 %v4052
    %v4151 = vunpack.c.h.b16 %v4052
    %v4152 = vunpack.c.l.b16 %v4053
    %v4153 = vunpack.c.h.b16 %v4053
    %v4154 = vunpack.c.l.b16 %v4054
    %v4155 = vunpack.c.h.b16 %v4054
    %v4156 = vunpack.c.l.b16 %v4055
    %v4157 = vunpack.c.h.b16 %v4055
    %v4158 = vunpack.c.l.b16 %v4056
    %v4159 = vunpack.c.h.b16 %v4056
    %v4160 = vunpack.c.l.b16 %v4057
    %v4161 = vunpack.c.h.b16 %v4057
    %v4162 = vunpack.c.l.b16 %v4058
    %v4163 = vunpack.c.h.b16 %v4058
    %v4164 = vunpack.c.l.b16 %v4059
    %v4165 = vunpack.c.h.b16 %v4059
    %v4166 = vunpack.c.l.b16 %v4060
    %v4167 = vunpack.c.h.b16 %v4060
    %v4168 = vunpack.c.l.b16 %v4061
    %v4169 = vunpack.c.h.b16 %v4061
    %v4170 = vunpack.c.l.b16 %v4062
    %v4171 = vunpack.c.h.b16 %v4062
    %v4172 = vunpack.c.l.b16 %v4063
    %v4173 = vunpack.c.h.b16 %v4063
    %v4174 = vunpack.c.l.b16 %v4064
    %v4175 = vunpack.c.h.b16 %v4064
    %v4176 = vunpack.c.l.b16 %v4065
    %v4177 = vunpack.c.h.b16 %v4065
    %v4178 = vunpack.c.l.b16 %v4066
    %v4179 = vunpack.c.h.b16 %v4066
    %v4180 = vunpack.c.l.b16 %v4067
    %v4181 = vunpack.c.h.b16 %v4067
    %v4182 = vunpack.c.l.b16 %v4068
    %v4183 = vunpack.c.h.b16 %v4068
    %v4184 = vunpack.c.l.b16 %v4069
    %v4185 = vunpack.c.h.b16 %v4069
    %v4186 = vunpack.c.l.b16 %v4070
    %v4187 = vunpack.c.h.b16 %v4070
    %v4188 = vunpack.c.l.b16 %v4071
    %v4189 = vunpack.c.h.b16 %v4071
    %v4190 = vunpack.c.l.b16 %v4072
    %v4191 = vunpack.c.h.b16 %v4072
    %v4192 = vpack.c.b16 %v4132, %v4128
    %v4193 = vpack.c.b16 %v4133, %v4129
    %v4194 = vpack.c.b16 %v4134, %v4130
    %v4195 = vpack.c.b16 %v4135, %v4131
    %v4196 = vpack.c.b16 %v4140, %v4136
    %v4197 = vpack.c.b16 %v4141, %v4137
    %v4198 = vpack.c.b16 %v4142, %v4138
    %v4199 = vpack.c.b16 %v4143, %v4139
    %v4200 = vpack.c.b16 %v4148, %v4144
    %v4201 = vpack.c.b16 %v4149, %v4145
    %v4202 = vpack.c.b16 %v4150, %v4146
    %v4203 = vpack.c.b16 %v4151, %v4147
    %v4204 = vpack.c.b16 %v4156, %v4152
    %v4205 = vpack.c.b16 %v4157, %v4153
    %v4206 = vpack.c.b16 %v4158, %v4154
    %v4207 = vpack.c.b16 %v4159, %v4155
    %v4208 = vpack.c.b16 %v4164, %v4160
    %v4209 = vpack.c.b16 %v4165, %v4161
    %v4210 = vpack.c.b16 %v4166, %v4162
    %v4211 = vpack.c.b16 %v4167, %v4163
    %v4212 = vpack.c.b16 %v4172, %v4168
    %v4213 = vpack.c.b16 %v4173, %v4169
    %v4214 = vpack.c.b16 %v4174, %v4170
    %v4215 = vpack.c.b16 %v4175, %v4171
    %v4216 = vpack.c.b16 %v4180, %v4176
    %v4217 = vpack.c.b16 %v4181, %v4177
    %v4218 = vpack.c.b16 %v4182, %v4178
    %v4219 = vpack.c.b16 %v4183, %v4179
    %v4220 = vpack.c.b16 %v4188, %v4184
    %v4221 = vpack.c.b16 %v4189, %v4185
    %v4222 = vpack.c.b16 %v4190, %v4186
    %v4223 = vpack.c.b16 %v4191, %v4187
    %4256 = vmatprep.subr.bf16.mxu0 %v4221
    %4257 = vmatpush1.bf16.msra.mxu0 %v4220
    %4258 = vmatprep.subr.bf16.mxu0 %v4217
    %4259 = vmatpush1.bf16.msra.mxu0 %v4216
    %4260 = vmatprep.subr.bf16.mxu0 %v4213
    %4261 = vmatpush1.bf16.msra.mxu0 %v4212
    %4262 = vmatprep.subr.bf16.mxu0 %v4209
    %4263 = vmatpush1.bf16.msra.mxu0 %v4208
    %4264 = vmatprep.subr.bf16.mxu0 %v4205
    %4265 = vmatpush1.bf16.msra.mxu0 %v4204
    %4266 = vmatprep.subr.bf16.mxu0 %v4201
    %4267 = vmatpush1.bf16.msra.mxu0 %v4200
    %4268 = vmatprep.subr.bf16.mxu0 %v4197
    %4269 = vmatpush1.bf16.msra.mxu0 %v4196
    %4270 = vmatprep.subr.bf16.mxu0 %v4193
    %4271 = vmatpush1.bf16.msra.mxu0 %v4192
    %4272 = vmatprep.subr.bf16.mxu0 0
    %4273 = vmatpush2.bf16.msra.mxu0 0
    %4274 = vmatprep.subr.bf16.mxu0 0
    %4275 = vmatpush2.bf16.msra.mxu0 0
    %4276 = vmatprep.subr.bf16.mxu0 0
    %4277 = vmatpush2.bf16.msra.mxu0 0
    %4278 = vmatprep.subr.bf16.mxu0 0
    %4279 = vmatpush2.bf16.msra.mxu0 0
    %4280 = vmatprep.subr.bf16.mxu0 0
    %4281 = vmatpush2.bf16.msra.mxu0 0
    %4282 = vmatprep.subr.bf16.mxu0 0
    %4283 = vmatpush2.bf16.msra.mxu0 0
    %4284 = vmatprep.subr.bf16.mxu0 0
    %4285 = vmatpush2.bf16.msra.mxu0 0
    %4286 = vmatprep.subr.bf16.mxu0 0
    %4287 = vmatpush2.bf16.msra.mxu0 0
    %4288 = vmatprep.mubr.bf16.mxu0 0
    %4289 = vmatmul.mubr.bf16.gmra.mxu0 %v4039
    %v4290 = vpop.f32.mrf.mxu0
    %v4291 = vadd.f32 %v4079, %v4290
    %v4292 = vpop.f32.mrf.mxu0
    %v4293 = vadd.f32 %v4083, %v4292
    %v4294 = vpop.f32.mrf.mxu0
    %v4295 = vpop.f32.mrf.mxu0
    %4296 = vdwg.mxu0
    %4297 = vmatprep.subr.bf16.mxu0 %v4223
    %4298 = vmatpush1.bf16.msra.mxu0 %v4222
    %4299 = vmatprep.subr.bf16.mxu0 %v4219
    %4300 = vmatpush1.bf16.msra.mxu0 %v4218
    %4301 = vmatprep.subr.bf16.mxu0 %v4215
    %4302 = vmatpush1.bf16.msra.mxu0 %v4214
    %4303 = vmatprep.subr.bf16.mxu0 %v4211
    %4304 = vmatpush1.bf16.msra.mxu0 %v4210
    %4305 = vmatprep.subr.bf16.mxu0 %v4207
    %4306 = vmatpush1.bf16.msra.mxu0 %v4206
    %4307 = vmatprep.subr.bf16.mxu0 %v4203
    %4308 = vmatpush1.bf16.msra.mxu0 %v4202
    %4309 = vmatprep.subr.bf16.mxu0 %v4199
    %4310 = vmatpush1.bf16.msra.mxu0 %v4198
    %4311 = vmatprep.subr.bf16.mxu0 %v4195
    %4312 = vmatpush1.bf16.msra.mxu0 %v4194
    %4313 = vmatprep.subr.bf16.mxu0 0
    %4314 = vmatpush2.bf16.msra.mxu0 0
    %4315 = vmatprep.subr.bf16.mxu0 0
    %4316 = vmatpush2.bf16.msra.mxu0 0
    %4317 = vmatprep.subr.bf16.mxu0 0
    %4318 = vmatpush2.bf16.msra.mxu0 0
    %4319 = vmatprep.subr.bf16.mxu0 0
    %4320 = vmatpush2.bf16.msra.mxu0 0
    %4321 = vmatprep.subr.bf16.mxu0 0
    %4322 = vmatpush2.bf16.msra.mxu0 0
    %4323 = vmatprep.subr.bf16.mxu0 0
    %4324 = vmatpush2.bf16.msra.mxu0 0
    %4325 = vmatprep.subr.bf16.mxu0 0
    %4326 = vmatpush2.bf16.msra.mxu0 0
    %4327 = vmatprep.subr.bf16.mxu0 0
    %4328 = vmatpush2.bf16.msra.mxu0 0
    %4329 = vmatprep.mubr.bf16.mxu0 0
    %4330 = vmatmul.mubr.bf16.gmra.mxu0 %v4039
    %v4331 = vpop.f32.mrf.mxu0
    %v4332 = vadd.f32 %v4087, %v4331
    %v4333 = vpop.f32.mrf.mxu0
    %v4334 = vadd.f32 %v4091, %v4333
    %v4335 = vpop.f32.mrf.mxu0
    %v4336 = vpop.f32.mrf.mxu0
    %4337 = vdwg.mxu0
    %v4338 = vpack.c.bf16 %v4291, %v4291
    %v4339 = vpack.c.bf16 %v4293, %v4293
    %v4340 = vpack.c.bf16 %v4332, %v4332
    %4341 = vmatprep.subr.bf16.mxu0 0
    %4342 = vmatpush1.bf16.xpose.msra.mxu0 0
    %4343 = vmatprep.subr.bf16.mxu0 0
    %4344 = vmatpush1.bf16.xpose.msra.mxu0 0
    %4345 = vmatprep.subr.bf16.mxu0 0
    %4346 = vmatpush1.bf16.xpose.msra.mxu0 0
    %4347 = vmatprep.subr.bf16.mxu0 0
    %4348 = vmatpush1.bf16.xpose.msra.mxu0 0
    %4349 = vmatprep.subr.bf16.mxu0 0
    %4350 = vmatpush1.bf16.xpose.msra.mxu0 0
    %4351 = vmatprep.subr.bf16.mxu0 0
    %4352 = vmatpush1.bf16.xpose.msra.mxu0 0
    %4353 = vmatprep.subr.bf16.mxu0 0
    %4354 = vmatpush1.bf16.xpose.msra.mxu0 0
    %4355 = vmatprep.subr.bf16.mxu0 0
    %4356 = vmatpush1.bf16.xpose.msra.mxu0 %v4339
    %4357 = vmatprep.subr.bf16.mxu0 0
    %4358 = vmatpush2.bf16.xpose.msra.mxu0 0
    %4359 = vmatprep.subr.bf16.mxu0 0
    %4360 = vmatpush2.bf16.xpose.msra.mxu0 0
    %4361 = vmatprep.subr.bf16.mxu0 0
    %4362 = vmatpush2.bf16.xpose.msra.mxu0 0
    %4363 = vmatprep.subr.bf16.mxu0 0
    %4364 = vmatpush2.bf16.xpose.msra.mxu0 0
    %4365 = vmatprep.subr.bf16.mxu0 0
    %4366 = vmatpush2.bf16.xpose.msra.mxu0 0
    %4367 = vmatprep.subr.bf16.mxu0 0
    %4368 = vmatpush2.bf16.xpose.msra.mxu0 0
    %4369 = vmatprep.subr.bf16.mxu0 0
    %4370 = vmatpush2.bf16.xpose.msra.mxu0 0
    %4371 = vmatprep.subr.bf16.mxu0 0
    %4372 = vmatpush2.bf16.xpose.msra.mxu0 0
    %4373 = vmatprep.mubr.bf16.mxu0 0
    %4374 = vmatmul.mubr.bf16.gmra.mxu0 %v4338
    %v4375 = vpop.f32.mrf.mxu0
    %v4376 = vadd.f32 %v380, %v4375
    %v4377 = vpop.f32.mrf.mxu0
    %v4378 = vpop.f32.mrf.mxu0
    %v4379 = vpop.f32.mrf.mxu0
    %4380 = vdwg.mxu0
    %v4381 = vsel %vm421, %v4376, -inf
    %4382 = vmax.xlane.f32.xlu0 %v4381
    %v4383 = vpop.xlane.xlu0 %4382
    %v4384 = vsub.f32 %v4376, %v4383
    %v4385 = vpack.c.bf16 %v4384, %v4384
    %v4387 = vmul.bf16 %v4385, 1069105081
    %v4388 = vpow.bf16.pop %v4387
    %v4389 = vunpack.c.l.bf16 %v4388
    %v4390 = vsel %vm421, %v4389, 0.0
    %4391 = vadd.xlane.f32.xlu0 %v4390
    %v4392 = vpop.xlane.xlu0 %4391
    %v4393 = vrcp.pop %v4392
    %v4394 = vpack.c.bf16 %v4393, %v4393
    %v4395 = vmul.bf16 %v4388, %v4394
    %v4397 = vsel %vm421, %v4395, 0
    %v4400 = vsel %vm440, %v4340, 0
    %4402 = vmatprep.subr.bf16.mxu0 0
    %4403 = vmatpush1.bf16.msra.mxu0 0
    %4404 = vmatprep.subr.bf16.mxu0 0
    %4405 = vmatpush1.bf16.msra.mxu0 0
    %4406 = vmatprep.subr.bf16.mxu0 0
    %4407 = vmatpush1.bf16.msra.mxu0 0
    %4408 = vmatprep.subr.bf16.mxu0 0
    %4409 = vmatpush1.bf16.msra.mxu0 0
    %4410 = vmatprep.subr.bf16.mxu0 0
    %4411 = vmatpush1.bf16.msra.mxu0 0
    %4412 = vmatprep.subr.bf16.mxu0 0
    %4413 = vmatpush1.bf16.msra.mxu0 0
    %4414 = vmatprep.subr.bf16.mxu0 0
    %4415 = vmatpush1.bf16.msra.mxu0 0
    %4416 = vmatprep.subr.bf16.mxu0 0
    %4417 = vmatpush1.bf16.msra.mxu0 %v4400
    %4418 = vmatprep.subr.bf16.mxu0 0
    %4419 = vmatpush2.bf16.msra.mxu0 0
    %4420 = vmatprep.subr.bf16.mxu0 0
    %4421 = vmatpush2.bf16.msra.mxu0 0
    %4422 = vmatprep.subr.bf16.mxu0 0
    %4423 = vmatpush2.bf16.msra.mxu0 0
    %4424 = vmatprep.subr.bf16.mxu0 0
    %4425 = vmatpush2.bf16.msra.mxu0 0
    %4426 = vmatprep.subr.bf16.mxu0 0
    %4427 = vmatpush2.bf16.msra.mxu0 0
    %4428 = vmatprep.subr.bf16.mxu0 0
    %4429 = vmatpush2.bf16.msra.mxu0 0
    %4430 = vmatprep.subr.bf16.mxu0 0
    %4431 = vmatpush2.bf16.msra.mxu0 0
    %4432 = vmatprep.subr.bf16.mxu0 0
    %4433 = vmatpush2.bf16.msra.mxu0 0
    %4434 = vmatprep.mubr.bf16.mxu0 0
    %4435 = vmatmul.mubr.bf16.gmra.mxu0 %v4397
    %v4436 = vpop.f32.mrf.mxu0
    %v4437 = vadd.f32 0.0, %v4436
    %v4438 = vpop.f32.mrf.mxu0
    %v4439 = vpop.f32.mrf.mxu0
    %v4440 = vpop.f32.mrf.mxu0
    %4441 = vdwg.mxu0
    %v4442 = vmul.f32 %v4437, %v487
    %v4443 = vadd.f32 %v4442, %v4334
    %v4444 = vpack.c.bf16 %v4443, %v4443
    %s4445 = scalar_lea.vmem [#allocation4], 2816
    %v4446 = vld [vmem:[%s4445] sm:$0xff]
    %v4447 = vld [vmem:[%s4445 + $0x8] sm:$0xff]
    %v4448 = vld [vmem:[%s4445 + $0x10] sm:$0xff]
    %v4449 = vld [vmem:[%s4445 + $0x18] sm:$0xff]
    %v4450 = vld [vmem:[%s4445 + $0x20] sm:$0xff]
    %v4451 = vld [vmem:[%s4445 + $0x28] sm:$0xff]
    %v4452 = vld [vmem:[%s4445 + $0x30] sm:$0xff]
    %v4453 = vld [vmem:[%s4445 + $0x38] sm:$0xff]
    %v4454 = vld [vmem:[%s4445 + $0x40] sm:$0xff]
    %v4455 = vld [vmem:[%s4445 + $0x48] sm:$0xff]
    %v4456 = vld [vmem:[%s4445 + $0x50] sm:$0xff]
    %v4457 = vld [vmem:[%s4445 + $0x58] sm:$0xff]
    %v4458 = vld [vmem:[%s4445 + $0x60] sm:$0xff]
    %v4459 = vld [vmem:[%s4445 + $0x68] sm:$0xff]
    %v4460 = vld [vmem:[%s4445 + $0x70] sm:$0xff]
    %v4461 = vld [vmem:[%s4445 + $0x78] sm:$0xff]
    %v4462 = vld [vmem:[%s4445 + $0x80] sm:$0xff]
    %v4463 = vld [vmem:[%s4445 + $0x88] sm:$0xff]
    %v4464 = vld [vmem:[%s4445 + $0x90] sm:$0xff]
    %v4465 = vld [vmem:[%s4445 + $0x98] sm:$0xff]
    %v4466 = vld [vmem:[%s4445 + $0xa0] sm:$0xff]
    %v4467 = vld [vmem:[%s4445 + $0xa8] sm:$0xff]
    %v4468 = vld [vmem:[%s4445 + $0xb0] sm:$0xff]
    %v4469 = vld [vmem:[%s4445 + $0xb8] sm:$0xff]
    %v4470 = vld [vmem:[%s4445 + $0xc0] sm:$0xff]
    %v4471 = vld [vmem:[%s4445 + $0xc8] sm:$0xff]
    %v4472 = vld [vmem:[%s4445 + $0xd0] sm:$0xff]
    %v4473 = vld [vmem:[%s4445 + $0xd8] sm:$0xff]
    %v4474 = vld [vmem:[%s4445 + $0xe0] sm:$0xff]
    %v4475 = vld [vmem:[%s4445 + $0xe8] sm:$0xff]
    %v4476 = vld [vmem:[%s4445 + $0xf0] sm:$0xff]
    %v4477 = vld [vmem:[%s4445 + $0xf8] sm:$0xff]
    %s4478 = scalar_lea.vmem [#allocation6], 44
    %v4479 = vld [vmem:[%s4478] sm:$0xf]
    %v4481 = vlaneseq
    %v4482 = vshrl.u32 %v4481, 7
    %v4483 = vsub.s32 0, %v4482
    %v4484 = vrot.slane %v4479, %v4483
    %v4485 = vlaneseq
    %v4486 = vshrl.u32 %v4485, 7
    %v4487 = vsub.s32 1, %v4486
    %v4488 = vrot.slane %v4479, %v4487
    %v4489 = vlaneseq
    %v4490 = vshrl.u32 %v4489, 7
    %v4491 = vsub.s32 2, %v4490
    %v4492 = vrot.slane %v4479, %v4491
    %v4493 = vlaneseq
    %v4494 = vshrl.u32 %v4493, 7
    %v4495 = vsub.s32 3, %v4494
    %v4496 = vrot.slane %v4479, %v4495
    %v4533 = vunpack.c.l.b16 %v4446
    %v4534 = vunpack.c.h.b16 %v4446
    %v4535 = vunpack.c.l.b16 %v4447
    %v4536 = vunpack.c.h.b16 %v4447
    %v4537 = vunpack.c.l.b16 %v4448
    %v4538 = vunpack.c.h.b16 %v4448
    %v4539 = vunpack.c.l.b16 %v4449
    %v4540 = vunpack.c.h.b16 %v4449
    %v4541 = vunpack.c.l.b16 %v4450
    %v4542 = vunpack.c.h.b16 %v4450
    %v4543 = vunpack.c.l.b16 %v4451
    %v4544 = vunpack.c.h.b16 %v4451
    %v4545 = vunpack.c.l.b16 %v4452
    %v4546 = vunpack.c.h.b16 %v4452
    %v4547 = vunpack.c.l.b16 %v4453
    %v4548 = vunpack.c.h.b16 %v4453
    %v4549 = vunpack.c.l.b16 %v4454
    %v4550 = vunpack.c.h.b16 %v4454
    %v4551 = vunpack.c.l.b16 %v4455
    %v4552 = vunpack.c.h.b16 %v4455
    %v4553 = vunpack.c.l.b16 %v4456
    %v4554 = vunpack.c.h.b16 %v4456
    %v4555 = vunpack.c.l.b16 %v4457
    %v4556 = vunpack.c.h.b16 %v4457
    %v4557 = vunpack.c.l.b16 %v4458
    %v4558 = vunpack.c.h.b16 %v4458
    %v4559 = vunpack.c.l.b16 %v4459
    %v4560 = vunpack.c.h.b16 %v4459
    %v4561 = vunpack.c.l.b16 %v4460
    %v4562 = vunpack.c.h.b16 %v4460
    %v4563 = vunpack.c.l.b16 %v4461
    %v4564 = vunpack.c.h.b16 %v4461
    %v4565 = vunpack.c.l.b16 %v4462
    %v4566 = vunpack.c.h.b16 %v4462
    %v4567 = vunpack.c.l.b16 %v4463
    %v4568 = vunpack.c.h.b16 %v4463
    %v4569 = vunpack.c.l.b16 %v4464
    %v4570 = vunpack.c.h.b16 %v4464
    %v4571 = vunpack.c.l.b16 %v4465
    %v4572 = vunpack.c.h.b16 %v4465
    %v4573 = vunpack.c.l.b16 %v4466
    %v4574 = vunpack.c.h.b16 %v4466
    %v4575 = vunpack.c.l.b16 %v4467
    %v4576 = vunpack.c.h.b16 %v4467
    %v4577 = vunpack.c.l.b16 %v4468
    %v4578 = vunpack.c.h.b16 %v4468
    %v4579 = vunpack.c.l.b16 %v4469
    %v4580 = vunpack.c.h.b16 %v4469
    %v4581 = vunpack.c.l.b16 %v4470
    %v4582 = vunpack.c.h.b16 %v4470
    %v4583 = vunpack.c.l.b16 %v4471
    %v4584 = vunpack.c.h.b16 %v4471
    %v4585 = vunpack.c.l.b16 %v4472
    %v4586 = vunpack.c.h.b16 %v4472
    %v4587 = vunpack.c.l.b16 %v4473
    %v4588 = vunpack.c.h.b16 %v4473
    %v4589 = vunpack.c.l.b16 %v4474
    %v4590 = vunpack.c.h.b16 %v4474
    %v4591 = vunpack.c.l.b16 %v4475
    %v4592 = vunpack.c.h.b16 %v4475
    %v4593 = vunpack.c.l.b16 %v4476
    %v4594 = vunpack.c.h.b16 %v4476
    %v4595 = vunpack.c.l.b16 %v4477
    %v4596 = vunpack.c.h.b16 %v4477
    %v4597 = vpack.c.b16 %v4537, %v4533
    %v4598 = vpack.c.b16 %v4538, %v4534
    %v4599 = vpack.c.b16 %v4539, %v4535
    %v4600 = vpack.c.b16 %v4540, %v4536
    %v4601 = vpack.c.b16 %v4545, %v4541
    %v4602 = vpack.c.b16 %v4546, %v4542
    %v4603 = vpack.c.b16 %v4547, %v4543
    %v4604 = vpack.c.b16 %v4548, %v4544
    %v4605 = vpack.c.b16 %v4553, %v4549
    %v4606 = vpack.c.b16 %v4554, %v4550
    %v4607 = vpack.c.b16 %v4555, %v4551
    %v4608 = vpack.c.b16 %v4556, %v4552
    %v4609 = vpack.c.b16 %v4561, %v4557
    %v4610 = vpack.c.b16 %v4562, %v4558
    %v4611 = vpack.c.b16 %v4563, %v4559
    %v4612 = vpack.c.b16 %v4564, %v4560
    %v4613 = vpack.c.b16 %v4569, %v4565
    %v4614 = vpack.c.b16 %v4570, %v4566
    %v4615 = vpack.c.b16 %v4571, %v4567
    %v4616 = vpack.c.b16 %v4572, %v4568
    %v4617 = vpack.c.b16 %v4577, %v4573
    %v4618 = vpack.c.b16 %v4578, %v4574
    %v4619 = vpack.c.b16 %v4579, %v4575
    %v4620 = vpack.c.b16 %v4580, %v4576
    %v4621 = vpack.c.b16 %v4585, %v4581
    %v4622 = vpack.c.b16 %v4586, %v4582
    %v4623 = vpack.c.b16 %v4587, %v4583
    %v4624 = vpack.c.b16 %v4588, %v4584
    %v4625 = vpack.c.b16 %v4593, %v4589
    %v4626 = vpack.c.b16 %v4594, %v4590
    %v4627 = vpack.c.b16 %v4595, %v4591
    %v4628 = vpack.c.b16 %v4596, %v4592
    %4661 = vmatprep.subr.bf16.mxu0 %v4626
    %4662 = vmatpush1.bf16.msra.mxu0 %v4625
    %4663 = vmatprep.subr.bf16.mxu0 %v4622
    %4664 = vmatpush1.bf16.msra.mxu0 %v4621
    %4665 = vmatprep.subr.bf16.mxu0 %v4618
    %4666 = vmatpush1.bf16.msra.mxu0 %v4617
    %4667 = vmatprep.subr.bf16.mxu0 %v4614
    %4668 = vmatpush1.bf16.msra.mxu0 %v4613
    %4669 = vmatprep.subr.bf16.mxu0 %v4610
    %4670 = vmatpush1.bf16.msra.mxu0 %v4609
    %4671 = vmatprep.subr.bf16.mxu0 %v4606
    %4672 = vmatpush1.bf16.msra.mxu0 %v4605
    %4673 = vmatprep.subr.bf16.mxu0 %v4602
    %4674 = vmatpush1.bf16.msra.mxu0 %v4601
    %4675 = vmatprep.subr.bf16.mxu0 %v4598
    %4676 = vmatpush1.bf16.msra.mxu0 %v4597
    %4677 = vmatprep.subr.bf16.mxu0 0
    %4678 = vmatpush2.bf16.msra.mxu0 0
    %4679 = vmatprep.subr.bf16.mxu0 0
    %4680 = vmatpush2.bf16.msra.mxu0 0
    %4681 = vmatprep.subr.bf16.mxu0 0
    %4682 = vmatpush2.bf16.msra.mxu0 0
    %4683 = vmatprep.subr.bf16.mxu0 0
    %4684 = vmatpush2.bf16.msra.mxu0 0
    %4685 = vmatprep.subr.bf16.mxu0 0
    %4686 = vmatpush2.bf16.msra.mxu0 0
    %4687 = vmatprep.subr.bf16.mxu0 0
    %4688 = vmatpush2.bf16.msra.mxu0 0
    %4689 = vmatprep.subr.bf16.mxu0 0
    %4690 = vmatpush2.bf16.msra.mxu0 0
    %4691 = vmatprep.subr.bf16.mxu0 0
    %4692 = vmatpush2.bf16.msra.mxu0 0
    %4693 = vmatprep.mubr.bf16.mxu0 0
    %4694 = vmatmul.mubr.bf16.gmra.mxu0 %v4444
    %v4695 = vpop.f32.mrf.mxu0
    %v4696 = vadd.f32 %v4484, %v4695
    %v4697 = vpop.f32.mrf.mxu0
    %v4698 = vadd.f32 %v4488, %v4697
    %v4699 = vpop.f32.mrf.mxu0
    %v4700 = vpop.f32.mrf.mxu0
    %4701 = vdwg.mxu0
    %4702 = vmatprep.subr.bf16.mxu0 %v4628
    %4703 = vmatpush1.bf16.msra.mxu0 %v4627
    %4704 = vmatprep.subr.bf16.mxu0 %v4624
    %4705 = vmatpush1.bf16.msra.mxu0 %v4623
    %4706 = vmatprep.subr.bf16.mxu0 %v4620
    %4707 = vmatpush1.bf16.msra.mxu0 %v4619
    %4708 = vmatprep.subr.bf16.mxu0 %v4616
    %4709 = vmatpush1.bf16.msra.mxu0 %v4615
    %4710 = vmatprep.subr.bf16.mxu0 %v4612
    %4711 = vmatpush1.bf16.msra.mxu0 %v4611
    %4712 = vmatprep.subr.bf16.mxu0 %v4608
    %4713 = vmatpush1.bf16.msra.mxu0 %v4607
    %4714 = vmatprep.subr.bf16.mxu0 %v4604
    %4715 = vmatpush1.bf16.msra.mxu0 %v4603
    %4716 = vmatprep.subr.bf16.mxu0 %v4600
    %4717 = vmatpush1.bf16.msra.mxu0 %v4599
    %4718 = vmatprep.subr.bf16.mxu0 0
    %4719 = vmatpush2.bf16.msra.mxu0 0
    %4720 = vmatprep.subr.bf16.mxu0 0
    %4721 = vmatpush2.bf16.msra.mxu0 0
    %4722 = vmatprep.subr.bf16.mxu0 0
    %4723 = vmatpush2.bf16.msra.mxu0 0
    %4724 = vmatprep.subr.bf16.mxu0 0
    %4725 = vmatpush2.bf16.msra.mxu0 0
    %4726 = vmatprep.subr.bf16.mxu0 0
    %4727 = vmatpush2.bf16.msra.mxu0 0
    %4728 = vmatprep.subr.bf16.mxu0 0
    %4729 = vmatpush2.bf16.msra.mxu0 0
    %4730 = vmatprep.subr.bf16.mxu0 0
    %4731 = vmatpush2.bf16.msra.mxu0 0
    %4732 = vmatprep.subr.bf16.mxu0 0
    %4733 = vmatpush2.bf16.msra.mxu0 0
    %4734 = vmatprep.mubr.bf16.mxu0 0
    %4735 = vmatmul.mubr.bf16.gmra.mxu0 %v4444
    %v4736 = vpop.f32.mrf.mxu0
    %v4737 = vadd.f32 %v4492, %v4736
    %v4738 = vpop.f32.mrf.mxu0
    %v4739 = vadd.f32 %v4496, %v4738
    %v4740 = vpop.f32.mrf.mxu0
    %v4741 = vpop.f32.mrf.mxu0
    %4742 = vdwg.mxu0
    %v4743 = vpack.c.bf16 %v4696, %v4696
    %v4744 = vpack.c.bf16 %v4698, %v4698
    %v4745 = vpack.c.bf16 %v4737, %v4737
    %4746 = vmatprep.subr.bf16.mxu0 0
    %4747 = vmatpush1.bf16.xpose.msra.mxu0 0
    %4748 = vmatprep.subr.bf16.mxu0 0
    %4749 = vmatpush1.bf16.xpose.msra.mxu0 0
    %4750 = vmatprep.subr.bf16.mxu0 0
    %4751 = vmatpush1.bf16.xpose.msra.mxu0 0
    %4752 = vmatprep.subr.bf16.mxu0 0
    %4753 = vmatpush1.bf16.xpose.msra.mxu0 0
    %4754 = vmatprep.subr.bf16.mxu0 0
    %4755 = vmatpush1.bf16.xpose.msra.mxu0 0
    %4756 = vmatprep.subr.bf16.mxu0 0
    %4757 = vmatpush1.bf16.xpose.msra.mxu0 0
    %4758 = vmatprep.subr.bf16.mxu0 0
    %4759 = vmatpush1.bf16.xpose.msra.mxu0 0
    %4760 = vmatprep.subr.bf16.mxu0 0
    %4761 = vmatpush1.bf16.xpose.msra.mxu0 %v4744
    %4762 = vmatprep.subr.bf16.mxu0 0
    %4763 = vmatpush2.bf16.xpose.msra.mxu0 0
    %4764 = vmatprep.subr.bf16.mxu0 0
    %4765 = vmatpush2.bf16.xpose.msra.mxu0 0
    %4766 = vmatprep.subr.bf16.mxu0 0
    %4767 = vmatpush2.bf16.xpose.msra.mxu0 0
    %4768 = vmatprep.subr.bf16.mxu0 0
    %4769 = vmatpush2.bf16.xpose.msra.mxu0 0
    %4770 = vmatprep.subr.bf16.mxu0 0
    %4771 = vmatpush2.bf16.xpose.msra.mxu0 0
    %4772 = vmatprep.subr.bf16.mxu0 0
    %4773 = vmatpush2.bf16.xpose.msra.mxu0 0
    %4774 = vmatprep.subr.bf16.mxu0 0
    %4775 = vmatpush2.bf16.xpose.msra.mxu0 0
    %4776 = vmatprep.subr.bf16.mxu0 0
    %4777 = vmatpush2.bf16.xpose.msra.mxu0 0
    %4778 = vmatprep.mubr.bf16.mxu0 0
    %4779 = vmatmul.mubr.bf16.gmra.mxu0 %v4743
    %v4780 = vpop.f32.mrf.mxu0
    %v4781 = vadd.f32 %v380, %v4780
    %v4782 = vpop.f32.mrf.mxu0
    %v4783 = vpop.f32.mrf.mxu0
    %v4784 = vpop.f32.mrf.mxu0
    %4785 = vdwg.mxu0
    %v4786 = vsel %vm421, %v4781, -inf
    %4787 = vmax.xlane.f32.xlu0 %v4786
    %v4788 = vpop.xlane.xlu0 %4787
    %v4789 = vsub.f32 %v4781, %v4788
    %v4790 = vpack.c.bf16 %v4789, %v4789
    %v4792 = vmul.bf16 %v4790, 1069105081
    %v4793 = vpow.bf16.pop %v4792
    %v4794 = vunpack.c.l.bf16 %v4793
    %v4795 = vsel %vm421, %v4794, 0.0
    %4796 = vadd.xlane.f32.xlu0 %v4795
    %v4797 = vpop.xlane.xlu0 %4796
    %v4798 = vrcp.pop %v4797
    %v4799 = vpack.c.bf16 %v4798, %v4798
    %v4800 = vmul.bf16 %v4793, %v4799
    %v4802 = vsel %vm421, %v4800, 0
    %v4805 = vsel %vm440, %v4745, 0
    %4807 = vmatprep.subr.bf16.mxu0 0
    %4808 = vmatpush1.bf16.msra.mxu0 0
    %4809 = vmatprep.subr.bf16.mxu0 0
    %4810 = vmatpush1.bf16.msra.mxu0 0
    %4811 = vmatprep.subr.bf16.mxu0 0
    %4812 = vmatpush1.bf16.msra.mxu0 0
    %4813 = vmatprep.subr.bf16.mxu0 0
    %4814 = vmatpush1.bf16.msra.mxu0 0
    %4815 = vmatprep.subr.bf16.mxu0 0
    %4816 = vmatpush1.bf16.msra.mxu0 0
    %4817 = vmatprep.subr.bf16.mxu0 0
    %4818 = vmatpush1.bf16.msra.mxu0 0
    %4819 = vmatprep.subr.bf16.mxu0 0
    %4820 = vmatpush1.bf16.msra.mxu0 0
    %4821 = vmatprep.subr.bf16.mxu0 0
    %4822 = vmatpush1.bf16.msra.mxu0 %v4805
    %4823 = vmatprep.subr.bf16.mxu0 0
    %4824 = vmatpush2.bf16.msra.mxu0 0
    %4825 = vmatprep.subr.bf16.mxu0 0
    %4826 = vmatpush2.bf16.msra.mxu0 0
    %4827 = vmatprep.subr.bf16.mxu0 0
    %4828 = vmatpush2.bf16.msra.mxu0 0
    %4829 = vmatprep.subr.bf16.mxu0 0
    %4830 = vmatpush2.bf16.msra.mxu0 0
    %4831 = vmatprep.subr.bf16.mxu0 0
    %4832 = vmatpush2.bf16.msra.mxu0 0
    %4833 = vmatprep.subr.bf16.mxu0 0
    %4834 = vmatpush2.bf16.msra.mxu0 0
    %4835 = vmatprep.subr.bf16.mxu0 0
    %4836 = vmatpush2.bf16.msra.mxu0 0
    %4837 = vmatprep.subr.bf16.mxu0 0
    %4838 = vmatpush2.bf16.msra.mxu0 0
    %4839 = vmatprep.mubr.bf16.mxu0 0
    %4840 = vmatmul.mubr.bf16.gmra.mxu0 %v4802
    %v4841 = vpop.f32.mrf.mxu0
    %v4842 = vadd.f32 0.0, %v4841
    %v4843 = vpop.f32.mrf.mxu0
    %v4844 = vpop.f32.mrf.mxu0
    %v4845 = vpop.f32.mrf.mxu0
    %4846 = vdwg.mxu0
    %v4847 = vmul.f32 %v4842, %v487
    %v4848 = vadd.f32 %v4847, %v4739
    %vm4849 = vcmp.gt.f32.partialorder %v4848, 0.0
    %v4850 = vmin.f32 %v4848, 0.0
    %v4851 = vmul.f32 %v4850, 1.442695
    %v4852 = vpow.pop %v4851
    %v4853 = vsub.f32 %v4852, 1.0
    %v4854 = vsel %vm4849, %v4848, %v4853
    %v4855 = vpack.c.bf16 %v4854, %v4854
    %s4856 = scalar_lea.vmem [#allocation4], 3072
    %v4857 = vld [vmem:[%s4856] sm:$0xff]
    %v4858 = vld [vmem:[%s4856 + $0x8] sm:$0xff]
    %v4859 = vld [vmem:[%s4856 + $0x10] sm:$0xff]
    %v4860 = vld [vmem:[%s4856 + $0x18] sm:$0xff]
    %v4861 = vld [vmem:[%s4856 + $0x20] sm:$0xff]
    %v4862 = vld [vmem:[%s4856 + $0x28] sm:$0xff]
    %v4863 = vld [vmem:[%s4856 + $0x30] sm:$0xff]
    %v4864 = vld [vmem:[%s4856 + $0x38] sm:$0xff]
    %v4865 = vld [vmem:[%s4856 + $0x40] sm:$0xff]
    %v4866 = vld [vmem:[%s4856 + $0x48] sm:$0xff]
    %v4867 = vld [vmem:[%s4856 + $0x50] sm:$0xff]
    %v4868 = vld [vmem:[%s4856 + $0x58] sm:$0xff]
    %v4869 = vld [vmem:[%s4856 + $0x60] sm:$0xff]
    %v4870 = vld [vmem:[%s4856 + $0x68] sm:$0xff]
    %v4871 = vld [vmem:[%s4856 + $0x70] sm:$0xff]
    %v4872 = vld [vmem:[%s4856 + $0x78] sm:$0xff]
    %v4873 = vld [vmem:[%s4856 + $0x80] sm:$0xff]
    %v4874 = vld [vmem:[%s4856 + $0x88] sm:$0xff]
    %v4875 = vld [vmem:[%s4856 + $0x90] sm:$0xff]
    %v4876 = vld [vmem:[%s4856 + $0x98] sm:$0xff]
    %v4877 = vld [vmem:[%s4856 + $0xa0] sm:$0xff]
    %v4878 = vld [vmem:[%s4856 + $0xa8] sm:$0xff]
    %v4879 = vld [vmem:[%s4856 + $0xb0] sm:$0xff]
    %v4880 = vld [vmem:[%s4856 + $0xb8] sm:$0xff]
    %v4881 = vld [vmem:[%s4856 + $0xc0] sm:$0xff]
    %v4882 = vld [vmem:[%s4856 + $0xc8] sm:$0xff]
    %v4883 = vld [vmem:[%s4856 + $0xd0] sm:$0xff]
    %v4884 = vld [vmem:[%s4856 + $0xd8] sm:$0xff]
    %v4885 = vld [vmem:[%s4856 + $0xe0] sm:$0xff]
    %v4886 = vld [vmem:[%s4856 + $0xe8] sm:$0xff]
    %v4887 = vld [vmem:[%s4856 + $0xf0] sm:$0xff]
    %v4888 = vld [vmem:[%s4856 + $0xf8] sm:$0xff]
    %s4889 = scalar_lea.vmem [#allocation6], 48
    %v4890 = vld [vmem:[%s4889] sm:$0xf]
    %v4892 = vlaneseq
    %v4893 = vshrl.u32 %v4892, 7
    %v4894 = vsub.s32 0, %v4893
    %v4895 = vrot.slane %v4890, %v4894
    %v4896 = vlaneseq
    %v4897 = vshrl.u32 %v4896, 7
    %v4898 = vsub.s32 1, %v4897
    %v4899 = vrot.slane %v4890, %v4898
    %v4900 = vlaneseq
    %v4901 = vshrl.u32 %v4900, 7
    %v4902 = vsub.s32 2, %v4901
    %v4903 = vrot.slane %v4890, %v4902
    %v4904 = vlaneseq
    %v4905 = vshrl.u32 %v4904, 7
    %v4906 = vsub.s32 3, %v4905
    %v4907 = vrot.slane %v4890, %v4906
    %v4944 = vunpack.c.l.b16 %v4857
    %v4945 = vunpack.c.h.b16 %v4857
    %v4946 = vunpack.c.l.b16 %v4858
    %v4947 = vunpack.c.h.b16 %v4858
    %v4948 = vunpack.c.l.b16 %v4859
    %v4949 = vunpack.c.h.b16 %v4859
    %v4950 = vunpack.c.l.b16 %v4860
    %v4951 = vunpack.c.h.b16 %v4860
    %v4952 = vunpack.c.l.b16 %v4861
    %v4953 = vunpack.c.h.b16 %v4861
    %v4954 = vunpack.c.l.b16 %v4862
    %v4955 = vunpack.c.h.b16 %v4862
    %v4956 = vunpack.c.l.b16 %v4863
    %v4957 = vunpack.c.h.b16 %v4863
    %v4958 = vunpack.c.l.b16 %v4864
    %v4959 = vunpack.c.h.b16 %v4864
    %v4960 = vunpack.c.l.b16 %v4865
    %v4961 = vunpack.c.h.b16 %v4865
    %v4962 = vunpack.c.l.b16 %v4866
    %v4963 = vunpack.c.h.b16 %v4866
    %v4964 = vunpack.c.l.b16 %v4867
    %v4965 = vunpack.c.h.b16 %v4867
    %v4966 = vunpack.c.l.b16 %v4868
    %v4967 = vunpack.c.h.b16 %v4868
    %v4968 = vunpack.c.l.b16 %v4869
    %v4969 = vunpack.c.h.b16 %v4869
    %v4970 = vunpack.c.l.b16 %v4870
    %v4971 = vunpack.c.h.b16 %v4870
    %v4972 = vunpack.c.l.b16 %v4871
    %v4973 = vunpack.c.h.b16 %v4871
    %v4974 = vunpack.c.l.b16 %v4872
    %v4975 = vunpack.c.h.b16 %v4872
    %v4976 = vunpack.c.l.b16 %v4873
    %v4977 = vunpack.c.h.b16 %v4873
    %v4978 = vunpack.c.l.b16 %v4874
    %v4979 = vunpack.c.h.b16 %v4874
    %v4980 = vunpack.c.l.b16 %v4875
    %v4981 = vunpack.c.h.b16 %v4875
    %v4982 = vunpack.c.l.b16 %v4876
    %v4983 = vunpack.c.h.b16 %v4876
    %v4984 = vunpack.c.l.b16 %v4877
    %v4985 = vunpack.c.h.b16 %v4877
    %v4986 = vunpack.c.l.b16 %v4878
    %v4987 = vunpack.c.h.b16 %v4878
    %v4988 = vunpack.c.l.b16 %v4879
    %v4989 = vunpack.c.h.b16 %v4879
    %v4990 = vunpack.c.l.b16 %v4880
    %v4991 = vunpack.c.h.b16 %v4880
    %v4992 = vunpack.c.l.b16 %v4881
    %v4993 = vunpack.c.h.b16 %v4881
    %v4994 = vunpack.c.l.b16 %v4882
    %v4995 = vunpack.c.h.b16 %v4882
    %v4996 = vunpack.c.l.b16 %v4883
    %v4997 = vunpack.c.h.b16 %v4883
    %v4998 = vunpack.c.l.b16 %v4884
    %v4999 = vunpack.c.h.b16 %v4884
    %v5000 = vunpack.c.l.b16 %v4885
    %v5001 = vunpack.c.h.b16 %v4885
    %v5002 = vunpack.c.l.b16 %v4886
    %v5003 = vunpack.c.h.b16 %v4886
    %v5004 = vunpack.c.l.b16 %v4887
    %v5005 = vunpack.c.h.b16 %v4887
    %v5006 = vunpack.c.l.b16 %v4888
    %v5007 = vunpack.c.h.b16 %v4888
    %v5008 = vpack.c.b16 %v4948, %v4944
    %v5009 = vpack.c.b16 %v4949, %v4945
    %v5010 = vpack.c.b16 %v4950, %v4946
    %v5011 = vpack.c.b16 %v4951, %v4947
    %v5012 = vpack.c.b16 %v4956, %v4952
    %v5013 = vpack.c.b16 %v4957, %v4953
    %v5014 = vpack.c.b16 %v4958, %v4954
    %v5015 = vpack.c.b16 %v4959, %v4955
    %v5016 = vpack.c.b16 %v4964, %v4960
    %v5017 = vpack.c.b16 %v4965, %v4961
    %v5018 = vpack.c.b16 %v4966, %v4962
    %v5019 = vpack.c.b16 %v4967, %v4963
    %v5020 = vpack.c.b16 %v4972, %v4968
    %v5021 = vpack.c.b16 %v4973, %v4969
    %v5022 = vpack.c.b16 %v4974, %v4970
    %v5023 = vpack.c.b16 %v4975, %v4971
    %v5024 = vpack.c.b16 %v4980, %v4976
    %v5025 = vpack.c.b16 %v4981, %v4977
    %v5026 = vpack.c.b16 %v4982, %v4978
    %v5027 = vpack.c.b16 %v4983, %v4979
    %v5028 = vpack.c.b16 %v4988, %v4984
    %v5029 = vpack.c.b16 %v4989, %v4985
    %v5030 = vpack.c.b16 %v4990, %v4986
    %v5031 = vpack.c.b16 %v4991, %v4987
    %v5032 = vpack.c.b16 %v4996, %v4992
    %v5033 = vpack.c.b16 %v4997, %v4993
    %v5034 = vpack.c.b16 %v4998, %v4994
    %v5035 = vpack.c.b16 %v4999, %v4995
    %v5036 = vpack.c.b16 %v5004, %v5000
    %v5037 = vpack.c.b16 %v5005, %v5001
    %v5038 = vpack.c.b16 %v5006, %v5002
    %v5039 = vpack.c.b16 %v5007, %v5003
    %5072 = vmatprep.subr.bf16.mxu0 %v5037
    %5073 = vmatpush1.bf16.msra.mxu0 %v5036
    %5074 = vmatprep.subr.bf16.mxu0 %v5033
    %5075 = vmatpush1.bf16.msra.mxu0 %v5032
    %5076 = vmatprep.subr.bf16.mxu0 %v5029
    %5077 = vmatpush1.bf16.msra.mxu0 %v5028
    %5078 = vmatprep.subr.bf16.mxu0 %v5025
    %5079 = vmatpush1.bf16.msra.mxu0 %v5024
    %5080 = vmatprep.subr.bf16.mxu0 %v5021
    %5081 = vmatpush1.bf16.msra.mxu0 %v5020
    %5082 = vmatprep.subr.bf16.mxu0 %v5017
    %5083 = vmatpush1.bf16.msra.mxu0 %v5016
    %5084 = vmatprep.subr.bf16.mxu0 %v5013
    %5085 = vmatpush1.bf16.msra.mxu0 %v5012
    %5086 = vmatprep.subr.bf16.mxu0 %v5009
    %5087 = vmatpush1.bf16.msra.mxu0 %v5008
    %5088 = vmatprep.subr.bf16.mxu0 0
    %5089 = vmatpush2.bf16.msra.mxu0 0
    %5090 = vmatprep.subr.bf16.mxu0 0
    %5091 = vmatpush2.bf16.msra.mxu0 0
    %5092 = vmatprep.subr.bf16.mxu0 0
    %5093 = vmatpush2.bf16.msra.mxu0 0
    %5094 = vmatprep.subr.bf16.mxu0 0
    %5095 = vmatpush2.bf16.msra.mxu0 0
    %5096 = vmatprep.subr.bf16.mxu0 0
    %5097 = vmatpush2.bf16.msra.mxu0 0
    %5098 = vmatprep.subr.bf16.mxu0 0
    %5099 = vmatpush2.bf16.msra.mxu0 0
    %5100 = vmatprep.subr.bf16.mxu0 0
    %5101 = vmatpush2.bf16.msra.mxu0 0
    %5102 = vmatprep.subr.bf16.mxu0 0
    %5103 = vmatpush2.bf16.msra.mxu0 0
    %5104 = vmatprep.mubr.bf16.mxu0 0
    %5105 = vmatmul.mubr.bf16.gmra.mxu0 %v4855
    %v5106 = vpop.f32.mrf.mxu0
    %v5107 = vadd.f32 %v4895, %v5106
    %v5108 = vpop.f32.mrf.mxu0
    %v5109 = vadd.f32 %v4899, %v5108
    %v5110 = vpop.f32.mrf.mxu0
    %v5111 = vpop.f32.mrf.mxu0
    %5112 = vdwg.mxu0
    %5113 = vmatprep.subr.bf16.mxu0 %v5039
    %5114 = vmatpush1.bf16.msra.mxu0 %v5038
    %5115 = vmatprep.subr.bf16.mxu0 %v5035
    %5116 = vmatpush1.bf16.msra.mxu0 %v5034
    %5117 = vmatprep.subr.bf16.mxu0 %v5031
    %5118 = vmatpush1.bf16.msra.mxu0 %v5030
    %5119 = vmatprep.subr.bf16.mxu0 %v5027
    %5120 = vmatpush1.bf16.msra.mxu0 %v5026
    %5121 = vmatprep.subr.bf16.mxu0 %v5023
    %5122 = vmatpush1.bf16.msra.mxu0 %v5022
    %5123 = vmatprep.subr.bf16.mxu0 %v5019
    %5124 = vmatpush1.bf16.msra.mxu0 %v5018
    %5125 = vmatprep.subr.bf16.mxu0 %v5015
    %5126 = vmatpush1.bf16.msra.mxu0 %v5014
    %5127 = vmatprep.subr.bf16.mxu0 %v5011
    %5128 = vmatpush1.bf16.msra.mxu0 %v5010
    %5129 = vmatprep.subr.bf16.mxu0 0
    %5130 = vmatpush2.bf16.msra.mxu0 0
    %5131 = vmatprep.subr.bf16.mxu0 0
    %5132 = vmatpush2.bf16.msra.mxu0 0
    %5133 = vmatprep.subr.bf16.mxu0 0
    %5134 = vmatpush2.bf16.msra.mxu0 0
    %5135 = vmatprep.subr.bf16.mxu0 0
    %5136 = vmatpush2.bf16.msra.mxu0 0
    %5137 = vmatprep.subr.bf16.mxu0 0
    %5138 = vmatpush2.bf16.msra.mxu0 0
    %5139 = vmatprep.subr.bf16.mxu0 0
    %5140 = vmatpush2.bf16.msra.mxu0 0
    %5141 = vmatprep.subr.bf16.mxu0 0
    %5142 = vmatpush2.bf16.msra.mxu0 0
    %5143 = vmatprep.subr.bf16.mxu0 0
    %5144 = vmatpush2.bf16.msra.mxu0 0
    %5145 = vmatprep.mubr.bf16.mxu0 0
    %5146 = vmatmul.mubr.bf16.gmra.mxu0 %v4855
    %v5147 = vpop.f32.mrf.mxu0
    %v5148 = vadd.f32 %v4903, %v5147
    %v5149 = vpop.f32.mrf.mxu0
    %v5150 = vadd.f32 %v4907, %v5149
    %v5151 = vpop.f32.mrf.mxu0
    %v5152 = vpop.f32.mrf.mxu0
    %5153 = vdwg.mxu0
    %v5154 = vpack.c.bf16 %v5107, %v5107
    %v5155 = vpack.c.bf16 %v5109, %v5109
    %v5156 = vpack.c.bf16 %v5148, %v5148
    %5157 = vmatprep.subr.bf16.mxu0 0
    %5158 = vmatpush1.bf16.xpose.msra.mxu0 0
    %5159 = vmatprep.subr.bf16.mxu0 0
    %5160 = vmatpush1.bf16.xpose.msra.mxu0 0
    %5161 = vmatprep.subr.bf16.mxu0 0
    %5162 = vmatpush1.bf16.xpose.msra.mxu0 0
    %5163 = vmatprep.subr.bf16.mxu0 0
    %5164 = vmatpush1.bf16.xpose.msra.mxu0 0
    %5165 = vmatprep.subr.bf16.mxu0 0
    %5166 = vmatpush1.bf16.xpose.msra.mxu0 0
    %5167 = vmatprep.subr.bf16.mxu0 0
    %5168 = vmatpush1.bf16.xpose.msra.mxu0 0
    %5169 = vmatprep.subr.bf16.mxu0 0
    %5170 = vmatpush1.bf16.xpose.msra.mxu0 0
    %5171 = vmatprep.subr.bf16.mxu0 0
    %5172 = vmatpush1.bf16.xpose.msra.mxu0 %v5155
    %5173 = vmatprep.subr.bf16.mxu0 0
    %5174 = vmatpush2.bf16.xpose.msra.mxu0 0
    %5175 = vmatprep.subr.bf16.mxu0 0
    %5176 = vmatpush2.bf16.xpose.msra.mxu0 0
    %5177 = vmatprep.subr.bf16.mxu0 0
    %5178 = vmatpush2.bf16.xpose.msra.mxu0 0
    %5179 = vmatprep.subr.bf16.mxu0 0
    %5180 = vmatpush2.bf16.xpose.msra.mxu0 0
    %5181 = vmatprep.subr.bf16.mxu0 0
    %5182 = vmatpush2.bf16.xpose.msra.mxu0 0
    %5183 = vmatprep.subr.bf16.mxu0 0
    %5184 = vmatpush2.bf16.xpose.msra.mxu0 0
    %5185 = vmatprep.subr.bf16.mxu0 0
    %5186 = vmatpush2.bf16.xpose.msra.mxu0 0
    %5187 = vmatprep.subr.bf16.mxu0 0
    %5188 = vmatpush2.bf16.xpose.msra.mxu0 0
    %5189 = vmatprep.mubr.bf16.mxu0 0
    %5190 = vmatmul.mubr.bf16.gmra.mxu0 %v5154
    %v5191 = vpop.f32.mrf.mxu0
    %v5192 = vadd.f32 %v380, %v5191
    %v5193 = vpop.f32.mrf.mxu0
    %v5194 = vpop.f32.mrf.mxu0
    %v5195 = vpop.f32.mrf.mxu0
    %5196 = vdwg.mxu0
    %v5197 = vsel %vm421, %v5192, -inf
    %5198 = vmax.xlane.f32.xlu0 %v5197
    %v5199 = vpop.xlane.xlu0 %5198
    %v5200 = vsub.f32 %v5192, %v5199
    %v5201 = vpack.c.bf16 %v5200, %v5200
    %v5203 = vmul.bf16 %v5201, 1069105081
    %v5204 = vpow.bf16.pop %v5203
    %v5205 = vunpack.c.l.bf16 %v5204
    %v5206 = vsel %vm421, %v5205, 0.0
    %5207 = vadd.xlane.f32.xlu0 %v5206
    %v5208 = vpop.xlane.xlu0 %5207
    %v5209 = vrcp.pop %v5208
    %v5210 = vpack.c.bf16 %v5209, %v5209
    %v5211 = vmul.bf16 %v5204, %v5210
    %v5213 = vsel %vm421, %v5211, 0
    %v5216 = vsel %vm440, %v5156, 0
    %5218 = vmatprep.subr.bf16.mxu0 0
    %5219 = vmatpush1.bf16.msra.mxu0 0
    %5220 = vmatprep.subr.bf16.mxu0 0
    %5221 = vmatpush1.bf16.msra.mxu0 0
    %5222 = vmatprep.subr.bf16.mxu0 0
    %5223 = vmatpush1.bf16.msra.mxu0 0
    %5224 = vmatprep.subr.bf16.mxu0 0
    %5225 = vmatpush1.bf16.msra.mxu0 0
    %5226 = vmatprep.subr.bf16.mxu0 0
    %5227 = vmatpush1.bf16.msra.mxu0 0
    %5228 = vmatprep.subr.bf16.mxu0 0
    %5229 = vmatpush1.bf16.msra.mxu0 0
    %5230 = vmatprep.subr.bf16.mxu0 0
    %5231 = vmatpush1.bf16.msra.mxu0 0
    %5232 = vmatprep.subr.bf16.mxu0 0
    %5233 = vmatpush1.bf16.msra.mxu0 %v5216
    %5234 = vmatprep.subr.bf16.mxu0 0
    %5235 = vmatpush2.bf16.msra.mxu0 0
    %5236 = vmatprep.subr.bf16.mxu0 0
    %5237 = vmatpush2.bf16.msra.mxu0 0
    %5238 = vmatprep.subr.bf16.mxu0 0
    %5239 = vmatpush2.bf16.msra.mxu0 0
    %5240 = vmatprep.subr.bf16.mxu0 0
    %5241 = vmatpush2.bf16.msra.mxu0 0
    %5242 = vmatprep.subr.bf16.mxu0 0
    %5243 = vmatpush2.bf16.msra.mxu0 0
    %5244 = vmatprep.subr.bf16.mxu0 0
    %5245 = vmatpush2.bf16.msra.mxu0 0
    %5246 = vmatprep.subr.bf16.mxu0 0
    %5247 = vmatpush2.bf16.msra.mxu0 0
    %5248 = vmatprep.subr.bf16.mxu0 0
    %5249 = vmatpush2.bf16.msra.mxu0 0
    %5250 = vmatprep.mubr.bf16.mxu0 0
    %5251 = vmatmul.mubr.bf16.gmra.mxu0 %v5213
    %v5252 = vpop.f32.mrf.mxu0
    %v5253 = vadd.f32 0.0, %v5252
    %v5254 = vpop.f32.mrf.mxu0
    %v5255 = vpop.f32.mrf.mxu0
    %v5256 = vpop.f32.mrf.mxu0
    %5257 = vdwg.mxu0
    %v5258 = vmul.f32 %v5253, %v487
    %v5259 = vadd.f32 %v5258, %v5150
    %5260 = vst [vmem:[%s5] sm:$0xff] %v901
    %s5261 = scalar_lea.vmem %s5, 8
    %5262 = vst [vmem:[%s5261] sm:$0xff] %v2533
    %s5263 = scalar_lea.vmem %s5, 16
    %5264 = vst [vmem:[%s5263] sm:$0xff] %v4443
    %s5265 = scalar_lea.vmem %s5, 24
    %5266 = vst [vmem:[%s5265] sm:$0xff] %v1717
    %s5267 = scalar_lea.vmem %s5, 32
    %5268 = vst [vmem:[%s5267] sm:$0xff] %v3349
    %s5269 = scalar_lea.vmem %s5, 40
    %5270 = vst [vmem:[%s5269] sm:$0xff] %v5259
    // Predicated region
    $region34: #{trans_img_forward.1} parent=1 // pred_check
      _
    $region35: #{trans_img_forward.1} parent=1 // pred_check_branch
      %5272 = sbr.rel (0) target = $region37
    $region36: #{trans_img_forward.1} parent=1 // pred_region
      _
    $region37: #{trans_img_forward.1} parent=1 // pred_fallthru
      _
    // Predicated region
    $region38: #{trans_img_forward.1} parent=1 // pred_check
      _
    $region39: #{trans_img_forward.1} parent=1 // pred_check_branch
      %5274 = sbr.rel (0) target = $region41
    $region40: #{trans_img_forward.1} parent=1 // pred_region
      _
    $region41: #{trans_img_forward.1} parent=1 // pred_fallthru
      _
    %5275 = vsyncpa [#allocation3], 1
    %5276 = vsyncpa [#allocation5], 1

</llo_original>
